<compile_context>
chip_gen: v6e
topology: v6e:2x2x1
jax: 0.10.0
libtpu: 0.0.40
codegen_flags: <defaults>
</compile_context>

<pallas_src>
import math
import functools

import jax
import jax.numpy as jnp
from jax import lax
from jax.experimental import pallas as pl
from jax.experimental.pallas import tpu as pltpu

_BBOX_XFORM_CLIP = math.log(1000.0 / 16.0)


# ----------------------------- Pallas kernels ------------------------------

def _rpn_head_decode_kernel(x_ref, w1_ref, b1_ref, w2_ref, b2_ref,
                            size_ref, ctr_ref, out_ref, *, wp, num_anchors):
    """Fused 3x3 conv + ReLU + (cls,bbox) 1x1 heads + box decode, one image."""
    R = out_ref.shape[1]          # rows = H * Wp  (includes 2 padded w-columns)
    P = out_ref.shape[2]          # lane-padded output width (>= 5*A)
    A = num_anchors
    x = x_ref[0]                  # (Rin, C) bf16, row-flattened padded NHWC
    C = x.shape[1]

    # 3x3 conv as 9 dot products over contiguous shifted row windows.
    acc = jnp.zeros((R, C), jnp.float32)
    for ky in range(3):
        for kx in range(3):
            s = ky * wp + kx
            patch = x[s:s + R, :]                              # (R, C) bf16
            acc = acc + jnp.dot(patch, w1_ref[ky * 3 + kx],
                                preferred_element_type=jnp.float32)
    hidden = jnp.maximum(acc + b1_ref[...], 0.0).astype(jnp.bfloat16)

    # Fused cls + bbox heads -> one lane-dense (R, P) slab.
    out2 = jnp.dot(hidden, w2_ref[...],
                   preferred_element_type=jnp.float32) + b2_ref[...]

    # Box decode in the packed-lane layout: columns [cls | dx | dy | dw | dh].
    lane = lax.broadcasted_iota(jnp.int32, (1, P), 1)
    pos_half = lane < 3 * A                       # cls/dx/dy lanes
    roll_fwd = pltpu.roll(out2, 2 * A, axis=1)    # lane l <- l - 2A
    roll_bwd = pltpu.roll(out2, P - 2 * A, axis=1)  # lane l <- l + 2A
    delta_pos = jnp.where(pos_half, out2, roll_fwd)    # dx/dy aligned per lane
    delta_size = jnp.where(pos_half, roll_bwd, out2)   # dw/dh aligned per lane

    anc_size = size_ref[...]                      # [0 | aw | ah | aw | ah | 0]
    anc_ctr = ctr_ref[...]                        # [0 | cx | cy | cx | cy | 0]
    pred_ctr = delta_pos * anc_size + anc_ctr
    pred_wh = jnp.exp(jnp.minimum(delta_size, _BBOX_XFORM_CLIP)) * anc_size
    half = jnp.where(pos_half, -0.5, 0.5) * pred_wh
    decoded = pred_ctr + half                     # [_, x1, y1, x2, y2, _]

    out_ref[0] = jnp.where(lane < A, out2,
                           jnp.where(lane < 5 * A, decoded, 0.0))


def _nms_kernel(boxes_ref, valid_ref, keep_ref, *, nms_thresh):
    """Greedy NMS for one image; IoU rows computed on the fly (no K*K in HBM)."""
    b = boxes_ref[0]                              # (4, K) f32
    K = b.shape[1]
    x1 = b[0:1, :]
    y1 = b[1:2, :]
    x2 = b[2:3, :]
    y2 = b[3:4, :]
    area = (x2 - x1) * (y2 - y1)                  # (1, K)
    lane = lax.broadcasted_iota(jnp.int32, (1, K), 1)

    valid = valid_ref[0]                          # (1, K) f32 in {0, 1}
    sup0 = 1.0 - valid                            # invalid boxes start suppressed
    keep0 = jnp.zeros((1, K), jnp.float32)

    def body(i, carry):
        sup, keep = carry
        onehot = lane == i
        x1i = jnp.sum(jnp.where(onehot, x1, 0.0))
        y1i = jnp.sum(jnp.where(onehot, y1, 0.0))
        x2i = jnp.sum(jnp.where(onehot, x2, 0.0))
        y2i = jnp.sum(jnp.where(onehot, y2, 0.0))
        area_i = (x2i - x1i) * (y2i - y1i)
        xx1 = jnp.maximum(x1, x1i)
        yy1 = jnp.maximum(y1, y1i)
        xx2 = jnp.minimum(x2, x2i)
        yy2 = jnp.minimum(y2, y2i)
        inter = jnp.maximum(xx2 - xx1, 0.0) * jnp.maximum(yy2 - yy1, 0.0)
        iou = inter / (area + area_i - inter + 1e-8)       # eps: no NaN on 0-area
        sup_i = jnp.sum(jnp.where(onehot, sup, 0.0)) > 0.5
        keep_i = jnp.logical_not(sup_i)
        keep = jnp.where(jnp.logical_and(onehot, keep_i), 1.0, keep)
        newly = jnp.logical_and(jnp.logical_and(iou > nms_thresh, lane > i),
                                keep_i)
        sup = jnp.where(newly, 1.0, sup)
        return sup, keep

    _, keep = lax.fori_loop(0, K, body, (sup0, keep0))
    keep_ref[0] = keep


# ------------------------------ kernel wrappers -----------------------------

def rpn_head_and_decode(feat_nchw, params, anchors_per_image):
    """RPNHead + concat_box_prediction_layers + BoxCoder.decode (fused)."""
    N, C, H, W = feat_nchw.shape
    A = params['cls_w'].shape[0]
    Hp, Wp = H + 2, W + 2
    R = H * Wp                                    # rows incl. 2 padded w-columns
    HW = H * W
    P = 128 * pl.cdiv(5 * A, 128)                 # lane-dense output width

    # Feature map: NHWC bf16, spatially padded, row-flattened; small tail pad so
    # the last shifted window (offset 2*Wp + 2) stays in bounds.
    x = jnp.transpose(feat_nchw, (0, 2, 3, 1)).astype(jnp.bfloat16)
    xpad = jnp.pad(x, ((0, 0), (1, 1), (1, 1), (0, 0)))
    xflat = xpad.reshape(N, Hp * Wp, C)
    rin = ((Hp * Wp + 2 + 7) // 8) * 8
    xflat = jnp.pad(xflat, ((0, 0), (0, rin - Hp * Wp), (0, 0)))

    # 3x3 conv weights as 9 (Cin, Cout) matrices; fused 1x1 heads as one
    # lane-padded (C, P) matrix: columns [cls | dx | dy | dw | dh | 0].
    w1 = jnp.transpose(params['conv_w'], (2, 3, 1, 0)).reshape(9, C, C)
    w1 = w1.astype(jnp.bfloat16)
    b1 = params['conv_b'].reshape(1, C).astype(jnp.float32)
    wc = params['cls_w'][:, :, 0, 0]                                   # (A, C)
    wb = params['bbox_w'][:, :, 0, 0]                                  # (4A, C)
    wb_cm = wb.reshape(A, 4, C).transpose(1, 0, 2).reshape(4 * A, C)   # coord-major
    w2 = jnp.concatenate([wc, wb_cm], axis=0).T                        # (C, 5A)
    w2 = jnp.pad(w2, ((0, 0), (0, P - 5 * A))).astype(jnp.bfloat16)
    bb_cm = params['bbox_b'].reshape(A, 4).T.reshape(4 * A)
    b2 = jnp.concatenate([params['cls_b'], bb_cm])
    b2 = jnp.pad(b2, (0, P - 5 * A)).reshape(1, P).astype(jnp.float32)

    # Anchor width/height/center planes aligned to the output lane layout.
    anc = anchors_per_image.reshape(H, W, A, 4)
    anc = jnp.pad(anc, ((0, 0), (0, Wp - W), (0, 0), (0, 0))).reshape(R, A, 4)
    ax1, ay1, ax2, ay2 = anc[..., 0], anc[..., 1], anc[..., 2], anc[..., 3]
    aw, ah = ax2 - ax1, ay2 - ay1
    acx, acy = ax1 + 0.5 * aw, ay1 + 0.5 * ah
    z = jnp.zeros((R, A), jnp.float32)
    anc_size = jnp.pad(jnp.concatenate([z, aw, ah, aw, ah], axis=1),
                       ((0, 0), (0, P - 5 * A)))
    anc_ctr = jnp.pad(jnp.concatenate([z, acx, acy, acx, acy], axis=1),
                      ((0, 0), (0, P - 5 * A)))

    kernel = functools.partial(_rpn_head_decode_kernel, wp=Wp, num_anchors=A)
    slab = pl.pallas_call(
        kernel,
        out_shape=jax.ShapeDtypeStruct((N, R, P), jnp.float32),
        grid=(N,),
        in_specs=[
            pl.BlockSpec((1, rin, C), lambda n: (n, 0, 0)),
            pl.BlockSpec((9, C, C), lambda n: (0, 0, 0)),
            pl.BlockSpec((1, C), lambda n: (0, 0)),
            pl.BlockSpec((C, P), lambda n: (0, 0)),
            pl.BlockSpec((1, P), lambda n: (0, 0)),
            pl.BlockSpec((R, P), lambda n: (0, 0)),
            pl.BlockSpec((R, P), lambda n: (0, 0)),
        ],
        out_specs=pl.BlockSpec((1, R, P), lambda n: (n, 0, 0)),
        compiler_params=pltpu.CompilerParams(
            dimension_semantics=("parallel",)),
    )(xflat, w1, b1, w2, b2, anc_size, anc_ctr)

    # Drop the padded w-columns; row order (n, h, w, a) matches torchvision.
    slab = slab.reshape(N, H, Wp, P)[:, :, :W, :].reshape(N, HW, P)
    objectness = slab[:, :, :A].reshape(N, HW * A)
    coords = [slab[:, :, A + k * A:A + (k + 1) * A] for k in range(4)]
    proposals = jnp.stack(coords, axis=-1).reshape(N, HW * A, 4)
    return objectness, proposals


def nms_pallas(boxes, valid, nms_thresh):
    # boxes: (N, K, 4) f32 in descending score order; valid: (N, K) bool
    N, K, _ = boxes.shape
    boxes_t = jnp.transpose(boxes, (0, 2, 1))          # (N, 4, K): K on lanes
    valid_f = valid.astype(jnp.float32)[:, None, :]    # (N, 1, K)
    keep = pl.pallas_call(
        functools.partial(_nms_kernel, nms_thresh=nms_thresh),
        out_shape=jax.ShapeDtypeStruct((N, 1, K), jnp.float32),
        grid=(N,),
        in_specs=[pl.BlockSpec((1, 4, K), lambda n: (n, 0, 0)),
                  pl.BlockSpec((1, 1, K), lambda n: (n, 0, 0))],
        out_specs=pl.BlockSpec((1, 1, K), lambda n: (n, 0, 0)),
        compiler_params=pltpu.CompilerParams(
            dimension_semantics=("parallel",)),
    )(boxes_t, valid_f)
    return keep.reshape(N, K) > 0.5


# ------------------------------ glue (JAX) ---------------------------------

def init_rpn_params(key, in_channels, num_anchors):
    # shapes match torchvision RPNHead.__init__; values synthetic/deterministic
    k1, k2, k3 = jax.random.split(key, 3)
    return dict(
        conv_w=0.01 * jax.random.normal(k1, (in_channels, in_channels, 3, 3), jnp.float32),
        conv_b=jnp.zeros((in_channels,), jnp.float32),
        cls_w=0.01 * jax.random.normal(k2, (num_anchors, in_channels, 1, 1), jnp.float32),
        cls_b=jnp.zeros((num_anchors,), jnp.float32),
        bbox_w=0.01 * jax.random.normal(k3, (4 * num_anchors, in_channels, 1, 1), jnp.float32),
        bbox_b=jnp.zeros((4 * num_anchors,), jnp.float32),
    )


def generate_anchors(image_size, feat_size, sizes, aspect_ratios):
    # torchvision AnchorGenerator (single feature level)
    img_h, img_w = image_size
    H, W = feat_size
    scales = jnp.asarray(sizes, dtype=jnp.float32)
    ar = jnp.asarray(aspect_ratios, dtype=jnp.float32)
    h_ratios = jnp.sqrt(ar)
    w_ratios = 1.0 / h_ratios
    ws = (w_ratios[:, None] * scales[None, :]).reshape(-1)
    hs = (h_ratios[:, None] * scales[None, :]).reshape(-1)
    base = jnp.round(jnp.stack([-ws, -hs, ws, hs], axis=1) / 2.0)      # (A, 4)
    stride_h = img_h // H
    stride_w = img_w // W
    shifts_x = jnp.arange(W, dtype=jnp.float32) * stride_w
    shifts_y = jnp.arange(H, dtype=jnp.float32) * stride_h
    sy, sx = jnp.meshgrid(shifts_y, shifts_x, indexing='ij')
    shifts = jnp.stack([sx.reshape(-1), sy.reshape(-1),
                        sx.reshape(-1), sy.reshape(-1)], axis=1)       # (H*W, 4)
    anchors = (shifts[:, None, :] + base[None, :, :]).reshape(-1, 4)
    return anchors                                                     # (H*W*A, 4)


def filter_proposals(proposals, objectness, image_sizes, num_anchors_per_level,
                     pre_nms_top_n, post_nms_top_n, nms_thresh, min_size):
    objectness = lax.stop_gradient(objectness)

    k = min(pre_nms_top_n, num_anchors_per_level[0])
    top_scores, top_idx = lax.top_k(objectness, k)         # descending score order
    top_boxes = jnp.take_along_axis(proposals, top_idx[..., None], axis=1)

    heights = jnp.asarray([s[0] for s in image_sizes], jnp.float32)[:, None]
    widths = jnp.asarray([s[1] for s in image_sizes], jnp.float32)[:, None]
    x1 = jnp.clip(top_boxes[..., 0], 0.0, widths)
    y1 = jnp.clip(top_boxes[..., 1], 0.0, heights)
    x2 = jnp.clip(top_boxes[..., 2], 0.0, widths)
    y2 = jnp.clip(top_boxes[..., 3], 0.0, heights)
    boxes = jnp.stack([x1, y1, x2, y2], axis=-1)            # (N, k, 4)

    # remove_small_boxes expressed as a validity mask (static shapes)
    valid = ((x2 - x1) >= min_size) & ((y2 - y1) >= min_size)
    scores = jnp.where(valid, top_scores, -jnp.inf)

    # greedy NMS in score order, fully on-chip
    keep = nms_pallas(boxes, valid, nms_thresh)             # (N, k) bool
    kept_scores = jnp.where(keep, scores, -jnp.inf)
    final_scores, final_idx = lax.top_k(kept_scores, post_nms_top_n)
    final_boxes = jnp.take_along_axis(boxes, final_idx[..., None], axis=1)
    # padded slots (score == -inf) zeroed; PyTorch returns a variable-length list
    final_boxes = jnp.where(jnp.isfinite(final_scores)[..., None], final_boxes, 0.0)
    return final_boxes, final_scores


def rpn_forward(images, image_sizes, features, params, anchor_sizes,
                aspect_ratios, pre_nms_top_n, post_nms_top_n, nms_thresh,
                min_size=1e-3):
    feats = list(features.values())
    assert len(feats) == 1, "synthetic setup uses a single feature level"
    feat = feats[0]
    N, C, H, W = feat.shape
    A = len(anchor_sizes) * len(aspect_ratios)

    img_h, img_w = images.shape[-2], images.shape[-1]
    anchors_per_image = generate_anchors((img_h, img_w), (H, W),
                                         anchor_sizes, aspect_ratios)
    num_anchors_per_level = [H * W * A]

    objectness, proposals = rpn_head_and_decode(feat, params, anchors_per_image)

    boxes, _scores = filter_proposals(proposals, objectness, image_sizes,
                                      num_anchors_per_level, pre_nms_top_n,
                                      post_nms_top_n, nms_thresh, min_size)
    losses = {}
    # TODO(synk): training branch (anchor matching, balanced pos/neg sampling,
    # BCE + smooth-L1 losses) not implemented; eval-mode forward only.
    boxes_list = [boxes[i] for i in range(N)]
    return boxes_list, losses


# --------------------------------- main -------------------------------------

if __name__ == "__main__":
    key = jax.random.PRNGKey(0)
    k_feat, k_img, k_par = jax.random.split(key, 3)

    N, C, H, W = 2, 16, 16, 16
    img_h, img_w = 64, 64
    anchor_sizes = (32.0,)
    aspect_ratios = (0.5, 1.0, 2.0)
    A = len(anchor_sizes) * len(aspect_ratios)

    features = {"0": jax.random.normal(k_feat, (N, C, H, W), jnp.float32)}
    images = jax.random.normal(k_img, (N, 3, img_h, img_w), jnp.float32)
    image_sizes = [(img_h, img_w)] * N
    params = init_rpn_params(k_par, C, A)

    boxes, losses = rpn_forward(images, image_sizes, features, params,
                                anchor_sizes, aspect_ratios,
                                pre_nms_top_n=128, post_nms_top_n=32,
                                nms_thresh=0.7)
    jax.block_until_ready(boxes)
    assert len(boxes) == N and boxes[0].shape == (32, 4) and losses == {}
    print("KERNEL_OK")
</pallas_src>

<mosaic_0001>
module attributes {stable_mosaic.version = 11 : i64} {
  func.func @_rpn_head_decode_kernel(%arg0: i32, %arg1: memref<1x328x16xbf16, #tpu.memory_space<vmem>>, %arg2: memref<9x16x16xbf16, #tpu.memory_space<vmem>>, %arg3: memref<1x16xf32, #tpu.memory_space<vmem>>, %arg4: memref<16x128xbf16, #tpu.memory_space<vmem>>, %arg5: memref<1x128xf32, #tpu.memory_space<vmem>>, %arg6: memref<288x128xf32, #tpu.memory_space<vmem>>, %arg7: memref<288x128xf32, #tpu.memory_space<vmem>>, %arg8: memref<1x288x128xf32, #tpu.memory_space<vmem>>) attributes {dimension_semantics = [#tpu.dimension_semantics<parallel>], iteration_bounds = array<i64: 2>, scalar_prefetch = 0 : i64, scratch_operands = 0 : i64, tpu.core_type = #tpu.core_type<tc>, window_params = [{transform_indices = @transform_0, window_bounds = array<i64: 1, 328, 16>}, {pipeline_mode = #tpu.pipeline_mode<synchronous>, transform_indices = @transform_1, window_bounds = array<i64: 9, 16, 16>}, {pipeline_mode = #tpu.pipeline_mode<synchronous>, transform_indices = @transform_2, window_bounds = array<i64: 1, 16>}, {pipeline_mode = #tpu.pipeline_mode<synchronous>, transform_indices = @transform_3, window_bounds = array<i64: 16, 128>}, {pipeline_mode = #tpu.pipeline_mode<synchronous>, transform_indices = @transform_4, window_bounds = array<i64: 1, 128>}, {pipeline_mode = #tpu.pipeline_mode<synchronous>, transform_indices = @transform_5, window_bounds = array<i64: 288, 128>}, {pipeline_mode = #tpu.pipeline_mode<synchronous>, transform_indices = @transform_6, window_bounds = array<i64: 288, 128>}, {transform_indices = @transform_7, window_bounds = array<i64: 1, 288, 128>}]} {
    %c0 = arith.constant 0 : index
    %c0_0 = arith.constant 0 : index
    %c0_1 = arith.constant 0 : index
    %0 = vector.load %arg1[%c0, %c0_0, %c0_1] : memref<1x328x16xbf16, #tpu.memory_space<vmem>>, vector<1x328x16xbf16>
    %1 = vector.shape_cast %0 : vector<1x328x16xbf16> to vector<328x16xbf16>
    %cst = arith.constant 0.000000e+00 : f32
    %2 = vector.broadcast %cst : f32 to vector<288x16xf32>
    %3 = vector.extract_strided_slice %1 {offsets = [0, 0], sizes = [288, 16], strides = [1, 1]} : vector<328x16xbf16> to vector<288x16xbf16>
    %c0_2 = arith.constant 0 : index
    %c0_3 = arith.constant 0 : index
    %c0_4 = arith.constant 0 : index
    %4 = vector.load %arg2[%c0_2, %c0_3, %c0_4] : memref<9x16x16xbf16, #tpu.memory_space<vmem>>, vector<1x16x16xbf16>
    %5 = vector.shape_cast %4 : vector<1x16x16xbf16> to vector<16x16xbf16>
    %cst_5 = arith.constant dense<0.000000e+00> : vector<288x16xf32>
    %6 = tpu.matmul %3, %5, %cst_5 {dimension_numbers = #tpu.dot_dimension_numbers<[1], [0], [0], [1], [0, 0, 1, 1], [], []>} : vector<288x16xbf16>, vector<16x16xbf16>, vector<288x16xf32> -> vector<288x16xf32>
    %7 = arith.addf %2, %6 : vector<288x16xf32>
    %8 = vector.extract_strided_slice %1 {offsets = [1, 0], sizes = [288, 16], strides = [1, 1]} : vector<328x16xbf16> to vector<288x16xbf16>
    %c1 = arith.constant 1 : index
    %c0_6 = arith.constant 0 : index
    %c0_7 = arith.constant 0 : index
    %9 = vector.load %arg2[%c1, %c0_6, %c0_7] : memref<9x16x16xbf16, #tpu.memory_space<vmem>>, vector<1x16x16xbf16>
    %10 = vector.shape_cast %9 : vector<1x16x16xbf16> to vector<16x16xbf16>
    %cst_8 = arith.constant dense<0.000000e+00> : vector<288x16xf32>
    %11 = tpu.matmul %8, %10, %cst_8 {dimension_numbers = #tpu.dot_dimension_numbers<[1], [0], [0], [1], [0, 0, 1, 1], [], []>} : vector<288x16xbf16>, vector<16x16xbf16>, vector<288x16xf32> -> vector<288x16xf32>
    %12 = arith.addf %7, %11 : vector<288x16xf32>
    %13 = vector.extract_strided_slice %1 {offsets = [2, 0], sizes = [288, 16], strides = [1, 1]} : vector<328x16xbf16> to vector<288x16xbf16>
    %c2 = arith.constant 2 : index
    %c0_9 = arith.constant 0 : index
    %c0_10 = arith.constant 0 : index
    %14 = vector.load %arg2[%c2, %c0_9, %c0_10] : memref<9x16x16xbf16, #tpu.memory_space<vmem>>, vector<1x16x16xbf16>
    %15 = vector.shape_cast %14 : vector<1x16x16xbf16> to vector<16x16xbf16>
    %cst_11 = arith.constant dense<0.000000e+00> : vector<288x16xf32>
    %16 = tpu.matmul %13, %15, %cst_11 {dimension_numbers = #tpu.dot_dimension_numbers<[1], [0], [0], [1], [0, 0, 1, 1], [], []>} : vector<288x16xbf16>, vector<16x16xbf16>, vector<288x16xf32> -> vector<288x16xf32>
    %17 = arith.addf %12, %16 : vector<288x16xf32>
    %18 = vector.extract_strided_slice %1 {offsets = [18, 0], sizes = [288, 16], strides = [1, 1]} : vector<328x16xbf16> to vector<288x16xbf16>
    %c3 = arith.constant 3 : index
    %c0_12 = arith.constant 0 : index
    %c0_13 = arith.constant 0 : index
    %19 = vector.load %arg2[%c3, %c0_12, %c0_13] : memref<9x16x16xbf16, #tpu.memory_space<vmem>>, vector<1x16x16xbf16>
    %20 = vector.shape_cast %19 : vector<1x16x16xbf16> to vector<16x16xbf16>
    %cst_14 = arith.constant dense<0.000000e+00> : vector<288x16xf32>
    %21 = tpu.matmul %18, %20, %cst_14 {dimension_numbers = #tpu.dot_dimension_numbers<[1], [0], [0], [1], [0, 0, 1, 1], [], []>} : vector<288x16xbf16>, vector<16x16xbf16>, vector<288x16xf32> -> vector<288x16xf32>
    %22 = arith.addf %17, %21 : vector<288x16xf32>
    %23 = vector.extract_strided_slice %1 {offsets = [19, 0], sizes = [288, 16], strides = [1, 1]} : vector<328x16xbf16> to vector<288x16xbf16>
    %c4 = arith.constant 4 : index
    %c0_15 = arith.constant 0 : index
    %c0_16 = arith.constant 0 : index
    %24 = vector.load %arg2[%c4, %c0_15, %c0_16] : memref<9x16x16xbf16, #tpu.memory_space<vmem>>, vector<1x16x16xbf16>
    %25 = vector.shape_cast %24 : vector<1x16x16xbf16> to vector<16x16xbf16>
    %cst_17 = arith.constant dense<0.000000e+00> : vector<288x16xf32>
    %26 = tpu.matmul %23, %25, %cst_17 {dimension_numbers = #tpu.dot_dimension_numbers<[1], [0], [0], [1], [0, 0, 1, 1], [], []>} : vector<288x16xbf16>, vector<16x16xbf16>, vector<288x16xf32> -> vector<288x16xf32>
    %27 = arith.addf %22, %26 : vector<288x16xf32>
    %28 = vector.extract_strided_slice %1 {offsets = [20, 0], sizes = [288, 16], strides = [1, 1]} : vector<328x16xbf16> to vector<288x16xbf16>
    %c5 = arith.constant 5 : index
    %c0_18 = arith.constant 0 : index
    %c0_19 = arith.constant 0 : index
    %29 = vector.load %arg2[%c5, %c0_18, %c0_19] : memref<9x16x16xbf16, #tpu.memory_space<vmem>>, vector<1x16x16xbf16>
    %30 = vector.shape_cast %29 : vector<1x16x16xbf16> to vector<16x16xbf16>
    %cst_20 = arith.constant dense<0.000000e+00> : vector<288x16xf32>
    %31 = tpu.matmul %28, %30, %cst_20 {dimension_numbers = #tpu.dot_dimension_numbers<[1], [0], [0], [1], [0, 0, 1, 1], [], []>} : vector<288x16xbf16>, vector<16x16xbf16>, vector<288x16xf32> -> vector<288x16xf32>
    %32 = arith.addf %27, %31 : vector<288x16xf32>
    %33 = vector.extract_strided_slice %1 {offsets = [36, 0], sizes = [288, 16], strides = [1, 1]} : vector<328x16xbf16> to vector<288x16xbf16>
    %c6 = arith.constant 6 : index
    %c0_21 = arith.constant 0 : index
    %c0_22 = arith.constant 0 : index
    %34 = vector.load %arg2[%c6, %c0_21, %c0_22] : memref<9x16x16xbf16, #tpu.memory_space<vmem>>, vector<1x16x16xbf16>
    %35 = vector.shape_cast %34 : vector<1x16x16xbf16> to vector<16x16xbf16>
    %cst_23 = arith.constant dense<0.000000e+00> : vector<288x16xf32>
    %36 = tpu.matmul %33, %35, %cst_23 {dimension_numbers = #tpu.dot_dimension_numbers<[1], [0], [0], [1], [0, 0, 1, 1], [], []>} : vector<288x16xbf16>, vector<16x16xbf16>, vector<288x16xf32> -> vector<288x16xf32>
    %37 = arith.addf %32, %36 : vector<288x16xf32>
    %38 = vector.extract_strided_slice %1 {offsets = [37, 0], sizes = [288, 16], strides = [1, 1]} : vector<328x16xbf16> to vector<288x16xbf16>
    %c7 = arith.constant 7 : index
    %c0_24 = arith.constant 0 : index
    %c0_25 = arith.constant 0 : index
    %39 = vector.load %arg2[%c7, %c0_24, %c0_25] : memref<9x16x16xbf16, #tpu.memory_space<vmem>>, vector<1x16x16xbf16>
    %40 = vector.shape_cast %39 : vector<1x16x16xbf16> to vector<16x16xbf16>
    %cst_26 = arith.constant dense<0.000000e+00> : vector<288x16xf32>
    %41 = tpu.matmul %38, %40, %cst_26 {dimension_numbers = #tpu.dot_dimension_numbers<[1], [0], [0], [1], [0, 0, 1, 1], [], []>} : vector<288x16xbf16>, vector<16x16xbf16>, vector<288x16xf32> -> vector<288x16xf32>
    %42 = arith.addf %37, %41 : vector<288x16xf32>
    %43 = vector.extract_strided_slice %1 {offsets = [38, 0], sizes = [288, 16], strides = [1, 1]} : vector<328x16xbf16> to vector<288x16xbf16>
    %c8 = arith.constant 8 : index
    %c0_27 = arith.constant 0 : index
    %c0_28 = arith.constant 0 : index
    %44 = vector.load %arg2[%c8, %c0_27, %c0_28] : memref<9x16x16xbf16, #tpu.memory_space<vmem>>, vector<1x16x16xbf16>
    %45 = vector.shape_cast %44 : vector<1x16x16xbf16> to vector<16x16xbf16>
    %cst_29 = arith.constant dense<0.000000e+00> : vector<288x16xf32>
    %46 = tpu.matmul %43, %45, %cst_29 {dimension_numbers = #tpu.dot_dimension_numbers<[1], [0], [0], [1], [0, 0, 1, 1], [], []>} : vector<288x16xbf16>, vector<16x16xbf16>, vector<288x16xf32> -> vector<288x16xf32>
    %47 = arith.addf %42, %46 : vector<288x16xf32>
    %c0_30 = arith.constant 0 : index
    %c0_31 = arith.constant 0 : index
    %48 = vector.load %arg3[%c0_30, %c0_31] : memref<1x16xf32, #tpu.memory_space<vmem>>, vector<1x16xf32>
    %49 = vector.broadcast %48 : vector<1x16xf32> to vector<288x16xf32>
    %50 = arith.addf %47, %49 : vector<288x16xf32>
    %cst_32 = arith.constant 0.000000e+00 : f32
    %51 = vector.broadcast %cst_32 : f32 to vector<288x16xf32>
    %52 = arith.maximumf %50, %51 : vector<288x16xf32>
    %53 = arith.truncf %52 : vector<288x16xf32> to vector<288x16xbf16>
    %c0_33 = arith.constant 0 : index
    %c0_34 = arith.constant 0 : index
    %54 = vector.load %arg4[%c0_33, %c0_34] : memref<16x128xbf16, #tpu.memory_space<vmem>>, vector<16x128xbf16>
    %cst_35 = arith.constant dense<0.000000e+00> : vector<288x128xf32>
    %55 = tpu.matmul %53, %54, %cst_35 {dimension_numbers = #tpu.dot_dimension_numbers<[1], [0], [0], [1], [0, 0, 1, 1], [], []>} : vector<288x16xbf16>, vector<16x128xbf16>, vector<288x128xf32> -> vector<288x128xf32>
    %c0_36 = arith.constant 0 : index
    %c0_37 = arith.constant 0 : index
    %56 = vector.load %arg5[%c0_36, %c0_37] : memref<1x128xf32, #tpu.memory_space<vmem>>, vector<1x128xf32>
    %57 = vector.broadcast %56 : vector<1x128xf32> to vector<288x128xf32>
    %58 = arith.addf %55, %57 : vector<288x128xf32>
    %59 = tpu.iota {dimensions = array<i32: 1>} : vector<1x128xi32>
    %c9_i32 = arith.constant 9 : i32
    %60 = vector.broadcast %c9_i32 : i32 to vector<1x128xi32>
    %61 = arith.cmpi slt, %59, %60 : vector<1x128xi32>
    %c6_i32 = arith.constant 6 : i32
    %62 = tpu.dynamic_rotate %58 by %c6_i32 dim 1 : vector<288x128xf32>, i32 -> vector<288x128xf32>
    %c122_i32 = arith.constant 122 : i32
    %63 = tpu.dynamic_rotate %58 by %c122_i32 dim 1 : vector<288x128xf32>, i32 -> vector<288x128xf32>
    %64 = vector.shape_cast %61 : vector<1x128xi1> to vector<1x128xi1>
    %65 = vector.broadcast %64 : vector<1x128xi1> to vector<288x128xi1>
    %66 = arith.select %65, %58, %62 : vector<288x128xi1>, vector<288x128xf32>
    %67 = vector.shape_cast %61 : vector<1x128xi1> to vector<1x128xi1>
    %68 = vector.broadcast %67 : vector<1x128xi1> to vector<288x128xi1>
    %69 = arith.select %68, %63, %58 : vector<288x128xi1>, vector<288x128xf32>
    %c0_38 = arith.constant 0 : index
    %c0_39 = arith.constant 0 : index
    %70 = vector.load %arg6[%c0_38, %c0_39] : memref<288x128xf32, #tpu.memory_space<vmem>>, vector<288x128xf32>
    %c0_40 = arith.constant 0 : index
    %c0_41 = arith.constant 0 : index
    %71 = vector.load %arg7[%c0_40, %c0_41] : memref<288x128xf32, #tpu.memory_space<vmem>>, vector<288x128xf32>
    %72 = arith.mulf %66, %70 : vector<288x128xf32>
    %73 = arith.addf %72, %71 : vector<288x128xf32>
    %cst_42 = arith.constant 4.13516665 : f32
    %74 = vector.broadcast %cst_42 : f32 to vector<288x128xf32>
    %75 = arith.minimumf %69, %74 : vector<288x128xf32>
    %76 = math.exp %75 : vector<288x128xf32>
    %77 = arith.mulf %76, %70 : vector<288x128xf32>
    %cst_43 = arith.constant -5.000000e-01 : f32
    %cst_44 = arith.constant 5.000000e-01 : f32
    %78 = vector.broadcast %cst_43 : f32 to vector<1x128xf32>
    %79 = vector.broadcast %cst_44 : f32 to vector<1x128xf32>
    %80 = arith.select %61, %78, %79 : vector<1x128xi1>, vector<1x128xf32>
    %81 = vector.broadcast %80 : vector<1x128xf32> to vector<288x128xf32>
    %82 = arith.mulf %81, %77 : vector<288x128xf32>
    %83 = arith.addf %73, %82 : vector<288x128xf32>
    %c3_i32 = arith.constant 3 : i32
    %84 = vector.broadcast %c3_i32 : i32 to vector<1x128xi32>
    %85 = arith.cmpi slt, %59, %84 : vector<1x128xi32>
    %c15_i32 = arith.constant 15 : i32
    %86 = vector.broadcast %c15_i32 : i32 to vector<1x128xi32>
    %87 = arith.cmpi slt, %59, %86 : vector<1x128xi32>
    %cst_45 = arith.constant 0.000000e+00 : f32
    %88 = vector.shape_cast %87 : vector<1x128xi1> to vector<1x128xi1>
    %89 = vector.broadcast %88 : vector<1x128xi1> to vector<288x128xi1>
    %90 = vector.broadcast %cst_45 : f32 to vector<288x128xf32>
    %91 = arith.select %89, %83, %90 : vector<288x128xi1>, vector<288x128xf32>
    %92 = vector.shape_cast %85 : vector<1x128xi1> to vector<1x128xi1>
    %93 = vector.broadcast %92 : vector<1x128xi1> to vector<288x128xi1>
    %94 = arith.select %93, %58, %91 : vector<288x128xi1>, vector<288x128xf32>
    %c0_46 = arith.constant 0 : index
    %c0_47 = arith.constant 0 : index
    %c0_48 = arith.constant 0 : index
    %95 = vector.load %arg8[%c0_46, %c0_47, %c0_48] : memref<1x288x128xf32, #tpu.memory_space<vmem>>, vector<1x288x128xf32>
    %96 = vector.shape_cast %95 : vector<1x288x128xf32> to vector<288x128xf32>
    %97 = vector.shape_cast %94 : vector<288x128xf32> to vector<1x288x128xf32>
    tpu.vector_store %arg8[%c0_46, %c0_47, %c0_48], %97 {strides = array<i32>} : memref<1x288x128xf32, #tpu.memory_space<vmem>>, vector<1x288x128xf32>,
    return
  }
  func.func @transform_0(%arg0: i32) -> (i32, i32, i32) {
    %c0_i32 = arith.constant 0 : i32
    %c0_i32_0 = arith.constant 0 : i32
    %c0_i32_1 = arith.constant 0 : i32
    return %arg0, %c0_i32, %c0_i32_0 : i32, i32, i32
  }
  func.func @transform_1(%arg0: i32) -> (i32, i32, i32) {
    %c0_i32 = arith.constant 0 : i32
    %c0_i32_0 = arith.constant 0 : i32
    %c0_i32_1 = arith.constant 0 : i32
    %c0_i32_2 = arith.constant 0 : i32
    return %c0_i32, %c0_i32_0, %c0_i32_1 : i32, i32, i32
  }
  func.func @transform_2(%arg0: i32) -> (i32, i32) {
    %c0_i32 = arith.constant 0 : i32
    %c0_i32_0 = arith.constant 0 : i32
    %c0_i32_1 = arith.constant 0 : i32
    return %c0_i32, %c0_i32_0 : i32, i32
  }
  func.func @transform_3(%arg0: i32) -> (i32, i32) {
    %c0_i32 = arith.constant 0 : i32
    %c0_i32_0 = arith.constant 0 : i32
    %c0_i32_1 = arith.constant 0 : i32
    return %c0_i32, %c0_i32_0 : i32, i32
  }
  func.func @transform_4(%arg0: i32) -> (i32, i32) {
    %c0_i32 = arith.constant 0 : i32
    %c0_i32_0 = arith.constant 0 : i32
    %c0_i32_1 = arith.constant 0 : i32
    return %c0_i32, %c0_i32_0 : i32, i32
  }
  func.func @transform_5(%arg0: i32) -> (i32, i32) {
    %c0_i32 = arith.constant 0 : i32
    %c0_i32_0 = arith.constant 0 : i32
    %c0_i32_1 = arith.constant 0 : i32
    return %c0_i32, %c0_i32_0 : i32, i32
  }
  func.func @transform_6(%arg0: i32) -> (i32, i32) {
    %c0_i32 = arith.constant 0 : i32
    %c0_i32_0 = arith.constant 0 : i32
    %c0_i32_1 = arith.constant 0 : i32
    return %c0_i32, %c0_i32_0 : i32, i32
  }
  func.func @transform_7(%arg0: i32) -> (i32, i32, i32) {
    %c0_i32 = arith.constant 0 : i32
    %c0_i32_0 = arith.constant 0 : i32
    %c0_i32_1 = arith.constant 0 : i32
    return %arg0, %c0_i32, %c0_i32_0 : i32, i32, i32
  }
}

</mosaic_0001>

<llo_original>
// kernel: tpu_custom_call.1
$region0: #{tpu_custom_call.1}
  #allocation0 [shape = 'u32[]', space=smem, size = 0x4, offset = 0x4, fixed_abs, tag = 'smem constant byte address 0x4 - core index']
  #allocation1 [shape = 'u32[144,128]{1,0:T(1,128)}', space=vmem, size = 0x12000, scoped, tag = 'internal scratch']
  %s0 = inlined_call_operand.vmem [shape: bf16[2,328,16], index: 0, kind: input, shape index: {}]
  %s1 = inlined_call_operand.vmem [shape: bf16[9,16,16], index: 1, kind: input, shape index: {}]
  %s2 = inlined_call_operand.vmem [shape: f32[1,16], index: 2, kind: input, shape index: {}]
  %s3 = inlined_call_operand.vmem [shape: bf16[16,128], index: 3, kind: input, shape index: {}]
  %s4 = inlined_call_operand.vmem [shape: f32[1,128], index: 4, kind: input, shape index: {}]
  %s5 = inlined_call_operand.vmem [shape: f32[288,128], index: 5, kind: input, shape index: {}]
  %s6 = inlined_call_operand.hbm [shape: f32[288,128], index: 6, kind: input, shape index: {}]
  %s7 = inlined_call_operand.hbm [shape: f32[2,288,128], index: 7, kind: output, shape index: {}]
  %s8 = sld [smem:[#allocation0]]
  $region65: #{tpu_custom_call.1} parent=0
    _
  %s10 = ssub.s32 1, %s8
  %s11 = scalar_select 0, %s10, %s8
  $region1: #{tpu_custom_call.1} parent=0
    #allocation2 [shape = 'u8[147456]{0}', space=vmem, size = 0x24000, scoped, tag = 'input window, operand 6, single buffered']
    #allocation3 [shape = 's32[2]{0}', space=sflag, size = 0x8, scoped, tag = 'scoped memory for tpu_custom_call.1']
    #allocation4 [shape = 's32[2]{0}', space=sflag, size = 0x8, scoped, tag = 'scoped memory for tpu_custom_call.1']
    #allocation5 [shape = 'u8[294912]{0}', space=vmem, size = 0x48000, scoped, tag = 'output window, operand 0']
    %12 = vsyncpa [#allocation3], 0
    %13 = vsyncpa [#allocation4], 0
    %s14 = scalar_lea.sflag [#allocation4], 1
    %15 = vsyncpa %s14, 0
    loop: start=0, step=1, limit=4
    $region2: #{tpu_custom_call.1} parent=1 // loop_pre_header
      _
    $region3: #{tpu_custom_call.1} parent=1 // loop_header
      %s17 = sphi 0, %s21
      %p18 = scmp.ge.s32.totalorder %s17, 4
      %s27 = sphi 0, %s29
      %s30 = sphi 0, %s27
      %s31 = sphi 0, %s30
      %s47 = sphi 0, %s31
      %s51 = sphi 0, %s51
      %s53 = sphi 0, %s51
      %s54 = sphi 0, %s53
      %s68 = sphi 0, %s54
      %s72 = sphi 0, %s72
      %s74 = sphi 0, %s72
      %s75 = sphi 0, %s74
      %s89 = sphi 0, %s75
      %s93 = sphi 0, %s93
      %s95 = sphi 0, %s93
      %s96 = sphi 0, %s95
      %s110 = sphi 0, %s96
      %s114 = sphi 0, %s114
      %s116 = sphi 0, %s114
      %s117 = sphi 0, %s116
      %s131 = sphi 0, %s117
      %s135 = sphi 0, %s135
      %s137 = sphi 0, %s135
      %s138 = sphi 0, %s137
      %s152 = sphi 0, %s138
      %s156 = sphi 0, %s156
      %s158 = sphi 0, %s156
      %s159 = sphi 0, %s158
      %s173 = sphi 0, %s159
      %s179 = sphi 0, %s181
      %s182 = sphi 0, %s179
      %s183 = sphi 0, %s182
      %s199 = sphi 0, %s183
    $region4: #{tpu_custom_call.1} parent=1 // loop_header_branch
      %20 = sbr.rel (%p18) target = $region8
    $region5: #{tpu_custom_call.1} parent=1 // loop_body
      %s22 = ssub.s32 %s17, 1
      %s23 = ssub.s32 %s17, 2
      %s24 = sadd.s32 %s17, 1
      %s25 = ssub.s32 %s17, %s24
      %p26 = scmp.eq.s32.totalorder %s25, 0
      %s28 = sadd.s32 %s27, 1
      %s29 = scalar_select %p26, %s27, %s28
      %p32 = pneg %p26
      %p33 = scmp.eq.s32.totalorder %s17, 1
      %p34 = por %p32, %p33
      %p35 = scmp.ne.s32.totalorder %s27, %s30
      %p36 = scmp.eq.s32.totalorder %s17, 0
      %p37 = por %p35, %p36
      %p38 = scmp.ne.s32.totalorder %s27, %s30
      %p39 = scmp.eq.s32.totalorder %s22, 1
      %p40 = por %p38, %p39
      %p41 = scmp.ne.s32.totalorder %s30, %s31
      %p42 = scmp.eq.s32.totalorder %s22, 0
      %p43 = por %p41, %p42
      %p44 = scmp.ne.s32.totalorder %s30, %s31
      %p45 = scmp.eq.s32.totalorder %s23, 1
      %p46 = por %p44, %p45
      %p48 = scmp.ne.s32.totalorder %s31, %s47
      %p49 = scmp.eq.s32.totalorder %s23, 0
      %p50 = por %p48, %p49
      %s52 = sadd.s32 %s51, 1
      %p55 = scmp.eq.s32.totalorder %s17, 1
      %p56 = scmp.ne.s32.totalorder %s51, %s53
      %p57 = scmp.eq.s32.totalorder %s17, 0
      %p58 = por %p56, %p57
      %p59 = scmp.ne.s32.totalorder %s51, %s53
      %p60 = scmp.eq.s32.totalorder %s22, 1
      %p61 = por %p59, %p60
      %p62 = scmp.ne.s32.totalorder %s53, %s54
      %p63 = scmp.eq.s32.totalorder %s22, 0
      %p64 = por %p62, %p63
      %p65 = scmp.ne.s32.totalorder %s53, %s54
      %p66 = scmp.eq.s32.totalorder %s23, 1
      %p67 = por %p65, %p66
      %p69 = scmp.ne.s32.totalorder %s54, %s68
      %p70 = scmp.eq.s32.totalorder %s23, 0
      %p71 = por %p69, %p70
      %s73 = sadd.s32 %s72, 1
      %p76 = scmp.eq.s32.totalorder %s17, 1
      %p77 = scmp.ne.s32.totalorder %s72, %s74
      %p78 = scmp.eq.s32.totalorder %s17, 0
      %p79 = por %p77, %p78
      %p80 = scmp.ne.s32.totalorder %s72, %s74
      %p81 = scmp.eq.s32.totalorder %s22, 1
      %p82 = por %p80, %p81
      %p83 = scmp.ne.s32.totalorder %s74, %s75
      %p84 = scmp.eq.s32.totalorder %s22, 0
      %p85 = por %p83, %p84
      %p86 = scmp.ne.s32.totalorder %s74, %s75
      %p87 = scmp.eq.s32.totalorder %s23, 1
      %p88 = por %p86, %p87
      %p90 = scmp.ne.s32.totalorder %s75, %s89
      %p91 = scmp.eq.s32.totalorder %s23, 0
      %p92 = por %p90, %p91
      %s94 = sadd.s32 %s93, 1
      %p97 = scmp.eq.s32.totalorder %s17, 1
      %p98 = scmp.ne.s32.totalorder %s93, %s95
      %p99 = scmp.eq.s32.totalorder %s17, 0
      %p100 = por %p98, %p99
      %p101 = scmp.ne.s32.totalorder %s93, %s95
      %p102 = scmp.eq.s32.totalorder %s22, 1
      %p103 = por %p101, %p102
      %p104 = scmp.ne.s32.totalorder %s95, %s96
      %p105 = scmp.eq.s32.totalorder %s22, 0
      %p106 = por %p104, %p105
      %p107 = scmp.ne.s32.totalorder %s95, %s96
      %p108 = scmp.eq.s32.totalorder %s23, 1
      %p109 = por %p107, %p108
      %p111 = scmp.ne.s32.totalorder %s96, %s110
      %p112 = scmp.eq.s32.totalorder %s23, 0
      %p113 = por %p111, %p112
      %s115 = sadd.s32 %s114, 1
      %p118 = scmp.eq.s32.totalorder %s17, 1
      %p119 = scmp.ne.s32.totalorder %s114, %s116
      %p120 = scmp.eq.s32.totalorder %s17, 0
      %p121 = por %p119, %p120
      %p122 = scmp.ne.s32.totalorder %s114, %s116
      %p123 = scmp.eq.s32.totalorder %s22, 1
      %p124 = por %p122, %p123
      %p125 = scmp.ne.s32.totalorder %s116, %s117
      %p126 = scmp.eq.s32.totalorder %s22, 0
      %p127 = por %p125, %p126
      %p128 = scmp.ne.s32.totalorder %s116, %s117
      %p129 = scmp.eq.s32.totalorder %s23, 1
      %p130 = por %p128, %p129
      %p132 = scmp.ne.s32.totalorder %s117, %s131
      %p133 = scmp.eq.s32.totalorder %s23, 0
      %p134 = por %p132, %p133
      %s136 = sadd.s32 %s135, 1
      %p139 = scmp.eq.s32.totalorder %s17, 1
      %p140 = scmp.ne.s32.totalorder %s135, %s137
      %p141 = scmp.eq.s32.totalorder %s17, 0
      %p142 = por %p140, %p141
      %p143 = scmp.ne.s32.totalorder %s135, %s137
      %p144 = scmp.eq.s32.totalorder %s22, 1
      %p145 = por %p143, %p144
      %p146 = scmp.ne.s32.totalorder %s137, %s138
      %p147 = scmp.eq.s32.totalorder %s22, 0
      %p148 = por %p146, %p147
      %p149 = scmp.ne.s32.totalorder %s137, %s138
      %p150 = scmp.eq.s32.totalorder %s23, 1
      %p151 = por %p149, %p150
      %p153 = scmp.ne.s32.totalorder %s138, %s152
      %p154 = scmp.eq.s32.totalorder %s23, 0
      %p155 = por %p153, %p154
      %s157 = sadd.s32 %s156, 1
      %p160 = scmp.eq.s32.totalorder %s17, 1
      %p161 = scmp.ne.s32.totalorder %s156, %s158
      %p162 = scmp.eq.s32.totalorder %s17, 0
      %p163 = por %p161, %p162
      %p164 = scmp.ne.s32.totalorder %s156, %s158
      %p165 = scmp.eq.s32.totalorder %s22, 1
      %p166 = por %p164, %p165
      %p167 = scmp.ne.s32.totalorder %s158, %s159
      %p168 = scmp.eq.s32.totalorder %s22, 0
      %p169 = por %p167, %p168
      %p170 = scmp.ne.s32.totalorder %s158, %s159
      %p171 = scmp.eq.s32.totalorder %s23, 1
      %p172 = por %p170, %p171
      %p174 = scmp.ne.s32.totalorder %s159, %s173
      %p175 = scmp.eq.s32.totalorder %s23, 0
      %p176 = por %p174, %p175
      %s177 = ssub.s32 %s17, %s24
      %p178 = scmp.eq.s32.totalorder %s177, 0
      %s180 = sadd.s32 %s179, 1
      %s181 = scalar_select %p178, %s179, %s180
      %p184 = pneg %p178
      %p185 = scmp.eq.s32.totalorder %s17, 1
      %p186 = por %p184, %p185
      %p187 = scmp.ne.s32.totalorder %s179, %s182
      %p188 = scmp.eq.s32.totalorder %s17, 0
      %p189 = por %p187, %p188
      %p190 = scmp.ne.s32.totalorder %s179, %s182
      %p191 = scmp.eq.s32.totalorder %s22, 1
      %p192 = por %p190, %p191
      %p193 = scmp.ne.s32.totalorder %s182, %s183
      %p194 = scmp.eq.s32.totalorder %s22, 0
      %p195 = por %p193, %p194
      %p196 = scmp.ne.s32.totalorder %s182, %s183
      %p197 = scmp.eq.s32.totalorder %s23, 1
      %p198 = por %p196, %p197
      %p200 = scmp.ne.s32.totalorder %s183, %s199
      %p201 = scmp.eq.s32.totalorder %s23, 0
      %p202 = por %p200, %p201
      %p203 = scmp.le.s32.totalorder 1, %s17
      %p204 = scmp.lt.s32.totalorder %s17, 3
      %p205 = pnand %p203, %p204
      %p206 = pneg %p205
      // Predicated region
      $region9: #{tpu_custom_call.1} parent=5 // pred_check
        _
      $region10: #{tpu_custom_call.1} parent=5 // pred_check_branch
        %208 = sbr.rel (%p205) target = $region12
      $region11: #{tpu_custom_call.1} parent=5 // pred_region
        %s209 = ssub.s32 %s17, 1
        // Predicated region
        $region13: #{tpu_custom_call.1} parent=11 // pred_check
          %p210 = pneg %p64
        $region14: #{tpu_custom_call.1} parent=11 // pred_check_branch
          %212 = sbr.rel (%p210) target = $region16
        $region15: #{tpu_custom_call.1} parent=11 // pred_region
          _
        $region16: #{tpu_custom_call.1} parent=11 // pred_fallthru
          _
        // Predicated region
        $region17: #{tpu_custom_call.1} parent=11 // pred_check
          %p213 = pneg %p85
        $region18: #{tpu_custom_call.1} parent=11 // pred_check_branch
          %215 = sbr.rel (%p213) target = $region20
        $region19: #{tpu_custom_call.1} parent=11 // pred_region
          _
        $region20: #{tpu_custom_call.1} parent=11 // pred_fallthru
          _
        // Predicated region
        $region21: #{tpu_custom_call.1} parent=11 // pred_check
          %p216 = pneg %p106
        $region22: #{tpu_custom_call.1} parent=11 // pred_check_branch
          %218 = sbr.rel (%p216) target = $region24
        $region23: #{tpu_custom_call.1} parent=11 // pred_region
          _
        $region24: #{tpu_custom_call.1} parent=11 // pred_fallthru
          _
        // Predicated region
        $region25: #{tpu_custom_call.1} parent=11 // pred_check
          %p219 = pneg %p127
        $region26: #{tpu_custom_call.1} parent=11 // pred_check_branch
          %221 = sbr.rel (%p219) target = $region28
        $region27: #{tpu_custom_call.1} parent=11 // pred_region
          _
        $region28: #{tpu_custom_call.1} parent=11 // pred_fallthru
          _
        // Predicated region
        $region29: #{tpu_custom_call.1} parent=11 // pred_check
          %p222 = pneg %p148
        $region30: #{tpu_custom_call.1} parent=11 // pred_check_branch
          %224 = sbr.rel (%p222) target = $region32
        $region31: #{tpu_custom_call.1} parent=11 // pred_region
          _
        $region32: #{tpu_custom_call.1} parent=11 // pred_fallthru
          _
        // Predicated region
        $region33: #{tpu_custom_call.1} parent=11 // pred_check
          %p225 = pneg %p169
        $region34: #{tpu_custom_call.1} parent=11 // pred_check_branch
          %227 = sbr.rel (%p225) target = $region36
        $region35: #{tpu_custom_call.1} parent=11 // pred_region
          %s229 = ssub.s32 4608, 4608
          %230 = vsyncadd [#allocation3], %s229
          %s231 = sshll.u32 [#allocation2], 4
          %s232 = int_to_ptr.vmem [resolvable:$true] %s231
          %237 = dma.hbm_to_vmem [thread:$0]  %s6, 4608, %s232, [#allocation3], 128, 128, 8
        $region36: #{tpu_custom_call.1} parent=11 // pred_fallthru
          _
      $region12: #{tpu_custom_call.1} parent=5 // pred_fallthru
        _
      %p238 = scmp.lt.s32.totalorder %s17, 2
      // Predicated region
      $region37: #{tpu_custom_call.1} parent=5 // pred_check
        %p239 = pneg %p238
      $region38: #{tpu_custom_call.1} parent=5 // pred_check_branch
        %241 = sbr.rel (%p239) target = $region40
      $region39: #{tpu_custom_call.1} parent=5 // pred_region
        // Predicated region
        $region41: #{tpu_custom_call.1} parent=39 // pred_check
          %p242 = pneg %p37
        $region42: #{tpu_custom_call.1} parent=39 // pred_check_branch
          %244 = sbr.rel (%p242) target = $region44
        $region43: #{tpu_custom_call.1} parent=39 // pred_region
          %p245 = scmp.lt.s32.totalorder %s17, 1
          %s246 = scalar_select %p245, %s17, 1
          %s247 = smul.addr %s246, 41
          %s248 = smul.addr %s247, 4
          %s249 = scalar_lea.vmem %s0, %s248
        $region44: #{tpu_custom_call.1} parent=39 // pred_fallthru
          _
      $region40: #{tpu_custom_call.1} parent=5 // pred_fallthru
        _
      %p250 = scmp.le.s32.totalorder 1, %s17
      %p251 = scmp.lt.s32.totalorder %s17, 3
      %p252 = pnand %p250, %p251
      %p253 = pneg %p252
      // Predicated region
      $region45: #{tpu_custom_call.1} parent=5 // pred_check
        _
      $region46: #{tpu_custom_call.1} parent=5 // pred_check_branch
        %255 = sbr.rel (%p252) target = $region48
      $region47: #{tpu_custom_call.1} parent=5 // pred_region
        %s256 = ssub.s32 %s17, 1
        // Predicated region
        $region49: #{tpu_custom_call.1} parent=47 // pred_check
          %p257 = pneg %p169
        $region50: #{tpu_custom_call.1} parent=47 // pred_check_branch
          %259 = sbr.rel (%p257) target = $region52
        $region51: #{tpu_custom_call.1} parent=47 // pred_region
          %260 = dma.done [#allocation3], 4608
        $region52: #{tpu_custom_call.1} parent=47 // pred_fallthru
          _
        %p261 = scmp.lt.s32.totalorder %s22, 1
        %s262 = scalar_select %p261, %s22, 1
        %s263 = smul.addr %s262, 41
        %s264 = smul.addr %s263, 4
        %s265 = scalar_lea.vmem %s0, %s264
        %p266 = pneg %p43
        %p267 = pneg %p40
        %p268 = pneg %p64
        %p269 = pneg %p61
        %p270 = pneg %p85
        %p271 = pneg %p82
        %p272 = pneg %p106
        %p273 = pneg %p103
        %p274 = pneg %p127
        %p275 = pneg %p124
        %p276 = pneg %p148
        %p277 = pneg %p145
        %p278 = pneg %p169
        %p279 = pneg %p166
        %p280 = pneg %p195
        %p281 = pneg %p192
        %s282 = sand.u32 %s182, 1
        %s283 = scalar_lea.sflag [#allocation4], %s282
        %s284 = sand.u32 %s182, 1
        %s285 = smul.addr %s284, 288
        %s286 = scalar_lea.vmem [#allocation5], %s285
        %p287 = scmp.lt.s32.totalorder %s22, 1
        %s288 = scalar_select %p287, %s22, 1
        %s289 = smul.addr %s288, 41
        %s290 = smul.addr %s289, 4
        %s291 = scalar_lea.vmem %s0, %s290
        %v293 = vld [vmem:[%s291] sm:$0xf]
        %v294 = vld [vmem:[%s291 + $0x4] sm:$0xf]
        %v295 = vld [vmem:[%s291 + $0x8] sm:$0xf]
        %v296 = vld [vmem:[%s291 + $0xc] sm:$0xf]
        %v297 = vld [vmem:[%s291 + $0x10] sm:$0xf]
        %v298 = vld [vmem:[%s291 + $0x14] sm:$0xf]
        %v299 = vld [vmem:[%s291 + $0x18] sm:$0xf]
        %v300 = vld [vmem:[%s291 + $0x1c] sm:$0xf]
        %v301 = vld [vmem:[%s291 + $0x20] sm:$0xf]
        %v302 = vld [vmem:[%s291 + $0x24] sm:$0xf]
        %v303 = vld [vmem:[%s291 + $0x28] sm:$0xf]
        %v304 = vld [vmem:[%s291 + $0x2c] sm:$0xf]
        %v305 = vld [vmem:[%s291 + $0x30] sm:$0xf]
        %v306 = vld [vmem:[%s291 + $0x34] sm:$0xf]
        %v307 = vld [vmem:[%s291 + $0x38] sm:$0xf]
        %v308 = vld [vmem:[%s291 + $0x3c] sm:$0xf]
        %v309 = vld [vmem:[%s291 + $0x40] sm:$0xf]
        %v310 = vld [vmem:[%s291 + $0x44] sm:$0xf]
        %v311 = vld [vmem:[%s291 + $0x48] sm:$0xf]
        %v312 = vld [vmem:[%s291 + $0x4c] sm:$0xf]
        %v313 = vld [vmem:[%s291 + $0x50] sm:$0xf]
        %v314 = vld [vmem:[%s291 + $0x54] sm:$0xf]
        %v315 = vld [vmem:[%s291 + $0x58] sm:$0xf]
        %v316 = vld [vmem:[%s291 + $0x5c] sm:$0xf]
        %v317 = vld [vmem:[%s291 + $0x60] sm:$0xf]
        %v318 = vld [vmem:[%s291 + $0x64] sm:$0xf]
        %v319 = vld [vmem:[%s291 + $0x68] sm:$0xf]
        %v320 = vld [vmem:[%s291 + $0x6c] sm:$0xf]
        %v321 = vld [vmem:[%s291 + $0x70] sm:$0xf]
        %v322 = vld [vmem:[%s291 + $0x74] sm:$0xf]
        %v323 = vld [vmem:[%s291 + $0x78] sm:$0xf]
        %v324 = vld [vmem:[%s291 + $0x7c] sm:$0xf]
        %v325 = vld [vmem:[%s291 + $0x80] sm:$0xf]
        %v326 = vld [vmem:[%s291 + $0x84] sm:$0xf]
        %v327 = vld [vmem:[%s291 + $0x88] sm:$0xf]
        %v328 = vld [vmem:[%s291 + $0x8c] sm:$0xf]
        %v329 = vld [vmem:[%s291 + $0x90] sm:$0xf]
        %v330 = vld [vmem:[%s291 + $0x94] sm:$0xf]
        %v331 = vld [vmem:[%s291 + $0x98] sm:$0xf]
        %v332 = vld [vmem:[%s291 + $0x9c] sm:$0xf]
        %v333 = vld [vmem:[%s291 + $0xa0] sm:$0xf]
        %v334 = vld [vmem:[%s1] sm:$0xf]
        %v335 = vld [vmem:[%s1 + $0x4] sm:$0xf]
        %s336 = scalar_lea.vmem %s1, 8
        %v337 = vld [vmem:[%s336] sm:$0xf]
        %v338 = vld [vmem:[%s336 + $0x4] sm:$0xf]
        %v376 = vunpack.c.l.b16 %v293
        %v377 = vunpack.c.l.b16 %v294
        %v378 = vunpack.c.l.b16 %v295
        %v379 = vunpack.c.l.b16 %v296
        %v380 = vunpack.c.l.b16 %v297
        %v381 = vunpack.c.l.b16 %v298
        %v382 = vunpack.c.l.b16 %v299
        %v383 = vunpack.c.l.b16 %v300
        %v384 = vunpack.c.l.b16 %v301
        %v385 = vunpack.c.l.b16 %v302
        %v386 = vunpack.c.l.b16 %v303
        %v387 = vunpack.c.l.b16 %v304
        %v388 = vunpack.c.l.b16 %v305
        %v389 = vunpack.c.l.b16 %v306
        %v390 = vunpack.c.l.b16 %v307
        %v391 = vunpack.c.l.b16 %v308
        %v392 = vunpack.c.l.b16 %v309
        %v393 = vunpack.c.l.b16 %v310
        %v394 = vunpack.c.l.b16 %v311
        %v395 = vunpack.c.l.b16 %v312
        %v396 = vunpack.c.l.b16 %v313
        %v397 = vunpack.c.l.b16 %v314
        %v398 = vunpack.c.l.b16 %v315
        %v399 = vunpack.c.l.b16 %v316
        %v400 = vunpack.c.l.b16 %v317
        %v401 = vunpack.c.l.b16 %v318
        %v402 = vunpack.c.l.b16 %v319
        %v403 = vunpack.c.l.b16 %v320
        %v404 = vunpack.c.l.b16 %v321
        %v405 = vunpack.c.l.b16 %v322
        %v406 = vunpack.c.l.b16 %v323
        %v407 = vunpack.c.l.b16 %v324
        %v408 = vunpack.c.l.b16 %v325
        %v409 = vunpack.c.l.b16 %v326
        %v410 = vunpack.c.l.b16 %v327
        %v411 = vunpack.c.l.b16 %v328
        %v412 = vunpack.c.l.b16 %v329
        %v413 = vpack.c.b16 %v377, %v376
        %v414 = vpack.c.b16 %v379, %v378
        %v415 = vpack.c.b16 %v381, %v380
        %v416 = vpack.c.b16 %v383, %v382
        %v417 = vpack.c.b16 %v385, %v384
        %v418 = vpack.c.b16 %v387, %v386
        %v419 = vpack.c.b16 %v389, %v388
        %v420 = vpack.c.b16 %v391, %v390
        %v421 = vpack.c.b16 %v393, %v392
        %v422 = vpack.c.b16 %v395, %v394
        %v423 = vpack.c.b16 %v397, %v396
        %v424 = vpack.c.b16 %v399, %v398
        %v425 = vpack.c.b16 %v401, %v400
        %v426 = vpack.c.b16 %v403, %v402
        %v427 = vpack.c.b16 %v405, %v404
        %v428 = vpack.c.b16 %v407, %v406
        %v429 = vpack.c.b16 %v409, %v408
        %v430 = vpack.c.b16 %v411, %v410
        %v431 = vpack.c.b16 %v412, %v412
        %vm432 = vsmask.f32 7424
        %v434 = vshrl.u32 %v413, 16
        %v436 = vshll.u32 %v413, 16
        %v438 = vrot.slane %v436, 1
        %v439 = vor.u32 %v434, %v438
        %v441 = vshll.u32 %v414, 16
        %v443 = vrot.slane %v441, 1
        %v444 = vsel %vm432, %v439, %v443
        %v445 = vshrl.u32 %v414, 16
        %v447 = vor.u32 %v445, %v443
        %v449 = vshll.u32 %v415, 16
        %v451 = vrot.slane %v449, 1
        %v452 = vsel %vm432, %v447, %v451
        %v453 = vshrl.u32 %v415, 16
        %v455 = vor.u32 %v453, %v451
        %v457 = vshll.u32 %v416, 16
        %v459 = vrot.slane %v457, 1
        %v460 = vsel %vm432, %v455, %v459
        %v461 = vshrl.u32 %v416, 16
        %v463 = vor.u32 %v461, %v459
        %v465 = vshll.u32 %v417, 16
        %v467 = vrot.slane %v465, 1
        %v468 = vsel %vm432, %v463, %v467
        %v469 = vshrl.u32 %v417, 16
        %v471 = vor.u32 %v469, %v467
        %v473 = vshll.u32 %v418, 16
        %v475 = vrot.slane %v473, 1
        %v476 = vsel %vm432, %v471, %v475
        %v477 = vshrl.u32 %v418, 16
        %v479 = vor.u32 %v477, %v475
        %v481 = vshll.u32 %v419, 16
        %v483 = vrot.slane %v481, 1
        %v484 = vsel %vm432, %v479, %v483
        %v485 = vshrl.u32 %v419, 16
        %v487 = vor.u32 %v485, %v483
        %v489 = vshll.u32 %v420, 16
        %v491 = vrot.slane %v489, 1
        %v492 = vsel %vm432, %v487, %v491
        %v493 = vshrl.u32 %v420, 16
        %v495 = vor.u32 %v493, %v491
        %v497 = vshll.u32 %v421, 16
        %v499 = vrot.slane %v497, 1
        %v500 = vsel %vm432, %v495, %v499
        %v501 = vshrl.u32 %v421, 16
        %v503 = vor.u32 %v501, %v499
        %v505 = vshll.u32 %v422, 16
        %v507 = vrot.slane %v505, 1
        %v508 = vsel %vm432, %v503, %v507
        %v509 = vshrl.u32 %v422, 16
        %v511 = vor.u32 %v509, %v507
        %v513 = vshll.u32 %v423, 16
        %v515 = vrot.slane %v513, 1
        %v516 = vsel %vm432, %v511, %v515
        %v517 = vshrl.u32 %v423, 16
        %v519 = vor.u32 %v517, %v515
        %v521 = vshll.u32 %v424, 16
        %v523 = vrot.slane %v521, 1
        %v524 = vsel %vm432, %v519, %v523
        %v525 = vshrl.u32 %v424, 16
        %v527 = vor.u32 %v525, %v523
        %v529 = vshll.u32 %v425, 16
        %v531 = vrot.slane %v529, 1
        %v532 = vsel %vm432, %v527, %v531
        %v533 = vshrl.u32 %v425, 16
        %v535 = vor.u32 %v533, %v531
        %v537 = vshll.u32 %v426, 16
        %v539 = vrot.slane %v537, 1
        %v540 = vsel %vm432, %v535, %v539
        %v541 = vshrl.u32 %v426, 16
        %v543 = vor.u32 %v541, %v539
        %v545 = vshll.u32 %v427, 16
        %v547 = vrot.slane %v545, 1
        %v548 = vsel %vm432, %v543, %v547
        %v549 = vshrl.u32 %v427, 16
        %v551 = vor.u32 %v549, %v547
        %v553 = vshll.u32 %v428, 16
        %v555 = vrot.slane %v553, 1
        %v556 = vsel %vm432, %v551, %v555
        %v557 = vshrl.u32 %v428, 16
        %v559 = vor.u32 %v557, %v555
        %v561 = vshll.u32 %v429, 16
        %v563 = vrot.slane %v561, 1
        %v564 = vsel %vm432, %v559, %v563
        %v565 = vshrl.u32 %v429, 16
        %v567 = vor.u32 %v565, %v563
        %v569 = vshll.u32 %v430, 16
        %v571 = vrot.slane %v569, 1
        %v572 = vsel %vm432, %v567, %v571
        %v573 = vshrl.u32 %v430, 16
        %v575 = vor.u32 %v573, %v571
        %v577 = vshll.u32 %v431, 16
        %v579 = vrot.slane %v577, 1
        %v580 = vsel %vm432, %v575, %v579
        %v583 = vunpack.c.l.b16 %v337
        %v584 = vunpack.c.l.b16 %v338
        %v585 = vpack.c.b16 %v584, %v583
        %vm587 = vcmask 130048
        %v589 = vsel %vm587, %v444, 0
        %v592 = vsel %vm587, %v452, 0
        %v595 = vsel %vm587, %v460, 0
        %v598 = vsel %vm587, %v468, 0
        %v601 = vsel %vm587, %v476, 0
        %v604 = vsel %vm587, %v484, 0
        %v607 = vsel %vm587, %v492, 0
        %v610 = vsel %vm587, %v500, 0
        %v613 = vsel %vm587, %v508, 0
        %v616 = vsel %vm587, %v516, 0
        %v619 = vsel %vm587, %v524, 0
        %v622 = vsel %vm587, %v532, 0
        %v625 = vsel %vm587, %v540, 0
        %v628 = vsel %vm587, %v548, 0
        %v631 = vsel %vm587, %v556, 0
        %v634 = vsel %vm587, %v564, 0
        %v637 = vsel %vm587, %v572, 0
        %v640 = vsel %vm587, %v580, 0
        %642 = vmatprep.subr.bf16.mxu0 0
        %643 = vmatpush1.bf16.msra.mxu0 0
        %644 = vmatprep.subr.bf16.mxu0 0
        %645 = vmatpush1.bf16.msra.mxu0 0
        %646 = vmatprep.subr.bf16.mxu0 0
        %647 = vmatpush1.bf16.msra.mxu0 0
        %648 = vmatprep.subr.bf16.mxu0 0
        %649 = vmatpush1.bf16.msra.mxu0 0
        %650 = vmatprep.subr.bf16.mxu0 0
        %651 = vmatpush1.bf16.msra.mxu0 0
        %652 = vmatprep.subr.bf16.mxu0 0
        %653 = vmatpush1.bf16.msra.mxu0 0
        %654 = vmatprep.subr.bf16.mxu0 0
        %655 = vmatpush1.bf16.msra.mxu0 0
        %656 = vmatprep.subr.bf16.mxu0 0
        %657 = vmatpush1.bf16.msra.mxu0 %v585
        %658 = vmatprep.subr.bf16.mxu0 0
        %659 = vmatpush2.bf16.msra.mxu0 0
        %660 = vmatprep.subr.bf16.mxu0 0
        %661 = vmatpush2.bf16.msra.mxu0 0
        %662 = vmatprep.subr.bf16.mxu0 0
        %663 = vmatpush2.bf16.msra.mxu0 0
        %664 = vmatprep.subr.bf16.mxu0 0
        %665 = vmatpush2.bf16.msra.mxu0 0
        %666 = vmatprep.subr.bf16.mxu0 0
        %667 = vmatpush2.bf16.msra.mxu0 0
        %668 = vmatprep.subr.bf16.mxu0 0
        %669 = vmatpush2.bf16.msra.mxu0 0
        %670 = vmatprep.subr.bf16.mxu0 0
        %671 = vmatpush2.bf16.msra.mxu0 0
        %672 = vmatprep.subr.bf16.mxu0 0
        %673 = vmatpush2.bf16.msra.mxu0 0
        %674 = vmatprep.mubr.bf16.mxu0 0
        %675 = vmatmul.mubr.bf16.gmra.mxu0 %v589
        %v676 = vpop.f32.mrf.mxu0
        %v677 = vadd.f32 0.0, %v676
        %v678 = vpop.f32.mrf.mxu0
        %v679 = vpop.f32.mrf.mxu0
        %v680 = vadd.f32 0.0, %v679
        %v681 = vpop.f32.mrf.mxu0
        %682 = vmatprep.mubr.bf16.mxu0 0
        %683 = vmatmul.mubr.bf16.gmra.mxu0 %v592
        %v684 = vpop.f32.mrf.mxu0
        %v685 = vadd.f32 0.0, %v684
        %v686 = vpop.f32.mrf.mxu0
        %v687 = vpop.f32.mrf.mxu0
        %v688 = vadd.f32 0.0, %v687
        %v689 = vpop.f32.mrf.mxu0
        %690 = vmatprep.mubr.bf16.mxu0 0
        %691 = vmatmul.mubr.bf16.gmra.mxu0 %v595
        %v692 = vpop.f32.mrf.mxu0
        %v693 = vadd.f32 0.0, %v692
        %v694 = vpop.f32.mrf.mxu0
        %v695 = vpop.f32.mrf.mxu0
        %v696 = vadd.f32 0.0, %v695
        %v697 = vpop.f32.mrf.mxu0
        %698 = vmatprep.mubr.bf16.mxu0 0
        %699 = vmatmul.mubr.bf16.gmra.mxu0 %v598
        %v700 = vpop.f32.mrf.mxu0
        %v701 = vadd.f32 0.0, %v700
        %v702 = vpop.f32.mrf.mxu0
        %v703 = vpop.f32.mrf.mxu0
        %v704 = vadd.f32 0.0, %v703
        %v705 = vpop.f32.mrf.mxu0
        %706 = vmatprep.mubr.bf16.mxu0 0
        %707 = vmatmul.mubr.bf16.gmra.mxu0 %v601
        %v708 = vpop.f32.mrf.mxu0
        %v709 = vadd.f32 0.0, %v708
        %v710 = vpop.f32.mrf.mxu0
        %v711 = vpop.f32.mrf.mxu0
        %v712 = vadd.f32 0.0, %v711
        %v713 = vpop.f32.mrf.mxu0
        %714 = vmatprep.mubr.bf16.mxu0 0
        %715 = vmatmul.mubr.bf16.gmra.mxu0 %v604
        %v716 = vpop.f32.mrf.mxu0
        %v717 = vadd.f32 0.0, %v716
        %v718 = vpop.f32.mrf.mxu0
        %v719 = vpop.f32.mrf.mxu0
        %v720 = vadd.f32 0.0, %v719
        %v721 = vpop.f32.mrf.mxu0
        %722 = vmatprep.mubr.bf16.mxu0 0
        %723 = vmatmul.mubr.bf16.gmra.mxu0 %v607
        %v724 = vpop.f32.mrf.mxu0
        %v725 = vadd.f32 0.0, %v724
        %v726 = vpop.f32.mrf.mxu0
        %v727 = vpop.f32.mrf.mxu0
        %v728 = vadd.f32 0.0, %v727
        %v729 = vpop.f32.mrf.mxu0
        %730 = vmatprep.mubr.bf16.mxu0 0
        %731 = vmatmul.mubr.bf16.gmra.mxu0 %v610
        %v732 = vpop.f32.mrf.mxu0
        %v733 = vadd.f32 0.0, %v732
        %v734 = vpop.f32.mrf.mxu0
        %v735 = vpop.f32.mrf.mxu0
        %v736 = vadd.f32 0.0, %v735
        %v737 = vpop.f32.mrf.mxu0
        %738 = vmatprep.mubr.bf16.mxu0 0
        %739 = vmatmul.mubr.bf16.gmra.mxu0 %v613
        %v740 = vpop.f32.mrf.mxu0
        %v741 = vadd.f32 0.0, %v740
        %v742 = vpop.f32.mrf.mxu0
        %v743 = vpop.f32.mrf.mxu0
        %v744 = vadd.f32 0.0, %v743
        %v745 = vpop.f32.mrf.mxu0
        %746 = vmatprep.mubr.bf16.mxu0 0
        %747 = vmatmul.mubr.bf16.gmra.mxu0 %v616
        %v748 = vpop.f32.mrf.mxu0
        %v749 = vadd.f32 0.0, %v748
        %v750 = vpop.f32.mrf.mxu0
        %v751 = vpop.f32.mrf.mxu0
        %v752 = vadd.f32 0.0, %v751
        %v753 = vpop.f32.mrf.mxu0
        %754 = vmatprep.mubr.bf16.mxu0 0
        %755 = vmatmul.mubr.bf16.gmra.mxu0 %v619
        %v756 = vpop.f32.mrf.mxu0
        %v757 = vadd.f32 0.0, %v756
        %v758 = vpop.f32.mrf.mxu0
        %v759 = vpop.f32.mrf.mxu0
        %v760 = vadd.f32 0.0, %v759
        %v761 = vpop.f32.mrf.mxu0
        %762 = vmatprep.mubr.bf16.mxu0 0
        %763 = vmatmul.mubr.bf16.gmra.mxu0 %v622
        %v764 = vpop.f32.mrf.mxu0
        %v765 = vadd.f32 0.0, %v764
        %v766 = vpop.f32.mrf.mxu0
        %v767 = vpop.f32.mrf.mxu0
        %v768 = vadd.f32 0.0, %v767
        %v769 = vpop.f32.mrf.mxu0
        %770 = vmatprep.mubr.bf16.mxu0 0
        %771 = vmatmul.mubr.bf16.gmra.mxu0 %v625
        %v772 = vpop.f32.mrf.mxu0
        %v773 = vadd.f32 0.0, %v772
        %v774 = vpop.f32.mrf.mxu0
        %v775 = vpop.f32.mrf.mxu0
        %v776 = vadd.f32 0.0, %v775
        %v777 = vpop.f32.mrf.mxu0
        %778 = vmatprep.mubr.bf16.mxu0 0
        %779 = vmatmul.mubr.bf16.gmra.mxu0 %v628
        %v780 = vpop.f32.mrf.mxu0
        %v781 = vadd.f32 0.0, %v780
        %v782 = vpop.f32.mrf.mxu0
        %v783 = vpop.f32.mrf.mxu0
        %v784 = vadd.f32 0.0, %v783
        %v785 = vpop.f32.mrf.mxu0
        %786 = vmatprep.mubr.bf16.mxu0 0
        %787 = vmatmul.mubr.bf16.gmra.mxu0 %v631
        %v788 = vpop.f32.mrf.mxu0
        %v789 = vadd.f32 0.0, %v788
        %v790 = vpop.f32.mrf.mxu0
        %v791 = vpop.f32.mrf.mxu0
        %v792 = vadd.f32 0.0, %v791
        %v793 = vpop.f32.mrf.mxu0
        %794 = vmatprep.mubr.bf16.mxu0 0
        %795 = vmatmul.mubr.bf16.gmra.mxu0 %v634
        %v796 = vpop.f32.mrf.mxu0
        %v797 = vadd.f32 0.0, %v796
        %v798 = vpop.f32.mrf.mxu0
        %v799 = vpop.f32.mrf.mxu0
        %v800 = vadd.f32 0.0, %v799
        %v801 = vpop.f32.mrf.mxu0
        %802 = vmatprep.mubr.bf16.mxu0 0
        %803 = vmatmul.mubr.bf16.gmra.mxu0 %v637
        %v804 = vpop.f32.mrf.mxu0
        %v805 = vadd.f32 0.0, %v804
        %v806 = vpop.f32.mrf.mxu0
        %v807 = vpop.f32.mrf.mxu0
        %v808 = vadd.f32 0.0, %v807
        %v809 = vpop.f32.mrf.mxu0
        %810 = vmatprep.mubr.bf16.mxu0 0
        %811 = vmatmul.mubr.bf16.gmra.mxu0 %v640
        %v812 = vpop.f32.mrf.mxu0
        %v813 = vadd.f32 0.0, %v812
        %v814 = vpop.f32.mrf.mxu0
        %v815 = vpop.f32.mrf.mxu0
        %v816 = vadd.f32 0.0, %v815
        %v817 = vpop.f32.mrf.mxu0
        %818 = vdwg.mxu0
        %v821 = vunpack.c.l.b16 %v334
        %v822 = vunpack.c.l.b16 %v335
        %v823 = vpack.c.b16 %v822, %v821
        %v825 = vsel %vm587, %v413, 0
        %v827 = vsel %vm587, %v414, 0
        %v829 = vsel %vm587, %v415, 0
        %v831 = vsel %vm587, %v416, 0
        %v833 = vsel %vm587, %v417, 0
        %v835 = vsel %vm587, %v418, 0
        %v837 = vsel %vm587, %v419, 0
        %v839 = vsel %vm587, %v420, 0
        %v841 = vsel %vm587, %v421, 0
        %v843 = vsel %vm587, %v422, 0
        %v845 = vsel %vm587, %v423, 0
        %v847 = vsel %vm587, %v424, 0
        %v849 = vsel %vm587, %v425, 0
        %v851 = vsel %vm587, %v426, 0
        %v853 = vsel %vm587, %v427, 0
        %v855 = vsel %vm587, %v428, 0
        %v857 = vsel %vm587, %v429, 0
        %v859 = vsel %vm587, %v430, 0
        %861 = vmatprep.subr.bf16.mxu0 0
        %862 = vmatpush1.bf16.msra.mxu0 0
        %863 = vmatprep.subr.bf16.mxu0 0
        %864 = vmatpush1.bf16.msra.mxu0 0
        %865 = vmatprep.subr.bf16.mxu0 0
        %866 = vmatpush1.bf16.msra.mxu0 0
        %867 = vmatprep.subr.bf16.mxu0 0
        %868 = vmatpush1.bf16.msra.mxu0 0
        %869 = vmatprep.subr.bf16.mxu0 0
        %870 = vmatpush1.bf16.msra.mxu0 0
        %871 = vmatprep.subr.bf16.mxu0 0
        %872 = vmatpush1.bf16.msra.mxu0 0
        %873 = vmatprep.subr.bf16.mxu0 0
        %874 = vmatpush1.bf16.msra.mxu0 0
        %875 = vmatprep.subr.bf16.mxu0 0
        %876 = vmatpush1.bf16.msra.mxu0 %v823
        %877 = vmatprep.subr.bf16.mxu0 0
        %878 = vmatpush2.bf16.msra.mxu0 0
        %879 = vmatprep.subr.bf16.mxu0 0
        %880 = vmatpush2.bf16.msra.mxu0 0
        %881 = vmatprep.subr.bf16.mxu0 0
        %882 = vmatpush2.bf16.msra.mxu0 0
        %883 = vmatprep.subr.bf16.mxu0 0
        %884 = vmatpush2.bf16.msra.mxu0 0
        %885 = vmatprep.subr.bf16.mxu0 0
        %886 = vmatpush2.bf16.msra.mxu0 0
        %887 = vmatprep.subr.bf16.mxu0 0
        %888 = vmatpush2.bf16.msra.mxu0 0
        %889 = vmatprep.subr.bf16.mxu0 0
        %890 = vmatpush2.bf16.msra.mxu0 0
        %891 = vmatprep.subr.bf16.mxu0 0
        %892 = vmatpush2.bf16.msra.mxu0 0
        %893 = vmatprep.mubr.bf16.mxu0 0
        %894 = vmatmul.mubr.bf16.gmra.mxu0 %v825
        %v895 = vpop.f32.mrf.mxu0
        %v896 = vadd.f32 %v677, %v895
        %v897 = vpop.f32.mrf.mxu0
        %v898 = vpop.f32.mrf.mxu0
        %v899 = vadd.f32 %v680, %v898
        %v900 = vpop.f32.mrf.mxu0
        %901 = vmatprep.mubr.bf16.mxu0 0
        %902 = vmatmul.mubr.bf16.gmra.mxu0 %v827
        %v903 = vpop.f32.mrf.mxu0
        %v904 = vadd.f32 %v685, %v903
        %v905 = vpop.f32.mrf.mxu0
        %v906 = vpop.f32.mrf.mxu0
        %v907 = vadd.f32 %v688, %v906
        %v908 = vpop.f32.mrf.mxu0
        %909 = vmatprep.mubr.bf16.mxu0 0
        %910 = vmatmul.mubr.bf16.gmra.mxu0 %v829
        %v911 = vpop.f32.mrf.mxu0
        %v912 = vadd.f32 %v693, %v911
        %v913 = vpop.f32.mrf.mxu0
        %v914 = vpop.f32.mrf.mxu0
        %v915 = vadd.f32 %v696, %v914
        %v916 = vpop.f32.mrf.mxu0
        %917 = vmatprep.mubr.bf16.mxu0 0
        %918 = vmatmul.mubr.bf16.gmra.mxu0 %v831
        %v919 = vpop.f32.mrf.mxu0
        %v920 = vadd.f32 %v701, %v919
        %v921 = vpop.f32.mrf.mxu0
        %v922 = vpop.f32.mrf.mxu0
        %v923 = vadd.f32 %v704, %v922
        %v924 = vpop.f32.mrf.mxu0
        %925 = vmatprep.mubr.bf16.mxu0 0
        %926 = vmatmul.mubr.bf16.gmra.mxu0 %v833
        %v927 = vpop.f32.mrf.mxu0
        %v928 = vadd.f32 %v709, %v927
        %v929 = vpop.f32.mrf.mxu0
        %v930 = vpop.f32.mrf.mxu0
        %v931 = vadd.f32 %v712, %v930
        %v932 = vpop.f32.mrf.mxu0
        %933 = vmatprep.mubr.bf16.mxu0 0
        %934 = vmatmul.mubr.bf16.gmra.mxu0 %v835
        %v935 = vpop.f32.mrf.mxu0
        %v936 = vadd.f32 %v717, %v935
        %v937 = vpop.f32.mrf.mxu0
        %v938 = vpop.f32.mrf.mxu0
        %v939 = vadd.f32 %v720, %v938
        %v940 = vpop.f32.mrf.mxu0
        %941 = vmatprep.mubr.bf16.mxu0 0
        %942 = vmatmul.mubr.bf16.gmra.mxu0 %v837
        %v943 = vpop.f32.mrf.mxu0
        %v944 = vadd.f32 %v725, %v943
        %v945 = vpop.f32.mrf.mxu0
        %v946 = vpop.f32.mrf.mxu0
        %v947 = vadd.f32 %v728, %v946
        %v948 = vpop.f32.mrf.mxu0
        %949 = vmatprep.mubr.bf16.mxu0 0
        %950 = vmatmul.mubr.bf16.gmra.mxu0 %v839
        %v951 = vpop.f32.mrf.mxu0
        %v952 = vadd.f32 %v733, %v951
        %v953 = vpop.f32.mrf.mxu0
        %v954 = vpop.f32.mrf.mxu0
        %v955 = vadd.f32 %v736, %v954
        %v956 = vpop.f32.mrf.mxu0
        %957 = vmatprep.mubr.bf16.mxu0 0
        %958 = vmatmul.mubr.bf16.gmra.mxu0 %v841
        %v959 = vpop.f32.mrf.mxu0
        %v960 = vadd.f32 %v741, %v959
        %v961 = vpop.f32.mrf.mxu0
        %v962 = vpop.f32.mrf.mxu0
        %v963 = vadd.f32 %v744, %v962
        %v964 = vpop.f32.mrf.mxu0
        %965 = vmatprep.mubr.bf16.mxu0 0
        %966 = vmatmul.mubr.bf16.gmra.mxu0 %v843
        %v967 = vpop.f32.mrf.mxu0
        %v968 = vadd.f32 %v749, %v967
        %v969 = vpop.f32.mrf.mxu0
        %v970 = vpop.f32.mrf.mxu0
        %v971 = vadd.f32 %v752, %v970
        %v972 = vpop.f32.mrf.mxu0
        %973 = vmatprep.mubr.bf16.mxu0 0
        %974 = vmatmul.mubr.bf16.gmra.mxu0 %v845
        %v975 = vpop.f32.mrf.mxu0
        %v976 = vadd.f32 %v757, %v975
        %v977 = vpop.f32.mrf.mxu0
        %v978 = vpop.f32.mrf.mxu0
        %v979 = vadd.f32 %v760, %v978
        %v980 = vpop.f32.mrf.mxu0
        %981 = vmatprep.mubr.bf16.mxu0 0
        %982 = vmatmul.mubr.bf16.gmra.mxu0 %v847
        %v983 = vpop.f32.mrf.mxu0
        %v984 = vadd.f32 %v765, %v983
        %v985 = vpop.f32.mrf.mxu0
        %v986 = vpop.f32.mrf.mxu0
        %v987 = vadd.f32 %v768, %v986
        %v988 = vpop.f32.mrf.mxu0
        %989 = vmatprep.mubr.bf16.mxu0 0
        %990 = vmatmul.mubr.bf16.gmra.mxu0 %v849
        %v991 = vpop.f32.mrf.mxu0
        %v992 = vadd.f32 %v773, %v991
        %v993 = vpop.f32.mrf.mxu0
        %v994 = vpop.f32.mrf.mxu0
        %v995 = vadd.f32 %v776, %v994
        %v996 = vpop.f32.mrf.mxu0
        %997 = vmatprep.mubr.bf16.mxu0 0
        %998 = vmatmul.mubr.bf16.gmra.mxu0 %v851
        %v999 = vpop.f32.mrf.mxu0
        %v1000 = vadd.f32 %v781, %v999
        %v1001 = vpop.f32.mrf.mxu0
        %v1002 = vpop.f32.mrf.mxu0
        %v1003 = vadd.f32 %v784, %v1002
        %v1004 = vpop.f32.mrf.mxu0
        %1005 = vmatprep.mubr.bf16.mxu0 0
        %1006 = vmatmul.mubr.bf16.gmra.mxu0 %v853
        %v1007 = vpop.f32.mrf.mxu0
        %v1008 = vadd.f32 %v789, %v1007
        %v1009 = vpop.f32.mrf.mxu0
        %v1010 = vpop.f32.mrf.mxu0
        %v1011 = vadd.f32 %v792, %v1010
        %v1012 = vpop.f32.mrf.mxu0
        %1013 = vmatprep.mubr.bf16.mxu0 0
        %1014 = vmatmul.mubr.bf16.gmra.mxu0 %v855
        %v1015 = vpop.f32.mrf.mxu0
        %v1016 = vadd.f32 %v797, %v1015
        %v1017 = vpop.f32.mrf.mxu0
        %v1018 = vpop.f32.mrf.mxu0
        %v1019 = vadd.f32 %v800, %v1018
        %v1020 = vpop.f32.mrf.mxu0
        %1021 = vmatprep.mubr.bf16.mxu0 0
        %1022 = vmatmul.mubr.bf16.gmra.mxu0 %v857
        %v1023 = vpop.f32.mrf.mxu0
        %v1024 = vadd.f32 %v805, %v1023
        %v1025 = vpop.f32.mrf.mxu0
        %v1026 = vpop.f32.mrf.mxu0
        %v1027 = vadd.f32 %v808, %v1026
        %v1028 = vpop.f32.mrf.mxu0
        %1029 = vmatprep.mubr.bf16.mxu0 0
        %1030 = vmatmul.mubr.bf16.gmra.mxu0 %v859
        %v1031 = vpop.f32.mrf.mxu0
        %v1032 = vadd.f32 %v813, %v1031
        %v1033 = vpop.f32.mrf.mxu0
        %v1034 = vpop.f32.mrf.mxu0
        %v1035 = vadd.f32 %v816, %v1034
        %v1036 = vpop.f32.mrf.mxu0
        %1037 = vdwg.mxu0
        %s1038 = scalar_lea.vmem %s1, 16
        %v1039 = vld [vmem:[%s1038] sm:$0xf]
        %v1040 = vld [vmem:[%s1038 + $0x4] sm:$0xf]
        %vm1041 = vcmask 1046528
        %v1042 = vrot.slane %v413, 1
        %v1043 = vrot.slane %v414, 1
        %v1044 = vsel %vm1041, %v1042, %v1043
        %v1045 = vrot.slane %v415, 1
        %v1046 = vsel %vm1041, %v1043, %v1045
        %v1047 = vrot.slane %v416, 1
        %v1048 = vsel %vm1041, %v1045, %v1047
        %v1049 = vrot.slane %v417, 1
        %v1050 = vsel %vm1041, %v1047, %v1049
        %v1051 = vrot.slane %v418, 1
        %v1052 = vsel %vm1041, %v1049, %v1051
        %v1053 = vrot.slane %v419, 1
        %v1054 = vsel %vm1041, %v1051, %v1053
        %v1055 = vrot.slane %v420, 1
        %v1056 = vsel %vm1041, %v1053, %v1055
        %v1057 = vrot.slane %v421, 1
        %v1058 = vsel %vm1041, %v1055, %v1057
        %v1059 = vrot.slane %v422, 1
        %v1060 = vsel %vm1041, %v1057, %v1059
        %v1061 = vrot.slane %v423, 1
        %v1062 = vsel %vm1041, %v1059, %v1061
        %v1063 = vrot.slane %v424, 1
        %v1064 = vsel %vm1041, %v1061, %v1063
        %v1065 = vrot.slane %v425, 1
        %v1066 = vsel %vm1041, %v1063, %v1065
        %v1067 = vrot.slane %v426, 1
        %v1068 = vsel %vm1041, %v1065, %v1067
        %v1069 = vrot.slane %v427, 1
        %v1070 = vsel %vm1041, %v1067, %v1069
        %v1071 = vrot.slane %v428, 1
        %v1072 = vsel %vm1041, %v1069, %v1071
        %v1073 = vrot.slane %v429, 1
        %v1074 = vsel %vm1041, %v1071, %v1073
        %v1075 = vrot.slane %v430, 1
        %v1076 = vsel %vm1041, %v1073, %v1075
        %v1077 = vrot.slane %v431, 1
        %v1078 = vsel %vm1041, %v1075, %v1077
        %v1081 = vunpack.c.l.b16 %v1039
        %v1082 = vunpack.c.l.b16 %v1040
        %v1083 = vpack.c.b16 %v1082, %v1081
        %v1086 = vsel %vm587, %v1044, 0
        %v1089 = vsel %vm587, %v1046, 0
        %v1092 = vsel %vm587, %v1048, 0
        %v1095 = vsel %vm587, %v1050, 0
        %v1098 = vsel %vm587, %v1052, 0
        %v1101 = vsel %vm587, %v1054, 0
        %v1104 = vsel %vm587, %v1056, 0
        %v1107 = vsel %vm587, %v1058, 0
        %v1110 = vsel %vm587, %v1060, 0
        %v1113 = vsel %vm587, %v1062, 0
        %v1116 = vsel %vm587, %v1064, 0
        %v1119 = vsel %vm587, %v1066, 0
        %v1122 = vsel %vm587, %v1068, 0
        %v1125 = vsel %vm587, %v1070, 0
        %v1128 = vsel %vm587, %v1072, 0
        %v1131 = vsel %vm587, %v1074, 0
        %v1134 = vsel %vm587, %v1076, 0
        %v1137 = vsel %vm587, %v1078, 0
        %1139 = vmatprep.subr.bf16.mxu0 0
        %1140 = vmatpush1.bf16.msra.mxu0 0
        %1141 = vmatprep.subr.bf16.mxu0 0
        %1142 = vmatpush1.bf16.msra.mxu0 0
        %1143 = vmatprep.subr.bf16.mxu0 0
        %1144 = vmatpush1.bf16.msra.mxu0 0
        %1145 = vmatprep.subr.bf16.mxu0 0
        %1146 = vmatpush1.bf16.msra.mxu0 0
        %1147 = vmatprep.subr.bf16.mxu0 0
        %1148 = vmatpush1.bf16.msra.mxu0 0
        %1149 = vmatprep.subr.bf16.mxu0 0
        %1150 = vmatpush1.bf16.msra.mxu0 0
        %1151 = vmatprep.subr.bf16.mxu0 0
        %1152 = vmatpush1.bf16.msra.mxu0 0
        %1153 = vmatprep.subr.bf16.mxu0 0
        %1154 = vmatpush1.bf16.msra.mxu0 %v1083
        %1155 = vmatprep.subr.bf16.mxu0 0
        %1156 = vmatpush2.bf16.msra.mxu0 0
        %1157 = vmatprep.subr.bf16.mxu0 0
        %1158 = vmatpush2.bf16.msra.mxu0 0
        %1159 = vmatprep.subr.bf16.mxu0 0
        %1160 = vmatpush2.bf16.msra.mxu0 0
        %1161 = vmatprep.subr.bf16.mxu0 0
        %1162 = vmatpush2.bf16.msra.mxu0 0
        %1163 = vmatprep.subr.bf16.mxu0 0
        %1164 = vmatpush2.bf16.msra.mxu0 0
        %1165 = vmatprep.subr.bf16.mxu0 0
        %1166 = vmatpush2.bf16.msra.mxu0 0
        %1167 = vmatprep.subr.bf16.mxu0 0
        %1168 = vmatpush2.bf16.msra.mxu0 0
        %1169 = vmatprep.subr.bf16.mxu0 0
        %1170 = vmatpush2.bf16.msra.mxu0 0
        %1171 = vmatprep.mubr.bf16.mxu0 0
        %1172 = vmatmul.mubr.bf16.gmra.mxu0 %v1086
        %v1173 = vpop.f32.mrf.mxu0
        %v1174 = vadd.f32 0.0, %v1173
        %v1175 = vpop.f32.mrf.mxu0
        %v1176 = vpop.f32.mrf.mxu0
        %v1177 = vadd.f32 0.0, %v1176
        %v1178 = vpop.f32.mrf.mxu0
        %1179 = vmatprep.mubr.bf16.mxu0 0
        %1180 = vmatmul.mubr.bf16.gmra.mxu0 %v1089
        %v1181 = vpop.f32.mrf.mxu0
        %v1182 = vadd.f32 0.0, %v1181
        %v1183 = vpop.f32.mrf.mxu0
        %v1184 = vpop.f32.mrf.mxu0
        %v1185 = vadd.f32 0.0, %v1184
        %v1186 = vpop.f32.mrf.mxu0
        %1187 = vmatprep.mubr.bf16.mxu0 0
        %1188 = vmatmul.mubr.bf16.gmra.mxu0 %v1092
        %v1189 = vpop.f32.mrf.mxu0
        %v1190 = vadd.f32 0.0, %v1189
        %v1191 = vpop.f32.mrf.mxu0
        %v1192 = vpop.f32.mrf.mxu0
        %v1193 = vadd.f32 0.0, %v1192
        %v1194 = vpop.f32.mrf.mxu0
        %1195 = vmatprep.mubr.bf16.mxu0 0
        %1196 = vmatmul.mubr.bf16.gmra.mxu0 %v1095
        %v1197 = vpop.f32.mrf.mxu0
        %v1198 = vadd.f32 0.0, %v1197
        %v1199 = vpop.f32.mrf.mxu0
        %v1200 = vpop.f32.mrf.mxu0
        %v1201 = vadd.f32 0.0, %v1200
        %v1202 = vpop.f32.mrf.mxu0
        %1203 = vmatprep.mubr.bf16.mxu0 0
        %1204 = vmatmul.mubr.bf16.gmra.mxu0 %v1098
        %v1205 = vpop.f32.mrf.mxu0
        %v1206 = vadd.f32 0.0, %v1205
        %v1207 = vpop.f32.mrf.mxu0
        %v1208 = vpop.f32.mrf.mxu0
        %v1209 = vadd.f32 0.0, %v1208
        %v1210 = vpop.f32.mrf.mxu0
        %1211 = vmatprep.mubr.bf16.mxu0 0
        %1212 = vmatmul.mubr.bf16.gmra.mxu0 %v1101
        %v1213 = vpop.f32.mrf.mxu0
        %v1214 = vadd.f32 0.0, %v1213
        %v1215 = vpop.f32.mrf.mxu0
        %v1216 = vpop.f32.mrf.mxu0
        %v1217 = vadd.f32 0.0, %v1216
        %v1218 = vpop.f32.mrf.mxu0
        %1219 = vmatprep.mubr.bf16.mxu0 0
        %1220 = vmatmul.mubr.bf16.gmra.mxu0 %v1104
        %v1221 = vpop.f32.mrf.mxu0
        %v1222 = vadd.f32 0.0, %v1221
        %v1223 = vpop.f32.mrf.mxu0
        %v1224 = vpop.f32.mrf.mxu0
        %v1225 = vadd.f32 0.0, %v1224
        %v1226 = vpop.f32.mrf.mxu0
        %1227 = vmatprep.mubr.bf16.mxu0 0
        %1228 = vmatmul.mubr.bf16.gmra.mxu0 %v1107
        %v1229 = vpop.f32.mrf.mxu0
        %v1230 = vadd.f32 0.0, %v1229
        %v1231 = vpop.f32.mrf.mxu0
        %v1232 = vpop.f32.mrf.mxu0
        %v1233 = vadd.f32 0.0, %v1232
        %v1234 = vpop.f32.mrf.mxu0
        %1235 = vmatprep.mubr.bf16.mxu0 0
        %1236 = vmatmul.mubr.bf16.gmra.mxu0 %v1110
        %v1237 = vpop.f32.mrf.mxu0
        %v1238 = vadd.f32 0.0, %v1237
        %v1239 = vpop.f32.mrf.mxu0
        %v1240 = vpop.f32.mrf.mxu0
        %v1241 = vadd.f32 0.0, %v1240
        %v1242 = vpop.f32.mrf.mxu0
        %1243 = vmatprep.mubr.bf16.mxu0 0
        %1244 = vmatmul.mubr.bf16.gmra.mxu0 %v1113
        %v1245 = vpop.f32.mrf.mxu0
        %v1246 = vadd.f32 0.0, %v1245
        %v1247 = vpop.f32.mrf.mxu0
        %v1248 = vpop.f32.mrf.mxu0
        %v1249 = vadd.f32 0.0, %v1248
        %v1250 = vpop.f32.mrf.mxu0
        %1251 = vmatprep.mubr.bf16.mxu0 0
        %1252 = vmatmul.mubr.bf16.gmra.mxu0 %v1116
        %v1253 = vpop.f32.mrf.mxu0
        %v1254 = vadd.f32 0.0, %v1253
        %v1255 = vpop.f32.mrf.mxu0
        %v1256 = vpop.f32.mrf.mxu0
        %v1257 = vadd.f32 0.0, %v1256
        %v1258 = vpop.f32.mrf.mxu0
        %1259 = vmatprep.mubr.bf16.mxu0 0
        %1260 = vmatmul.mubr.bf16.gmra.mxu0 %v1119
        %v1261 = vpop.f32.mrf.mxu0
        %v1262 = vadd.f32 0.0, %v1261
        %v1263 = vpop.f32.mrf.mxu0
        %v1264 = vpop.f32.mrf.mxu0
        %v1265 = vadd.f32 0.0, %v1264
        %v1266 = vpop.f32.mrf.mxu0
        %1267 = vmatprep.mubr.bf16.mxu0 0
        %1268 = vmatmul.mubr.bf16.gmra.mxu0 %v1122
        %v1269 = vpop.f32.mrf.mxu0
        %v1270 = vadd.f32 0.0, %v1269
        %v1271 = vpop.f32.mrf.mxu0
        %v1272 = vpop.f32.mrf.mxu0
        %v1273 = vadd.f32 0.0, %v1272
        %v1274 = vpop.f32.mrf.mxu0
        %1275 = vmatprep.mubr.bf16.mxu0 0
        %1276 = vmatmul.mubr.bf16.gmra.mxu0 %v1125
        %v1277 = vpop.f32.mrf.mxu0
        %v1278 = vadd.f32 0.0, %v1277
        %v1279 = vpop.f32.mrf.mxu0
        %v1280 = vpop.f32.mrf.mxu0
        %v1281 = vadd.f32 0.0, %v1280
        %v1282 = vpop.f32.mrf.mxu0
        %1283 = vmatprep.mubr.bf16.mxu0 0
        %1284 = vmatmul.mubr.bf16.gmra.mxu0 %v1128
        %v1285 = vpop.f32.mrf.mxu0
        %v1286 = vadd.f32 0.0, %v1285
        %v1287 = vpop.f32.mrf.mxu0
        %v1288 = vpop.f32.mrf.mxu0
        %v1289 = vadd.f32 0.0, %v1288
        %v1290 = vpop.f32.mrf.mxu0
        %1291 = vmatprep.mubr.bf16.mxu0 0
        %1292 = vmatmul.mubr.bf16.gmra.mxu0 %v1131
        %v1293 = vpop.f32.mrf.mxu0
        %v1294 = vadd.f32 0.0, %v1293
        %v1295 = vpop.f32.mrf.mxu0
        %v1296 = vpop.f32.mrf.mxu0
        %v1297 = vadd.f32 0.0, %v1296
        %v1298 = vpop.f32.mrf.mxu0
        %1299 = vmatprep.mubr.bf16.mxu0 0
        %1300 = vmatmul.mubr.bf16.gmra.mxu0 %v1134
        %v1301 = vpop.f32.mrf.mxu0
        %v1302 = vadd.f32 0.0, %v1301
        %v1303 = vpop.f32.mrf.mxu0
        %v1304 = vpop.f32.mrf.mxu0
        %v1305 = vadd.f32 0.0, %v1304
        %v1306 = vpop.f32.mrf.mxu0
        %1307 = vmatprep.mubr.bf16.mxu0 0
        %1308 = vmatmul.mubr.bf16.gmra.mxu0 %v1137
        %v1309 = vpop.f32.mrf.mxu0
        %v1310 = vadd.f32 0.0, %v1309
        %v1311 = vpop.f32.mrf.mxu0
        %v1312 = vpop.f32.mrf.mxu0
        %v1313 = vadd.f32 0.0, %v1312
        %v1314 = vpop.f32.mrf.mxu0
        %1315 = vdwg.mxu0
        %v1316 = vadd.f32 %v896, %v1174
        %v1317 = vadd.f32 %v899, %v1177
        %v1318 = vadd.f32 %v904, %v1182
        %v1319 = vadd.f32 %v907, %v1185
        %v1320 = vadd.f32 %v912, %v1190
        %v1321 = vadd.f32 %v915, %v1193
        %v1322 = vadd.f32 %v920, %v1198
        %v1323 = vadd.f32 %v923, %v1201
        %v1324 = vadd.f32 %v928, %v1206
        %v1325 = vadd.f32 %v931, %v1209
        %v1326 = vadd.f32 %v936, %v1214
        %v1327 = vadd.f32 %v939, %v1217
        %v1328 = vadd.f32 %v944, %v1222
        %v1329 = vadd.f32 %v947, %v1225
        %v1330 = vadd.f32 %v952, %v1230
        %v1331 = vadd.f32 %v955, %v1233
        %v1332 = vadd.f32 %v960, %v1238
        %v1333 = vadd.f32 %v963, %v1241
        %v1334 = vadd.f32 %v968, %v1246
        %v1335 = vadd.f32 %v971, %v1249
        %v1336 = vadd.f32 %v976, %v1254
        %v1337 = vadd.f32 %v979, %v1257
        %v1338 = vadd.f32 %v984, %v1262
        %v1339 = vadd.f32 %v987, %v1265
        %v1340 = vadd.f32 %v992, %v1270
        %v1341 = vadd.f32 %v995, %v1273
        %v1342 = vadd.f32 %v1000, %v1278
        %v1343 = vadd.f32 %v1003, %v1281
        %v1344 = vadd.f32 %v1008, %v1286
        %v1345 = vadd.f32 %v1011, %v1289
        %v1346 = vadd.f32 %v1016, %v1294
        %v1347 = vadd.f32 %v1019, %v1297
        %v1348 = vadd.f32 %v1024, %v1302
        %v1349 = vadd.f32 %v1027, %v1305
        %v1350 = vadd.f32 %v1032, %v1310
        %v1351 = vadd.f32 %v1035, %v1313
        %s1352 = scalar_lea.vmem %s1, 24
        %v1353 = vld [vmem:[%s1352] sm:$0xf]
        %v1354 = vld [vmem:[%s1352 + $0x4] sm:$0xf]
        %v1357 = vunpack.c.l.b16 %v330
        %v1358 = vunpack.c.l.b16 %v331
        %v1359 = vpack.c.b16 %v1357, %v412
        %v1360 = vpack.c.b16 %v1358, %v1358
        %v1361 = vrot.slane %v1359, 1
        %v1362 = vsel %vm1041, %v1075, %v1361
        %v1363 = vrot.slane %v1360, 1
        %v1364 = vsel %vm1041, %v1361, %v1363
        %v1367 = vunpack.c.l.b16 %v1353
        %v1368 = vunpack.c.l.b16 %v1354
        %v1369 = vpack.c.b16 %v1368, %v1367
        %v1372 = vsel %vm587, %v1362, 0
        %v1375 = vsel %vm587, %v1364, 0
        %1377 = vmatprep.subr.bf16.mxu0 0
        %1378 = vmatpush1.bf16.msra.mxu0 0
        %1379 = vmatprep.subr.bf16.mxu0 0
        %1380 = vmatpush1.bf16.msra.mxu0 0
        %1381 = vmatprep.subr.bf16.mxu0 0
        %1382 = vmatpush1.bf16.msra.mxu0 0
        %1383 = vmatprep.subr.bf16.mxu0 0
        %1384 = vmatpush1.bf16.msra.mxu0 0
        %1385 = vmatprep.subr.bf16.mxu0 0
        %1386 = vmatpush1.bf16.msra.mxu0 0
        %1387 = vmatprep.subr.bf16.mxu0 0
        %1388 = vmatpush1.bf16.msra.mxu0 0
        %1389 = vmatprep.subr.bf16.mxu0 0
        %1390 = vmatpush1.bf16.msra.mxu0 0
        %1391 = vmatprep.subr.bf16.mxu0 0
        %1392 = vmatpush1.bf16.msra.mxu0 %v1369
        %1393 = vmatprep.subr.bf16.mxu0 0
        %1394 = vmatpush2.bf16.msra.mxu0 0
        %1395 = vmatprep.subr.bf16.mxu0 0
        %1396 = vmatpush2.bf16.msra.mxu0 0
        %1397 = vmatprep.subr.bf16.mxu0 0
        %1398 = vmatpush2.bf16.msra.mxu0 0
        %1399 = vmatprep.subr.bf16.mxu0 0
        %1400 = vmatpush2.bf16.msra.mxu0 0
        %1401 = vmatprep.subr.bf16.mxu0 0
        %1402 = vmatpush2.bf16.msra.mxu0 0
        %1403 = vmatprep.subr.bf16.mxu0 0
        %1404 = vmatpush2.bf16.msra.mxu0 0
        %1405 = vmatprep.subr.bf16.mxu0 0
        %1406 = vmatpush2.bf16.msra.mxu0 0
        %1407 = vmatprep.subr.bf16.mxu0 0
        %1408 = vmatpush2.bf16.msra.mxu0 0
        %1409 = vmatprep.mubr.bf16.mxu0 0
        %1410 = vmatmul.mubr.bf16.gmra.mxu0 %v1089
        %v1411 = vpop.f32.mrf.mxu0
        %v1412 = vadd.f32 0.0, %v1411
        %v1413 = vpop.f32.mrf.mxu0
        %v1414 = vpop.f32.mrf.mxu0
        %v1415 = vadd.f32 0.0, %v1414
        %v1416 = vpop.f32.mrf.mxu0
        %1417 = vmatprep.mubr.bf16.mxu0 0
        %1418 = vmatmul.mubr.bf16.gmra.mxu0 %v1092
        %v1419 = vpop.f32.mrf.mxu0
        %v1420 = vadd.f32 0.0, %v1419
        %v1421 = vpop.f32.mrf.mxu0
        %v1422 = vpop.f32.mrf.mxu0
        %v1423 = vadd.f32 0.0, %v1422
        %v1424 = vpop.f32.mrf.mxu0
        %1425 = vmatprep.mubr.bf16.mxu0 0
        %1426 = vmatmul.mubr.bf16.gmra.mxu0 %v1095
        %v1427 = vpop.f32.mrf.mxu0
        %v1428 = vadd.f32 0.0, %v1427
        %v1429 = vpop.f32.mrf.mxu0
        %v1430 = vpop.f32.mrf.mxu0
        %v1431 = vadd.f32 0.0, %v1430
        %v1432 = vpop.f32.mrf.mxu0
        %1433 = vmatprep.mubr.bf16.mxu0 0
        %1434 = vmatmul.mubr.bf16.gmra.mxu0 %v1098
        %v1435 = vpop.f32.mrf.mxu0
        %v1436 = vadd.f32 0.0, %v1435
        %v1437 = vpop.f32.mrf.mxu0
        %v1438 = vpop.f32.mrf.mxu0
        %v1439 = vadd.f32 0.0, %v1438
        %v1440 = vpop.f32.mrf.mxu0
        %1441 = vmatprep.mubr.bf16.mxu0 0
        %1442 = vmatmul.mubr.bf16.gmra.mxu0 %v1101
        %v1443 = vpop.f32.mrf.mxu0
        %v1444 = vadd.f32 0.0, %v1443
        %v1445 = vpop.f32.mrf.mxu0
        %v1446 = vpop.f32.mrf.mxu0
        %v1447 = vadd.f32 0.0, %v1446
        %v1448 = vpop.f32.mrf.mxu0
        %1449 = vmatprep.mubr.bf16.mxu0 0
        %1450 = vmatmul.mubr.bf16.gmra.mxu0 %v1104
        %v1451 = vpop.f32.mrf.mxu0
        %v1452 = vadd.f32 0.0, %v1451
        %v1453 = vpop.f32.mrf.mxu0
        %v1454 = vpop.f32.mrf.mxu0
        %v1455 = vadd.f32 0.0, %v1454
        %v1456 = vpop.f32.mrf.mxu0
        %1457 = vmatprep.mubr.bf16.mxu0 0
        %1458 = vmatmul.mubr.bf16.gmra.mxu0 %v1107
        %v1459 = vpop.f32.mrf.mxu0
        %v1460 = vadd.f32 0.0, %v1459
        %v1461 = vpop.f32.mrf.mxu0
        %v1462 = vpop.f32.mrf.mxu0
        %v1463 = vadd.f32 0.0, %v1462
        %v1464 = vpop.f32.mrf.mxu0
        %1465 = vmatprep.mubr.bf16.mxu0 0
        %1466 = vmatmul.mubr.bf16.gmra.mxu0 %v1110
        %v1467 = vpop.f32.mrf.mxu0
        %v1468 = vadd.f32 0.0, %v1467
        %v1469 = vpop.f32.mrf.mxu0
        %v1470 = vpop.f32.mrf.mxu0
        %v1471 = vadd.f32 0.0, %v1470
        %v1472 = vpop.f32.mrf.mxu0
        %1473 = vmatprep.mubr.bf16.mxu0 0
        %1474 = vmatmul.mubr.bf16.gmra.mxu0 %v1113
        %v1475 = vpop.f32.mrf.mxu0
        %v1476 = vadd.f32 0.0, %v1475
        %v1477 = vpop.f32.mrf.mxu0
        %v1478 = vpop.f32.mrf.mxu0
        %v1479 = vadd.f32 0.0, %v1478
        %v1480 = vpop.f32.mrf.mxu0
        %1481 = vmatprep.mubr.bf16.mxu0 0
        %1482 = vmatmul.mubr.bf16.gmra.mxu0 %v1116
        %v1483 = vpop.f32.mrf.mxu0
        %v1484 = vadd.f32 0.0, %v1483
        %v1485 = vpop.f32.mrf.mxu0
        %v1486 = vpop.f32.mrf.mxu0
        %v1487 = vadd.f32 0.0, %v1486
        %v1488 = vpop.f32.mrf.mxu0
        %1489 = vmatprep.mubr.bf16.mxu0 0
        %1490 = vmatmul.mubr.bf16.gmra.mxu0 %v1119
        %v1491 = vpop.f32.mrf.mxu0
        %v1492 = vadd.f32 0.0, %v1491
        %v1493 = vpop.f32.mrf.mxu0
        %v1494 = vpop.f32.mrf.mxu0
        %v1495 = vadd.f32 0.0, %v1494
        %v1496 = vpop.f32.mrf.mxu0
        %1497 = vmatprep.mubr.bf16.mxu0 0
        %1498 = vmatmul.mubr.bf16.gmra.mxu0 %v1122
        %v1499 = vpop.f32.mrf.mxu0
        %v1500 = vadd.f32 0.0, %v1499
        %v1501 = vpop.f32.mrf.mxu0
        %v1502 = vpop.f32.mrf.mxu0
        %v1503 = vadd.f32 0.0, %v1502
        %v1504 = vpop.f32.mrf.mxu0
        %1505 = vmatprep.mubr.bf16.mxu0 0
        %1506 = vmatmul.mubr.bf16.gmra.mxu0 %v1125
        %v1507 = vpop.f32.mrf.mxu0
        %v1508 = vadd.f32 0.0, %v1507
        %v1509 = vpop.f32.mrf.mxu0
        %v1510 = vpop.f32.mrf.mxu0
        %v1511 = vadd.f32 0.0, %v1510
        %v1512 = vpop.f32.mrf.mxu0
        %1513 = vmatprep.mubr.bf16.mxu0 0
        %1514 = vmatmul.mubr.bf16.gmra.mxu0 %v1128
        %v1515 = vpop.f32.mrf.mxu0
        %v1516 = vadd.f32 0.0, %v1515
        %v1517 = vpop.f32.mrf.mxu0
        %v1518 = vpop.f32.mrf.mxu0
        %v1519 = vadd.f32 0.0, %v1518
        %v1520 = vpop.f32.mrf.mxu0
        %1521 = vmatprep.mubr.bf16.mxu0 0
        %1522 = vmatmul.mubr.bf16.gmra.mxu0 %v1131
        %v1523 = vpop.f32.mrf.mxu0
        %v1524 = vadd.f32 0.0, %v1523
        %v1525 = vpop.f32.mrf.mxu0
        %v1526 = vpop.f32.mrf.mxu0
        %v1527 = vadd.f32 0.0, %v1526
        %v1528 = vpop.f32.mrf.mxu0
        %1529 = vmatprep.mubr.bf16.mxu0 0
        %1530 = vmatmul.mubr.bf16.gmra.mxu0 %v1134
        %v1531 = vpop.f32.mrf.mxu0
        %v1532 = vadd.f32 0.0, %v1531
        %v1533 = vpop.f32.mrf.mxu0
        %v1534 = vpop.f32.mrf.mxu0
        %v1535 = vadd.f32 0.0, %v1534
        %v1536 = vpop.f32.mrf.mxu0
        %1537 = vmatprep.mubr.bf16.mxu0 0
        %1538 = vmatmul.mubr.bf16.gmra.mxu0 %v1372
        %v1539 = vpop.f32.mrf.mxu0
        %v1540 = vadd.f32 0.0, %v1539
        %v1541 = vpop.f32.mrf.mxu0
        %v1542 = vpop.f32.mrf.mxu0
        %v1543 = vadd.f32 0.0, %v1542
        %v1544 = vpop.f32.mrf.mxu0
        %1545 = vmatprep.mubr.bf16.mxu0 0
        %1546 = vmatmul.mubr.bf16.gmra.mxu0 %v1375
        %v1547 = vpop.f32.mrf.mxu0
        %v1548 = vadd.f32 0.0, %v1547
        %v1549 = vpop.f32.mrf.mxu0
        %v1550 = vpop.f32.mrf.mxu0
        %v1551 = vadd.f32 0.0, %v1550
        %v1552 = vpop.f32.mrf.mxu0
        %1553 = vdwg.mxu0
        %v1554 = vadd.f32 %v1316, %v1412
        %v1555 = vadd.f32 %v1317, %v1415
        %v1556 = vadd.f32 %v1318, %v1420
        %v1557 = vadd.f32 %v1319, %v1423
        %v1558 = vadd.f32 %v1320, %v1428
        %v1559 = vadd.f32 %v1321, %v1431
        %v1560 = vadd.f32 %v1322, %v1436
        %v1561 = vadd.f32 %v1323, %v1439
        %v1562 = vadd.f32 %v1324, %v1444
        %v1563 = vadd.f32 %v1325, %v1447
        %v1564 = vadd.f32 %v1326, %v1452
        %v1565 = vadd.f32 %v1327, %v1455
        %v1566 = vadd.f32 %v1328, %v1460
        %v1567 = vadd.f32 %v1329, %v1463
        %v1568 = vadd.f32 %v1330, %v1468
        %v1569 = vadd.f32 %v1331, %v1471
        %v1570 = vadd.f32 %v1332, %v1476
        %v1571 = vadd.f32 %v1333, %v1479
        %v1572 = vadd.f32 %v1334, %v1484
        %v1573 = vadd.f32 %v1335, %v1487
        %v1574 = vadd.f32 %v1336, %v1492
        %v1575 = vadd.f32 %v1337, %v1495
        %v1576 = vadd.f32 %v1338, %v1500
        %v1577 = vadd.f32 %v1339, %v1503
        %v1578 = vadd.f32 %v1340, %v1508
        %v1579 = vadd.f32 %v1341, %v1511
        %v1580 = vadd.f32 %v1342, %v1516
        %v1581 = vadd.f32 %v1343, %v1519
        %v1582 = vadd.f32 %v1344, %v1524
        %v1583 = vadd.f32 %v1345, %v1527
        %v1584 = vadd.f32 %v1346, %v1532
        %v1585 = vadd.f32 %v1347, %v1535
        %v1586 = vadd.f32 %v1348, %v1540
        %v1587 = vadd.f32 %v1349, %v1543
        %v1588 = vadd.f32 %v1350, %v1548
        %v1589 = vadd.f32 %v1351, %v1551
        %s1590 = scalar_lea.vmem %s1, 32
        %v1591 = vld [vmem:[%s1590] sm:$0xf]
        %v1592 = vld [vmem:[%s1590 + $0x4] sm:$0xf]
        %vm1593 = vsmask.f32 6400
        %v1594 = vrot.slane %v445, 1
        %v1595 = vrot.slane %v441, 2
        %v1596 = vor.u32 %v1594, %v1595
        %v1597 = vrot.slane %v453, 1
        %v1598 = vrot.slane %v449, 2
        %v1599 = vor.u32 %v1597, %v1598
        %v1600 = vsel %vm1593, %v1596, %v1599
        %v1601 = vrot.slane %v461, 1
        %v1602 = vrot.slane %v457, 2
        %v1603 = vor.u32 %v1601, %v1602
        %v1604 = vsel %vm1593, %v1599, %v1603
        %v1605 = vrot.slane %v469, 1
        %v1606 = vrot.slane %v465, 2
        %v1607 = vor.u32 %v1605, %v1606
        %v1608 = vsel %vm1593, %v1603, %v1607
        %v1609 = vrot.slane %v477, 1
        %v1610 = vrot.slane %v473, 2
        %v1611 = vor.u32 %v1609, %v1610
        %v1612 = vsel %vm1593, %v1607, %v1611
        %v1613 = vrot.slane %v485, 1
        %v1614 = vrot.slane %v481, 2
        %v1615 = vor.u32 %v1613, %v1614
        %v1616 = vsel %vm1593, %v1611, %v1615
        %v1617 = vrot.slane %v493, 1
        %v1618 = vrot.slane %v489, 2
        %v1619 = vor.u32 %v1617, %v1618
        %v1620 = vsel %vm1593, %v1615, %v1619
        %v1621 = vrot.slane %v501, 1
        %v1622 = vrot.slane %v497, 2
        %v1623 = vor.u32 %v1621, %v1622
        %v1624 = vsel %vm1593, %v1619, %v1623
        %v1625 = vrot.slane %v509, 1
        %v1626 = vrot.slane %v505, 2
        %v1627 = vor.u32 %v1625, %v1626
        %v1628 = vsel %vm1593, %v1623, %v1627
        %v1629 = vrot.slane %v517, 1
        %v1630 = vrot.slane %v513, 2
        %v1631 = vor.u32 %v1629, %v1630
        %v1632 = vsel %vm1593, %v1627, %v1631
        %v1633 = vrot.slane %v525, 1
        %v1634 = vrot.slane %v521, 2
        %v1635 = vor.u32 %v1633, %v1634
        %v1636 = vsel %vm1593, %v1631, %v1635
        %v1637 = vrot.slane %v533, 1
        %v1638 = vrot.slane %v529, 2
        %v1639 = vor.u32 %v1637, %v1638
        %v1640 = vsel %vm1593, %v1635, %v1639
        %v1641 = vrot.slane %v541, 1
        %v1642 = vrot.slane %v537, 2
        %v1643 = vor.u32 %v1641, %v1642
        %v1644 = vsel %vm1593, %v1639, %v1643
        %v1645 = vrot.slane %v549, 1
        %v1646 = vrot.slane %v545, 2
        %v1647 = vor.u32 %v1645, %v1646
        %v1648 = vsel %vm1593, %v1643, %v1647
        %v1649 = vrot.slane %v557, 1
        %v1650 = vrot.slane %v553, 2
        %v1651 = vor.u32 %v1649, %v1650
        %v1652 = vsel %vm1593, %v1647, %v1651
        %v1653 = vrot.slane %v565, 1
        %v1654 = vrot.slane %v561, 2
        %v1655 = vor.u32 %v1653, %v1654
        %v1656 = vsel %vm1593, %v1651, %v1655
        %v1657 = vrot.slane %v573, 1
        %v1658 = vrot.slane %v569, 2
        %v1659 = vor.u32 %v1657, %v1658
        %v1660 = vsel %vm1593, %v1655, %v1659
        %v1662 = vshrl.u32 %v1359, 16
        %v1664 = vrot.slane %v1662, 1
        %v1665 = vshll.u32 %v1359, 16
        %v1667 = vrot.slane %v1665, 2
        %v1668 = vor.u32 %v1664, %v1667
        %v1669 = vsel %vm1593, %v1659, %v1668
        %v1671 = vshrl.u32 %v1360, 16
        %v1673 = vrot.slane %v1671, 1
        %v1674 = vshll.u32 %v1360, 16
        %v1676 = vrot.slane %v1674, 2
        %v1677 = vor.u32 %v1673, %v1676
        %v1678 = vsel %vm1593, %v1668, %v1677
        %v1681 = vunpack.c.l.b16 %v1591
        %v1682 = vunpack.c.l.b16 %v1592
        %v1683 = vpack.c.b16 %v1682, %v1681
        %v1686 = vsel %vm587, %v1600, 0
        %v1689 = vsel %vm587, %v1604, 0
        %v1692 = vsel %vm587, %v1608, 0
        %v1695 = vsel %vm587, %v1612, 0
        %v1698 = vsel %vm587, %v1616, 0
        %v1701 = vsel %vm587, %v1620, 0
        %v1704 = vsel %vm587, %v1624, 0
        %v1707 = vsel %vm587, %v1628, 0
        %v1710 = vsel %vm587, %v1632, 0
        %v1713 = vsel %vm587, %v1636, 0
        %v1716 = vsel %vm587, %v1640, 0
        %v1719 = vsel %vm587, %v1644, 0
        %v1722 = vsel %vm587, %v1648, 0
        %v1725 = vsel %vm587, %v1652, 0
        %v1728 = vsel %vm587, %v1656, 0
        %v1731 = vsel %vm587, %v1660, 0
        %v1734 = vsel %vm587, %v1669, 0
        %v1737 = vsel %vm587, %v1678, 0
        %1739 = vmatprep.subr.bf16.mxu0 0
        %1740 = vmatpush1.bf16.msra.mxu0 0
        %1741 = vmatprep.subr.bf16.mxu0 0
        %1742 = vmatpush1.bf16.msra.mxu0 0
        %1743 = vmatprep.subr.bf16.mxu0 0
        %1744 = vmatpush1.bf16.msra.mxu0 0
        %1745 = vmatprep.subr.bf16.mxu0 0
        %1746 = vmatpush1.bf16.msra.mxu0 0
        %1747 = vmatprep.subr.bf16.mxu0 0
        %1748 = vmatpush1.bf16.msra.mxu0 0
        %1749 = vmatprep.subr.bf16.mxu0 0
        %1750 = vmatpush1.bf16.msra.mxu0 0
        %1751 = vmatprep.subr.bf16.mxu0 0
        %1752 = vmatpush1.bf16.msra.mxu0 0
        %1753 = vmatprep.subr.bf16.mxu0 0
        %1754 = vmatpush1.bf16.msra.mxu0 %v1683
        %1755 = vmatprep.subr.bf16.mxu0 0
        %1756 = vmatpush2.bf16.msra.mxu0 0
        %1757 = vmatprep.subr.bf16.mxu0 0
        %1758 = vmatpush2.bf16.msra.mxu0 0
        %1759 = vmatprep.subr.bf16.mxu0 0
        %1760 = vmatpush2.bf16.msra.mxu0 0
        %1761 = vmatprep.subr.bf16.mxu0 0
        %1762 = vmatpush2.bf16.msra.mxu0 0
        %1763 = vmatprep.subr.bf16.mxu0 0
        %1764 = vmatpush2.bf16.msra.mxu0 0
        %1765 = vmatprep.subr.bf16.mxu0 0
        %1766 = vmatpush2.bf16.msra.mxu0 0
        %1767 = vmatprep.subr.bf16.mxu0 0
        %1768 = vmatpush2.bf16.msra.mxu0 0
        %1769 = vmatprep.subr.bf16.mxu0 0
        %1770 = vmatpush2.bf16.msra.mxu0 0
        %1771 = vmatprep.mubr.bf16.mxu0 0
        %1772 = vmatmul.mubr.bf16.gmra.mxu0 %v1686
        %v1773 = vpop.f32.mrf.mxu0
        %v1774 = vadd.f32 0.0, %v1773
        %v1775 = vpop.f32.mrf.mxu0
        %v1776 = vpop.f32.mrf.mxu0
        %v1777 = vadd.f32 0.0, %v1776
        %v1778 = vpop.f32.mrf.mxu0
        %1779 = vmatprep.mubr.bf16.mxu0 0
        %1780 = vmatmul.mubr.bf16.gmra.mxu0 %v1689
        %v1781 = vpop.f32.mrf.mxu0
        %v1782 = vadd.f32 0.0, %v1781
        %v1783 = vpop.f32.mrf.mxu0
        %v1784 = vpop.f32.mrf.mxu0
        %v1785 = vadd.f32 0.0, %v1784
        %v1786 = vpop.f32.mrf.mxu0
        %1787 = vmatprep.mubr.bf16.mxu0 0
        %1788 = vmatmul.mubr.bf16.gmra.mxu0 %v1692
        %v1789 = vpop.f32.mrf.mxu0
        %v1790 = vadd.f32 0.0, %v1789
        %v1791 = vpop.f32.mrf.mxu0
        %v1792 = vpop.f32.mrf.mxu0
        %v1793 = vadd.f32 0.0, %v1792
        %v1794 = vpop.f32.mrf.mxu0
        %1795 = vmatprep.mubr.bf16.mxu0 0
        %1796 = vmatmul.mubr.bf16.gmra.mxu0 %v1695
        %v1797 = vpop.f32.mrf.mxu0
        %v1798 = vadd.f32 0.0, %v1797
        %v1799 = vpop.f32.mrf.mxu0
        %v1800 = vpop.f32.mrf.mxu0
        %v1801 = vadd.f32 0.0, %v1800
        %v1802 = vpop.f32.mrf.mxu0
        %1803 = vmatprep.mubr.bf16.mxu0 0
        %1804 = vmatmul.mubr.bf16.gmra.mxu0 %v1698
        %v1805 = vpop.f32.mrf.mxu0
        %v1806 = vadd.f32 0.0, %v1805
        %v1807 = vpop.f32.mrf.mxu0
        %v1808 = vpop.f32.mrf.mxu0
        %v1809 = vadd.f32 0.0, %v1808
        %v1810 = vpop.f32.mrf.mxu0
        %1811 = vmatprep.mubr.bf16.mxu0 0
        %1812 = vmatmul.mubr.bf16.gmra.mxu0 %v1701
        %v1813 = vpop.f32.mrf.mxu0
        %v1814 = vadd.f32 0.0, %v1813
        %v1815 = vpop.f32.mrf.mxu0
        %v1816 = vpop.f32.mrf.mxu0
        %v1817 = vadd.f32 0.0, %v1816
        %v1818 = vpop.f32.mrf.mxu0
        %1819 = vmatprep.mubr.bf16.mxu0 0
        %1820 = vmatmul.mubr.bf16.gmra.mxu0 %v1704
        %v1821 = vpop.f32.mrf.mxu0
        %v1822 = vadd.f32 0.0, %v1821
        %v1823 = vpop.f32.mrf.mxu0
        %v1824 = vpop.f32.mrf.mxu0
        %v1825 = vadd.f32 0.0, %v1824
        %v1826 = vpop.f32.mrf.mxu0
        %1827 = vmatprep.mubr.bf16.mxu0 0
        %1828 = vmatmul.mubr.bf16.gmra.mxu0 %v1707
        %v1829 = vpop.f32.mrf.mxu0
        %v1830 = vadd.f32 0.0, %v1829
        %v1831 = vpop.f32.mrf.mxu0
        %v1832 = vpop.f32.mrf.mxu0
        %v1833 = vadd.f32 0.0, %v1832
        %v1834 = vpop.f32.mrf.mxu0
        %1835 = vmatprep.mubr.bf16.mxu0 0
        %1836 = vmatmul.mubr.bf16.gmra.mxu0 %v1710
        %v1837 = vpop.f32.mrf.mxu0
        %v1838 = vadd.f32 0.0, %v1837
        %v1839 = vpop.f32.mrf.mxu0
        %v1840 = vpop.f32.mrf.mxu0
        %v1841 = vadd.f32 0.0, %v1840
        %v1842 = vpop.f32.mrf.mxu0
        %1843 = vmatprep.mubr.bf16.mxu0 0
        %1844 = vmatmul.mubr.bf16.gmra.mxu0 %v1713
        %v1845 = vpop.f32.mrf.mxu0
        %v1846 = vadd.f32 0.0, %v1845
        %v1847 = vpop.f32.mrf.mxu0
        %v1848 = vpop.f32.mrf.mxu0
        %v1849 = vadd.f32 0.0, %v1848
        %v1850 = vpop.f32.mrf.mxu0
        %1851 = vmatprep.mubr.bf16.mxu0 0
        %1852 = vmatmul.mubr.bf16.gmra.mxu0 %v1716
        %v1853 = vpop.f32.mrf.mxu0
        %v1854 = vadd.f32 0.0, %v1853
        %v1855 = vpop.f32.mrf.mxu0
        %v1856 = vpop.f32.mrf.mxu0
        %v1857 = vadd.f32 0.0, %v1856
        %v1858 = vpop.f32.mrf.mxu0
        %1859 = vmatprep.mubr.bf16.mxu0 0
        %1860 = vmatmul.mubr.bf16.gmra.mxu0 %v1719
        %v1861 = vpop.f32.mrf.mxu0
        %v1862 = vadd.f32 0.0, %v1861
        %v1863 = vpop.f32.mrf.mxu0
        %v1864 = vpop.f32.mrf.mxu0
        %v1865 = vadd.f32 0.0, %v1864
        %v1866 = vpop.f32.mrf.mxu0
        %1867 = vmatprep.mubr.bf16.mxu0 0
        %1868 = vmatmul.mubr.bf16.gmra.mxu0 %v1722
        %v1869 = vpop.f32.mrf.mxu0
        %v1870 = vadd.f32 0.0, %v1869
        %v1871 = vpop.f32.mrf.mxu0
        %v1872 = vpop.f32.mrf.mxu0
        %v1873 = vadd.f32 0.0, %v1872
        %v1874 = vpop.f32.mrf.mxu0
        %1875 = vmatprep.mubr.bf16.mxu0 0
        %1876 = vmatmul.mubr.bf16.gmra.mxu0 %v1725
        %v1877 = vpop.f32.mrf.mxu0
        %v1878 = vadd.f32 0.0, %v1877
        %v1879 = vpop.f32.mrf.mxu0
        %v1880 = vpop.f32.mrf.mxu0
        %v1881 = vadd.f32 0.0, %v1880
        %v1882 = vpop.f32.mrf.mxu0
        %1883 = vmatprep.mubr.bf16.mxu0 0
        %1884 = vmatmul.mubr.bf16.gmra.mxu0 %v1728
        %v1885 = vpop.f32.mrf.mxu0
        %v1886 = vadd.f32 0.0, %v1885
        %v1887 = vpop.f32.mrf.mxu0
        %v1888 = vpop.f32.mrf.mxu0
        %v1889 = vadd.f32 0.0, %v1888
        %v1890 = vpop.f32.mrf.mxu0
        %1891 = vmatprep.mubr.bf16.mxu0 0
        %1892 = vmatmul.mubr.bf16.gmra.mxu0 %v1731
        %v1893 = vpop.f32.mrf.mxu0
        %v1894 = vadd.f32 0.0, %v1893
        %v1895 = vpop.f32.mrf.mxu0
        %v1896 = vpop.f32.mrf.mxu0
        %v1897 = vadd.f32 0.0, %v1896
        %v1898 = vpop.f32.mrf.mxu0
        %1899 = vmatprep.mubr.bf16.mxu0 0
        %1900 = vmatmul.mubr.bf16.gmra.mxu0 %v1734
        %v1901 = vpop.f32.mrf.mxu0
        %v1902 = vadd.f32 0.0, %v1901
        %v1903 = vpop.f32.mrf.mxu0
        %v1904 = vpop.f32.mrf.mxu0
        %v1905 = vadd.f32 0.0, %v1904
        %v1906 = vpop.f32.mrf.mxu0
        %1907 = vmatprep.mubr.bf16.mxu0 0
        %1908 = vmatmul.mubr.bf16.gmra.mxu0 %v1737
        %v1909 = vpop.f32.mrf.mxu0
        %v1910 = vadd.f32 0.0, %v1909
        %v1911 = vpop.f32.mrf.mxu0
        %v1912 = vpop.f32.mrf.mxu0
        %v1913 = vadd.f32 0.0, %v1912
        %v1914 = vpop.f32.mrf.mxu0
        %1915 = vdwg.mxu0
        %v1916 = vadd.f32 %v1554, %v1774
        %v1917 = vadd.f32 %v1555, %v1777
        %v1918 = vadd.f32 %v1556, %v1782
        %v1919 = vadd.f32 %v1557, %v1785
        %v1920 = vadd.f32 %v1558, %v1790
        %v1921 = vadd.f32 %v1559, %v1793
        %v1922 = vadd.f32 %v1560, %v1798
        %v1923 = vadd.f32 %v1561, %v1801
        %v1924 = vadd.f32 %v1562, %v1806
        %v1925 = vadd.f32 %v1563, %v1809
        %v1926 = vadd.f32 %v1564, %v1814
        %v1927 = vadd.f32 %v1565, %v1817
        %v1928 = vadd.f32 %v1566, %v1822
        %v1929 = vadd.f32 %v1567, %v1825
        %v1930 = vadd.f32 %v1568, %v1830
        %v1931 = vadd.f32 %v1569, %v1833
        %v1932 = vadd.f32 %v1570, %v1838
        %v1933 = vadd.f32 %v1571, %v1841
        %v1934 = vadd.f32 %v1572, %v1846
        %v1935 = vadd.f32 %v1573, %v1849
        %v1936 = vadd.f32 %v1574, %v1854
        %v1937 = vadd.f32 %v1575, %v1857
        %v1938 = vadd.f32 %v1576, %v1862
        %v1939 = vadd.f32 %v1577, %v1865
        %v1940 = vadd.f32 %v1578, %v1870
        %v1941 = vadd.f32 %v1579, %v1873
        %v1942 = vadd.f32 %v1580, %v1878
        %v1943 = vadd.f32 %v1581, %v1881
        %v1944 = vadd.f32 %v1582, %v1886
        %v1945 = vadd.f32 %v1583, %v1889
        %v1946 = vadd.f32 %v1584, %v1894
        %v1947 = vadd.f32 %v1585, %v1897
        %v1948 = vadd.f32 %v1586, %v1902
        %v1949 = vadd.f32 %v1587, %v1905
        %v1950 = vadd.f32 %v1588, %v1910
        %v1951 = vadd.f32 %v1589, %v1913
        %s1952 = scalar_lea.vmem %s1, 40
        %v1953 = vld [vmem:[%s1952] sm:$0xf]
        %v1954 = vld [vmem:[%s1952 + $0x4] sm:$0xf]
        %vm1955 = vcmask 1045504
        %v1956 = vrot.slane %v414, 2
        %v1957 = vrot.slane %v415, 2
        %v1958 = vsel %vm1955, %v1956, %v1957
        %v1959 = vrot.slane %v416, 2
        %v1960 = vsel %vm1955, %v1957, %v1959
        %v1961 = vrot.slane %v417, 2
        %v1962 = vsel %vm1955, %v1959, %v1961
        %v1963 = vrot.slane %v418, 2
        %v1964 = vsel %vm1955, %v1961, %v1963
        %v1965 = vrot.slane %v419, 2
        %v1966 = vsel %vm1955, %v1963, %v1965
        %v1967 = vrot.slane %v420, 2
        %v1968 = vsel %vm1955, %v1965, %v1967
        %v1969 = vrot.slane %v421, 2
        %v1970 = vsel %vm1955, %v1967, %v1969
        %v1971 = vrot.slane %v422, 2
        %v1972 = vsel %vm1955, %v1969, %v1971
        %v1973 = vrot.slane %v423, 2
        %v1974 = vsel %vm1955, %v1971, %v1973
        %v1975 = vrot.slane %v424, 2
        %v1976 = vsel %vm1955, %v1973, %v1975
        %v1977 = vrot.slane %v425, 2
        %v1978 = vsel %vm1955, %v1975, %v1977
        %v1979 = vrot.slane %v426, 2
        %v1980 = vsel %vm1955, %v1977, %v1979
        %v1981 = vrot.slane %v427, 2
        %v1982 = vsel %vm1955, %v1979, %v1981
        %v1983 = vrot.slane %v428, 2
        %v1984 = vsel %vm1955, %v1981, %v1983
        %v1985 = vrot.slane %v429, 2
        %v1986 = vsel %vm1955, %v1983, %v1985
        %v1987 = vrot.slane %v430, 2
        %v1988 = vsel %vm1955, %v1985, %v1987
        %v1989 = vrot.slane %v1359, 2
        %v1990 = vsel %vm1955, %v1987, %v1989
        %v1991 = vrot.slane %v1360, 2
        %v1992 = vsel %vm1955, %v1989, %v1991
        %v1995 = vunpack.c.l.b16 %v1953
        %v1996 = vunpack.c.l.b16 %v1954
        %v1997 = vpack.c.b16 %v1996, %v1995
        %v2000 = vsel %vm587, %v1958, 0
        %v2003 = vsel %vm587, %v1960, 0
        %v2006 = vsel %vm587, %v1962, 0
        %v2009 = vsel %vm587, %v1964, 0
        %v2012 = vsel %vm587, %v1966, 0
        %v2015 = vsel %vm587, %v1968, 0
        %v2018 = vsel %vm587, %v1970, 0
        %v2021 = vsel %vm587, %v1972, 0
        %v2024 = vsel %vm587, %v1974, 0
        %v2027 = vsel %vm587, %v1976, 0
        %v2030 = vsel %vm587, %v1978, 0
        %v2033 = vsel %vm587, %v1980, 0
        %v2036 = vsel %vm587, %v1982, 0
        %v2039 = vsel %vm587, %v1984, 0
        %v2042 = vsel %vm587, %v1986, 0
        %v2045 = vsel %vm587, %v1988, 0
        %v2048 = vsel %vm587, %v1990, 0
        %v2051 = vsel %vm587, %v1992, 0
        %2053 = vmatprep.subr.bf16.mxu0 0
        %2054 = vmatpush1.bf16.msra.mxu0 0
        %2055 = vmatprep.subr.bf16.mxu0 0
        %2056 = vmatpush1.bf16.msra.mxu0 0
        %2057 = vmatprep.subr.bf16.mxu0 0
        %2058 = vmatpush1.bf16.msra.mxu0 0
        %2059 = vmatprep.subr.bf16.mxu0 0
        %2060 = vmatpush1.bf16.msra.mxu0 0
        %2061 = vmatprep.subr.bf16.mxu0 0
        %2062 = vmatpush1.bf16.msra.mxu0 0
        %2063 = vmatprep.subr.bf16.mxu0 0
        %2064 = vmatpush1.bf16.msra.mxu0 0
        %2065 = vmatprep.subr.bf16.mxu0 0
        %2066 = vmatpush1.bf16.msra.mxu0 0
        %2067 = vmatprep.subr.bf16.mxu0 0
        %2068 = vmatpush1.bf16.msra.mxu0 %v1997
        %2069 = vmatprep.subr.bf16.mxu0 0
        %2070 = vmatpush2.bf16.msra.mxu0 0
        %2071 = vmatprep.subr.bf16.mxu0 0
        %2072 = vmatpush2.bf16.msra.mxu0 0
        %2073 = vmatprep.subr.bf16.mxu0 0
        %2074 = vmatpush2.bf16.msra.mxu0 0
        %2075 = vmatprep.subr.bf16.mxu0 0
        %2076 = vmatpush2.bf16.msra.mxu0 0
        %2077 = vmatprep.subr.bf16.mxu0 0
        %2078 = vmatpush2.bf16.msra.mxu0 0
        %2079 = vmatprep.subr.bf16.mxu0 0
        %2080 = vmatpush2.bf16.msra.mxu0 0
        %2081 = vmatprep.subr.bf16.mxu0 0
        %2082 = vmatpush2.bf16.msra.mxu0 0
        %2083 = vmatprep.subr.bf16.mxu0 0
        %2084 = vmatpush2.bf16.msra.mxu0 0
        %2085 = vmatprep.mubr.bf16.mxu0 0
        %2086 = vmatmul.mubr.bf16.gmra.mxu0 %v2000
        %v2087 = vpop.f32.mrf.mxu0
        %v2088 = vadd.f32 0.0, %v2087
        %v2089 = vpop.f32.mrf.mxu0
        %v2090 = vpop.f32.mrf.mxu0
        %v2091 = vadd.f32 0.0, %v2090
        %v2092 = vpop.f32.mrf.mxu0
        %2093 = vmatprep.mubr.bf16.mxu0 0
        %2094 = vmatmul.mubr.bf16.gmra.mxu0 %v2003
        %v2095 = vpop.f32.mrf.mxu0
        %v2096 = vadd.f32 0.0, %v2095
        %v2097 = vpop.f32.mrf.mxu0
        %v2098 = vpop.f32.mrf.mxu0
        %v2099 = vadd.f32 0.0, %v2098
        %v2100 = vpop.f32.mrf.mxu0
        %2101 = vmatprep.mubr.bf16.mxu0 0
        %2102 = vmatmul.mubr.bf16.gmra.mxu0 %v2006
        %v2103 = vpop.f32.mrf.mxu0
        %v2104 = vadd.f32 0.0, %v2103
        %v2105 = vpop.f32.mrf.mxu0
        %v2106 = vpop.f32.mrf.mxu0
        %v2107 = vadd.f32 0.0, %v2106
        %v2108 = vpop.f32.mrf.mxu0
        %2109 = vmatprep.mubr.bf16.mxu0 0
        %2110 = vmatmul.mubr.bf16.gmra.mxu0 %v2009
        %v2111 = vpop.f32.mrf.mxu0
        %v2112 = vadd.f32 0.0, %v2111
        %v2113 = vpop.f32.mrf.mxu0
        %v2114 = vpop.f32.mrf.mxu0
        %v2115 = vadd.f32 0.0, %v2114
        %v2116 = vpop.f32.mrf.mxu0
        %2117 = vmatprep.mubr.bf16.mxu0 0
        %2118 = vmatmul.mubr.bf16.gmra.mxu0 %v2012
        %v2119 = vpop.f32.mrf.mxu0
        %v2120 = vadd.f32 0.0, %v2119
        %v2121 = vpop.f32.mrf.mxu0
        %v2122 = vpop.f32.mrf.mxu0
        %v2123 = vadd.f32 0.0, %v2122
        %v2124 = vpop.f32.mrf.mxu0
        %2125 = vmatprep.mubr.bf16.mxu0 0
        %2126 = vmatmul.mubr.bf16.gmra.mxu0 %v2015
        %v2127 = vpop.f32.mrf.mxu0
        %v2128 = vadd.f32 0.0, %v2127
        %v2129 = vpop.f32.mrf.mxu0
        %v2130 = vpop.f32.mrf.mxu0
        %v2131 = vadd.f32 0.0, %v2130
        %v2132 = vpop.f32.mrf.mxu0
        %2133 = vmatprep.mubr.bf16.mxu0 0
        %2134 = vmatmul.mubr.bf16.gmra.mxu0 %v2018
        %v2135 = vpop.f32.mrf.mxu0
        %v2136 = vadd.f32 0.0, %v2135
        %v2137 = vpop.f32.mrf.mxu0
        %v2138 = vpop.f32.mrf.mxu0
        %v2139 = vadd.f32 0.0, %v2138
        %v2140 = vpop.f32.mrf.mxu0
        %2141 = vmatprep.mubr.bf16.mxu0 0
        %2142 = vmatmul.mubr.bf16.gmra.mxu0 %v2021
        %v2143 = vpop.f32.mrf.mxu0
        %v2144 = vadd.f32 0.0, %v2143
        %v2145 = vpop.f32.mrf.mxu0
        %v2146 = vpop.f32.mrf.mxu0
        %v2147 = vadd.f32 0.0, %v2146
        %v2148 = vpop.f32.mrf.mxu0
        %2149 = vmatprep.mubr.bf16.mxu0 0
        %2150 = vmatmul.mubr.bf16.gmra.mxu0 %v2024
        %v2151 = vpop.f32.mrf.mxu0
        %v2152 = vadd.f32 0.0, %v2151
        %v2153 = vpop.f32.mrf.mxu0
        %v2154 = vpop.f32.mrf.mxu0
        %v2155 = vadd.f32 0.0, %v2154
        %v2156 = vpop.f32.mrf.mxu0
        %2157 = vmatprep.mubr.bf16.mxu0 0
        %2158 = vmatmul.mubr.bf16.gmra.mxu0 %v2027
        %v2159 = vpop.f32.mrf.mxu0
        %v2160 = vadd.f32 0.0, %v2159
        %v2161 = vpop.f32.mrf.mxu0
        %v2162 = vpop.f32.mrf.mxu0
        %v2163 = vadd.f32 0.0, %v2162
        %v2164 = vpop.f32.mrf.mxu0
        %2165 = vmatprep.mubr.bf16.mxu0 0
        %2166 = vmatmul.mubr.bf16.gmra.mxu0 %v2030
        %v2167 = vpop.f32.mrf.mxu0
        %v2168 = vadd.f32 0.0, %v2167
        %v2169 = vpop.f32.mrf.mxu0
        %v2170 = vpop.f32.mrf.mxu0
        %v2171 = vadd.f32 0.0, %v2170
        %v2172 = vpop.f32.mrf.mxu0
        %2173 = vmatprep.mubr.bf16.mxu0 0
        %2174 = vmatmul.mubr.bf16.gmra.mxu0 %v2033
        %v2175 = vpop.f32.mrf.mxu0
        %v2176 = vadd.f32 0.0, %v2175
        %v2177 = vpop.f32.mrf.mxu0
        %v2178 = vpop.f32.mrf.mxu0
        %v2179 = vadd.f32 0.0, %v2178
        %v2180 = vpop.f32.mrf.mxu0
        %2181 = vmatprep.mubr.bf16.mxu0 0
        %2182 = vmatmul.mubr.bf16.gmra.mxu0 %v2036
        %v2183 = vpop.f32.mrf.mxu0
        %v2184 = vadd.f32 0.0, %v2183
        %v2185 = vpop.f32.mrf.mxu0
        %v2186 = vpop.f32.mrf.mxu0
        %v2187 = vadd.f32 0.0, %v2186
        %v2188 = vpop.f32.mrf.mxu0
        %2189 = vmatprep.mubr.bf16.mxu0 0
        %2190 = vmatmul.mubr.bf16.gmra.mxu0 %v2039
        %v2191 = vpop.f32.mrf.mxu0
        %v2192 = vadd.f32 0.0, %v2191
        %v2193 = vpop.f32.mrf.mxu0
        %v2194 = vpop.f32.mrf.mxu0
        %v2195 = vadd.f32 0.0, %v2194
        %v2196 = vpop.f32.mrf.mxu0
        %2197 = vmatprep.mubr.bf16.mxu0 0
        %2198 = vmatmul.mubr.bf16.gmra.mxu0 %v2042
        %v2199 = vpop.f32.mrf.mxu0
        %v2200 = vadd.f32 0.0, %v2199
        %v2201 = vpop.f32.mrf.mxu0
        %v2202 = vpop.f32.mrf.mxu0
        %v2203 = vadd.f32 0.0, %v2202
        %v2204 = vpop.f32.mrf.mxu0
        %2205 = vmatprep.mubr.bf16.mxu0 0
        %2206 = vmatmul.mubr.bf16.gmra.mxu0 %v2045
        %v2207 = vpop.f32.mrf.mxu0
        %v2208 = vadd.f32 0.0, %v2207
        %v2209 = vpop.f32.mrf.mxu0
        %v2210 = vpop.f32.mrf.mxu0
        %v2211 = vadd.f32 0.0, %v2210
        %v2212 = vpop.f32.mrf.mxu0
        %2213 = vmatprep.mubr.bf16.mxu0 0
        %2214 = vmatmul.mubr.bf16.gmra.mxu0 %v2048
        %v2215 = vpop.f32.mrf.mxu0
        %v2216 = vadd.f32 0.0, %v2215
        %v2217 = vpop.f32.mrf.mxu0
        %v2218 = vpop.f32.mrf.mxu0
        %v2219 = vadd.f32 0.0, %v2218
        %v2220 = vpop.f32.mrf.mxu0
        %2221 = vmatprep.mubr.bf16.mxu0 0
        %2222 = vmatmul.mubr.bf16.gmra.mxu0 %v2051
        %v2223 = vpop.f32.mrf.mxu0
        %v2224 = vadd.f32 0.0, %v2223
        %v2225 = vpop.f32.mrf.mxu0
        %v2226 = vpop.f32.mrf.mxu0
        %v2227 = vadd.f32 0.0, %v2226
        %v2228 = vpop.f32.mrf.mxu0
        %2229 = vdwg.mxu0
        %v2230 = vadd.f32 %v1916, %v2088
        %v2231 = vadd.f32 %v1917, %v2091
        %v2232 = vadd.f32 %v1918, %v2096
        %v2233 = vadd.f32 %v1919, %v2099
        %v2234 = vadd.f32 %v1920, %v2104
        %v2235 = vadd.f32 %v1921, %v2107
        %v2236 = vadd.f32 %v1922, %v2112
        %v2237 = vadd.f32 %v1923, %v2115
        %v2238 = vadd.f32 %v1924, %v2120
        %v2239 = vadd.f32 %v1925, %v2123
        %v2240 = vadd.f32 %v1926, %v2128
        %v2241 = vadd.f32 %v1927, %v2131
        %v2242 = vadd.f32 %v1928, %v2136
        %v2243 = vadd.f32 %v1929, %v2139
        %v2244 = vadd.f32 %v1930, %v2144
        %v2245 = vadd.f32 %v1931, %v2147
        %v2246 = vadd.f32 %v1932, %v2152
        %v2247 = vadd.f32 %v1933, %v2155
        %v2248 = vadd.f32 %v1934, %v2160
        %v2249 = vadd.f32 %v1935, %v2163
        %v2250 = vadd.f32 %v1936, %v2168
        %v2251 = vadd.f32 %v1937, %v2171
        %v2252 = vadd.f32 %v1938, %v2176
        %v2253 = vadd.f32 %v1939, %v2179
        %v2254 = vadd.f32 %v1940, %v2184
        %v2255 = vadd.f32 %v1941, %v2187
        %v2256 = vadd.f32 %v1942, %v2192
        %v2257 = vadd.f32 %v1943, %v2195
        %v2258 = vadd.f32 %v1944, %v2200
        %v2259 = vadd.f32 %v1945, %v2203
        %v2260 = vadd.f32 %v1946, %v2208
        %v2261 = vadd.f32 %v1947, %v2211
        %v2262 = vadd.f32 %v1948, %v2216
        %v2263 = vadd.f32 %v1949, %v2219
        %v2264 = vadd.f32 %v1950, %v2224
        %v2265 = vadd.f32 %v1951, %v2227
        %s2266 = scalar_lea.vmem %s1, 48
        %v2267 = vld [vmem:[%s2266] sm:$0xf]
        %v2268 = vld [vmem:[%s2266 + $0x4] sm:$0xf]
        %v2271 = vunpack.c.l.b16 %v332
        %v2272 = vunpack.c.l.b16 %v333
        %v2273 = vpack.c.b16 %v2271, %v1358
        %v2274 = vpack.c.b16 %v2272, %v2272
        %v2275 = vrot.slane %v2273, 2
        %v2276 = vsel %vm1955, %v1989, %v2275
        %v2277 = vrot.slane %v2274, 2
        %v2278 = vsel %vm1955, %v2275, %v2277
        %v2281 = vunpack.c.l.b16 %v2267
        %v2282 = vunpack.c.l.b16 %v2268
        %v2283 = vpack.c.b16 %v2282, %v2281
        %v2286 = vsel %vm587, %v2276, 0
        %v2289 = vsel %vm587, %v2278, 0
        %2291 = vmatprep.subr.bf16.mxu0 0
        %2292 = vmatpush1.bf16.msra.mxu0 0
        %2293 = vmatprep.subr.bf16.mxu0 0
        %2294 = vmatpush1.bf16.msra.mxu0 0
        %2295 = vmatprep.subr.bf16.mxu0 0
        %2296 = vmatpush1.bf16.msra.mxu0 0
        %2297 = vmatprep.subr.bf16.mxu0 0
        %2298 = vmatpush1.bf16.msra.mxu0 0
        %2299 = vmatprep.subr.bf16.mxu0 0
        %2300 = vmatpush1.bf16.msra.mxu0 0
        %2301 = vmatprep.subr.bf16.mxu0 0
        %2302 = vmatpush1.bf16.msra.mxu0 0
        %2303 = vmatprep.subr.bf16.mxu0 0
        %2304 = vmatpush1.bf16.msra.mxu0 0
        %2305 = vmatprep.subr.bf16.mxu0 0
        %2306 = vmatpush1.bf16.msra.mxu0 %v2283
        %2307 = vmatprep.subr.bf16.mxu0 0
        %2308 = vmatpush2.bf16.msra.mxu0 0
        %2309 = vmatprep.subr.bf16.mxu0 0
        %2310 = vmatpush2.bf16.msra.mxu0 0
        %2311 = vmatprep.subr.bf16.mxu0 0
        %2312 = vmatpush2.bf16.msra.mxu0 0
        %2313 = vmatprep.subr.bf16.mxu0 0
        %2314 = vmatpush2.bf16.msra.mxu0 0
        %2315 = vmatprep.subr.bf16.mxu0 0
        %2316 = vmatpush2.bf16.msra.mxu0 0
        %2317 = vmatprep.subr.bf16.mxu0 0
        %2318 = vmatpush2.bf16.msra.mxu0 0
        %2319 = vmatprep.subr.bf16.mxu0 0
        %2320 = vmatpush2.bf16.msra.mxu0 0
        %2321 = vmatprep.subr.bf16.mxu0 0
        %2322 = vmatpush2.bf16.msra.mxu0 0
        %2323 = vmatprep.mubr.bf16.mxu0 0
        %2324 = vmatmul.mubr.bf16.gmra.mxu0 %v2003
        %v2325 = vpop.f32.mrf.mxu0
        %v2326 = vadd.f32 0.0, %v2325
        %v2327 = vpop.f32.mrf.mxu0
        %v2328 = vpop.f32.mrf.mxu0
        %v2329 = vadd.f32 0.0, %v2328
        %v2330 = vpop.f32.mrf.mxu0
        %2331 = vmatprep.mubr.bf16.mxu0 0
        %2332 = vmatmul.mubr.bf16.gmra.mxu0 %v2006
        %v2333 = vpop.f32.mrf.mxu0
        %v2334 = vadd.f32 0.0, %v2333
        %v2335 = vpop.f32.mrf.mxu0
        %v2336 = vpop.f32.mrf.mxu0
        %v2337 = vadd.f32 0.0, %v2336
        %v2338 = vpop.f32.mrf.mxu0
        %2339 = vmatprep.mubr.bf16.mxu0 0
        %2340 = vmatmul.mubr.bf16.gmra.mxu0 %v2009
        %v2341 = vpop.f32.mrf.mxu0
        %v2342 = vadd.f32 0.0, %v2341
        %v2343 = vpop.f32.mrf.mxu0
        %v2344 = vpop.f32.mrf.mxu0
        %v2345 = vadd.f32 0.0, %v2344
        %v2346 = vpop.f32.mrf.mxu0
        %2347 = vmatprep.mubr.bf16.mxu0 0
        %2348 = vmatmul.mubr.bf16.gmra.mxu0 %v2012
        %v2349 = vpop.f32.mrf.mxu0
        %v2350 = vadd.f32 0.0, %v2349
        %v2351 = vpop.f32.mrf.mxu0
        %v2352 = vpop.f32.mrf.mxu0
        %v2353 = vadd.f32 0.0, %v2352
        %v2354 = vpop.f32.mrf.mxu0
        %2355 = vmatprep.mubr.bf16.mxu0 0
        %2356 = vmatmul.mubr.bf16.gmra.mxu0 %v2015
        %v2357 = vpop.f32.mrf.mxu0
        %v2358 = vadd.f32 0.0, %v2357
        %v2359 = vpop.f32.mrf.mxu0
        %v2360 = vpop.f32.mrf.mxu0
        %v2361 = vadd.f32 0.0, %v2360
        %v2362 = vpop.f32.mrf.mxu0
        %2363 = vmatprep.mubr.bf16.mxu0 0
        %2364 = vmatmul.mubr.bf16.gmra.mxu0 %v2018
        %v2365 = vpop.f32.mrf.mxu0
        %v2366 = vadd.f32 0.0, %v2365
        %v2367 = vpop.f32.mrf.mxu0
        %v2368 = vpop.f32.mrf.mxu0
        %v2369 = vadd.f32 0.0, %v2368
        %v2370 = vpop.f32.mrf.mxu0
        %2371 = vmatprep.mubr.bf16.mxu0 0
        %2372 = vmatmul.mubr.bf16.gmra.mxu0 %v2021
        %v2373 = vpop.f32.mrf.mxu0
        %v2374 = vadd.f32 0.0, %v2373
        %v2375 = vpop.f32.mrf.mxu0
        %v2376 = vpop.f32.mrf.mxu0
        %v2377 = vadd.f32 0.0, %v2376
        %v2378 = vpop.f32.mrf.mxu0
        %2379 = vmatprep.mubr.bf16.mxu0 0
        %2380 = vmatmul.mubr.bf16.gmra.mxu0 %v2024
        %v2381 = vpop.f32.mrf.mxu0
        %v2382 = vadd.f32 0.0, %v2381
        %v2383 = vpop.f32.mrf.mxu0
        %v2384 = vpop.f32.mrf.mxu0
        %v2385 = vadd.f32 0.0, %v2384
        %v2386 = vpop.f32.mrf.mxu0
        %2387 = vmatprep.mubr.bf16.mxu0 0
        %2388 = vmatmul.mubr.bf16.gmra.mxu0 %v2027
        %v2389 = vpop.f32.mrf.mxu0
        %v2390 = vadd.f32 0.0, %v2389
        %v2391 = vpop.f32.mrf.mxu0
        %v2392 = vpop.f32.mrf.mxu0
        %v2393 = vadd.f32 0.0, %v2392
        %v2394 = vpop.f32.mrf.mxu0
        %2395 = vmatprep.mubr.bf16.mxu0 0
        %2396 = vmatmul.mubr.bf16.gmra.mxu0 %v2030
        %v2397 = vpop.f32.mrf.mxu0
        %v2398 = vadd.f32 0.0, %v2397
        %v2399 = vpop.f32.mrf.mxu0
        %v2400 = vpop.f32.mrf.mxu0
        %v2401 = vadd.f32 0.0, %v2400
        %v2402 = vpop.f32.mrf.mxu0
        %2403 = vmatprep.mubr.bf16.mxu0 0
        %2404 = vmatmul.mubr.bf16.gmra.mxu0 %v2033
        %v2405 = vpop.f32.mrf.mxu0
        %v2406 = vadd.f32 0.0, %v2405
        %v2407 = vpop.f32.mrf.mxu0
        %v2408 = vpop.f32.mrf.mxu0
        %v2409 = vadd.f32 0.0, %v2408
        %v2410 = vpop.f32.mrf.mxu0
        %2411 = vmatprep.mubr.bf16.mxu0 0
        %2412 = vmatmul.mubr.bf16.gmra.mxu0 %v2036
        %v2413 = vpop.f32.mrf.mxu0
        %v2414 = vadd.f32 0.0, %v2413
        %v2415 = vpop.f32.mrf.mxu0
        %v2416 = vpop.f32.mrf.mxu0
        %v2417 = vadd.f32 0.0, %v2416
        %v2418 = vpop.f32.mrf.mxu0
        %2419 = vmatprep.mubr.bf16.mxu0 0
        %2420 = vmatmul.mubr.bf16.gmra.mxu0 %v2039
        %v2421 = vpop.f32.mrf.mxu0
        %v2422 = vadd.f32 0.0, %v2421
        %v2423 = vpop.f32.mrf.mxu0
        %v2424 = vpop.f32.mrf.mxu0
        %v2425 = vadd.f32 0.0, %v2424
        %v2426 = vpop.f32.mrf.mxu0
        %2427 = vmatprep.mubr.bf16.mxu0 0
        %2428 = vmatmul.mubr.bf16.gmra.mxu0 %v2042
        %v2429 = vpop.f32.mrf.mxu0
        %v2430 = vadd.f32 0.0, %v2429
        %v2431 = vpop.f32.mrf.mxu0
        %v2432 = vpop.f32.mrf.mxu0
        %v2433 = vadd.f32 0.0, %v2432
        %v2434 = vpop.f32.mrf.mxu0
        %2435 = vmatprep.mubr.bf16.mxu0 0
        %2436 = vmatmul.mubr.bf16.gmra.mxu0 %v2045
        %v2437 = vpop.f32.mrf.mxu0
        %v2438 = vadd.f32 0.0, %v2437
        %v2439 = vpop.f32.mrf.mxu0
        %v2440 = vpop.f32.mrf.mxu0
        %v2441 = vadd.f32 0.0, %v2440
        %v2442 = vpop.f32.mrf.mxu0
        %2443 = vmatprep.mubr.bf16.mxu0 0
        %2444 = vmatmul.mubr.bf16.gmra.mxu0 %v2048
        %v2445 = vpop.f32.mrf.mxu0
        %v2446 = vadd.f32 0.0, %v2445
        %v2447 = vpop.f32.mrf.mxu0
        %v2448 = vpop.f32.mrf.mxu0
        %v2449 = vadd.f32 0.0, %v2448
        %v2450 = vpop.f32.mrf.mxu0
        %2451 = vmatprep.mubr.bf16.mxu0 0
        %2452 = vmatmul.mubr.bf16.gmra.mxu0 %v2286
        %v2453 = vpop.f32.mrf.mxu0
        %v2454 = vadd.f32 0.0, %v2453
        %v2455 = vpop.f32.mrf.mxu0
        %v2456 = vpop.f32.mrf.mxu0
        %v2457 = vadd.f32 0.0, %v2456
        %v2458 = vpop.f32.mrf.mxu0
        %2459 = vmatprep.mubr.bf16.mxu0 0
        %2460 = vmatmul.mubr.bf16.gmra.mxu0 %v2289
        %v2461 = vpop.f32.mrf.mxu0
        %v2462 = vadd.f32 0.0, %v2461
        %v2463 = vpop.f32.mrf.mxu0
        %v2464 = vpop.f32.mrf.mxu0
        %v2465 = vadd.f32 0.0, %v2464
        %v2466 = vpop.f32.mrf.mxu0
        %2467 = vdwg.mxu0
        %v2468 = vadd.f32 %v2230, %v2326
        %v2469 = vadd.f32 %v2231, %v2329
        %v2470 = vadd.f32 %v2232, %v2334
        %v2471 = vadd.f32 %v2233, %v2337
        %v2472 = vadd.f32 %v2234, %v2342
        %v2473 = vadd.f32 %v2235, %v2345
        %v2474 = vadd.f32 %v2236, %v2350
        %v2475 = vadd.f32 %v2237, %v2353
        %v2476 = vadd.f32 %v2238, %v2358
        %v2477 = vadd.f32 %v2239, %v2361
        %v2478 = vadd.f32 %v2240, %v2366
        %v2479 = vadd.f32 %v2241, %v2369
        %v2480 = vadd.f32 %v2242, %v2374
        %v2481 = vadd.f32 %v2243, %v2377
        %v2482 = vadd.f32 %v2244, %v2382
        %v2483 = vadd.f32 %v2245, %v2385
        %v2484 = vadd.f32 %v2246, %v2390
        %v2485 = vadd.f32 %v2247, %v2393
        %v2486 = vadd.f32 %v2248, %v2398
        %v2487 = vadd.f32 %v2249, %v2401
        %v2488 = vadd.f32 %v2250, %v2406
        %v2489 = vadd.f32 %v2251, %v2409
        %v2490 = vadd.f32 %v2252, %v2414
        %v2491 = vadd.f32 %v2253, %v2417
        %v2492 = vadd.f32 %v2254, %v2422
        %v2493 = vadd.f32 %v2255, %v2425
        %v2494 = vadd.f32 %v2256, %v2430
        %v2495 = vadd.f32 %v2257, %v2433
        %v2496 = vadd.f32 %v2258, %v2438
        %v2497 = vadd.f32 %v2259, %v2441
        %v2498 = vadd.f32 %v2260, %v2446
        %v2499 = vadd.f32 %v2261, %v2449
        %v2500 = vadd.f32 %v2262, %v2454
        %v2501 = vadd.f32 %v2263, %v2457
        %v2502 = vadd.f32 %v2264, %v2462
        %v2503 = vadd.f32 %v2265, %v2465
        %s2504 = scalar_lea.vmem %s1, 56
        %v2505 = vld [vmem:[%s2504] sm:$0xf]
        %v2506 = vld [vmem:[%s2504 + $0x4] sm:$0xf]
        %vm2507 = vsmask.f32 5376
        %v2508 = vrot.slane %v453, 2
        %v2509 = vrot.slane %v449, 3
        %v2510 = vor.u32 %v2508, %v2509
        %v2511 = vrot.slane %v461, 2
        %v2512 = vrot.slane %v457, 3
        %v2513 = vor.u32 %v2511, %v2512
        %v2514 = vsel %vm2507, %v2510, %v2513
        %v2515 = vrot.slane %v469, 2
        %v2516 = vrot.slane %v465, 3
        %v2517 = vor.u32 %v2515, %v2516
        %v2518 = vsel %vm2507, %v2513, %v2517
        %v2519 = vrot.slane %v477, 2
        %v2520 = vrot.slane %v473, 3
        %v2521 = vor.u32 %v2519, %v2520
        %v2522 = vsel %vm2507, %v2517, %v2521
        %v2523 = vrot.slane %v485, 2
        %v2524 = vrot.slane %v481, 3
        %v2525 = vor.u32 %v2523, %v2524
        %v2526 = vsel %vm2507, %v2521, %v2525
        %v2527 = vrot.slane %v493, 2
        %v2528 = vrot.slane %v489, 3
        %v2529 = vor.u32 %v2527, %v2528
        %v2530 = vsel %vm2507, %v2525, %v2529
        %v2531 = vrot.slane %v501, 2
        %v2532 = vrot.slane %v497, 3
        %v2533 = vor.u32 %v2531, %v2532
        %v2534 = vsel %vm2507, %v2529, %v2533
        %v2535 = vrot.slane %v509, 2
        %v2536 = vrot.slane %v505, 3
        %v2537 = vor.u32 %v2535, %v2536
        %v2538 = vsel %vm2507, %v2533, %v2537
        %v2539 = vrot.slane %v517, 2
        %v2540 = vrot.slane %v513, 3
        %v2541 = vor.u32 %v2539, %v2540
        %v2542 = vsel %vm2507, %v2537, %v2541
        %v2543 = vrot.slane %v525, 2
        %v2544 = vrot.slane %v521, 3
        %v2545 = vor.u32 %v2543, %v2544
        %v2546 = vsel %vm2507, %v2541, %v2545
        %v2547 = vrot.slane %v533, 2
        %v2548 = vrot.slane %v529, 3
        %v2549 = vor.u32 %v2547, %v2548
        %v2550 = vsel %vm2507, %v2545, %v2549
        %v2551 = vrot.slane %v541, 2
        %v2552 = vrot.slane %v537, 3
        %v2553 = vor.u32 %v2551, %v2552
        %v2554 = vsel %vm2507, %v2549, %v2553
        %v2555 = vrot.slane %v549, 2
        %v2556 = vrot.slane %v545, 3
        %v2557 = vor.u32 %v2555, %v2556
        %v2558 = vsel %vm2507, %v2553, %v2557
        %v2559 = vrot.slane %v557, 2
        %v2560 = vrot.slane %v553, 3
        %v2561 = vor.u32 %v2559, %v2560
        %v2562 = vsel %vm2507, %v2557, %v2561
        %v2563 = vrot.slane %v565, 2
        %v2564 = vrot.slane %v561, 3
        %v2565 = vor.u32 %v2563, %v2564
        %v2566 = vsel %vm2507, %v2561, %v2565
        %v2567 = vrot.slane %v573, 2
        %v2568 = vrot.slane %v569, 3
        %v2569 = vor.u32 %v2567, %v2568
        %v2570 = vsel %vm2507, %v2565, %v2569
        %v2571 = vrot.slane %v1662, 2
        %v2572 = vrot.slane %v1665, 3
        %v2573 = vor.u32 %v2571, %v2572
        %v2574 = vsel %vm2507, %v2569, %v2573
        %v2576 = vshrl.u32 %v2273, 16
        %v2578 = vrot.slane %v2576, 2
        %v2579 = vshll.u32 %v2273, 16
        %v2581 = vrot.slane %v2579, 3
        %v2582 = vor.u32 %v2578, %v2581
        %v2583 = vsel %vm2507, %v2573, %v2582
        %v2585 = vshrl.u32 %v2274, 16
        %v2587 = vrot.slane %v2585, 2
        %v2588 = vshll.u32 %v2274, 16
        %v2590 = vrot.slane %v2588, 3
        %v2591 = vor.u32 %v2587, %v2590
        %v2592 = vsel %vm2507, %v2582, %v2591
        %v2595 = vunpack.c.l.b16 %v2505
        %v2596 = vunpack.c.l.b16 %v2506
        %v2597 = vpack.c.b16 %v2596, %v2595
        %v2600 = vsel %vm587, %v2514, 0
        %v2603 = vsel %vm587, %v2518, 0
        %v2606 = vsel %vm587, %v2522, 0
        %v2609 = vsel %vm587, %v2526, 0
        %v2612 = vsel %vm587, %v2530, 0
        %v2615 = vsel %vm587, %v2534, 0
        %v2618 = vsel %vm587, %v2538, 0
        %v2621 = vsel %vm587, %v2542, 0
        %v2624 = vsel %vm587, %v2546, 0
        %v2627 = vsel %vm587, %v2550, 0
        %v2630 = vsel %vm587, %v2554, 0
        %v2633 = vsel %vm587, %v2558, 0
        %v2636 = vsel %vm587, %v2562, 0
        %v2639 = vsel %vm587, %v2566, 0
        %v2642 = vsel %vm587, %v2570, 0
        %v2645 = vsel %vm587, %v2574, 0
        %v2648 = vsel %vm587, %v2583, 0
        %v2651 = vsel %vm587, %v2592, 0
        %2653 = vmatprep.subr.bf16.mxu0 0
        %2654 = vmatpush1.bf16.msra.mxu0 0
        %2655 = vmatprep.subr.bf16.mxu0 0
        %2656 = vmatpush1.bf16.msra.mxu0 0
        %2657 = vmatprep.subr.bf16.mxu0 0
        %2658 = vmatpush1.bf16.msra.mxu0 0
        %2659 = vmatprep.subr.bf16.mxu0 0
        %2660 = vmatpush1.bf16.msra.mxu0 0
        %2661 = vmatprep.subr.bf16.mxu0 0
        %2662 = vmatpush1.bf16.msra.mxu0 0
        %2663 = vmatprep.subr.bf16.mxu0 0
        %2664 = vmatpush1.bf16.msra.mxu0 0
        %2665 = vmatprep.subr.bf16.mxu0 0
        %2666 = vmatpush1.bf16.msra.mxu0 0
        %2667 = vmatprep.subr.bf16.mxu0 0
        %2668 = vmatpush1.bf16.msra.mxu0 %v2597
        %2669 = vmatprep.subr.bf16.mxu0 0
        %2670 = vmatpush2.bf16.msra.mxu0 0
        %2671 = vmatprep.subr.bf16.mxu0 0
        %2672 = vmatpush2.bf16.msra.mxu0 0
        %2673 = vmatprep.subr.bf16.mxu0 0
        %2674 = vmatpush2.bf16.msra.mxu0 0
        %2675 = vmatprep.subr.bf16.mxu0 0
        %2676 = vmatpush2.bf16.msra.mxu0 0
        %2677 = vmatprep.subr.bf16.mxu0 0
        %2678 = vmatpush2.bf16.msra.mxu0 0
        %2679 = vmatprep.subr.bf16.mxu0 0
        %2680 = vmatpush2.bf16.msra.mxu0 0
        %2681 = vmatprep.subr.bf16.mxu0 0
        %2682 = vmatpush2.bf16.msra.mxu0 0
        %2683 = vmatprep.subr.bf16.mxu0 0
        %2684 = vmatpush2.bf16.msra.mxu0 0
        %2685 = vmatprep.mubr.bf16.mxu0 0
        %2686 = vmatmul.mubr.bf16.gmra.mxu0 %v2600
        %v2687 = vpop.f32.mrf.mxu0
        %v2688 = vadd.f32 0.0, %v2687
        %v2689 = vpop.f32.mrf.mxu0
        %v2690 = vpop.f32.mrf.mxu0
        %v2691 = vadd.f32 0.0, %v2690
        %v2692 = vpop.f32.mrf.mxu0
        %2693 = vmatprep.mubr.bf16.mxu0 0
        %2694 = vmatmul.mubr.bf16.gmra.mxu0 %v2603
        %v2695 = vpop.f32.mrf.mxu0
        %v2696 = vadd.f32 0.0, %v2695
        %v2697 = vpop.f32.mrf.mxu0
        %v2698 = vpop.f32.mrf.mxu0
        %v2699 = vadd.f32 0.0, %v2698
        %v2700 = vpop.f32.mrf.mxu0
        %2701 = vmatprep.mubr.bf16.mxu0 0
        %2702 = vmatmul.mubr.bf16.gmra.mxu0 %v2606
        %v2703 = vpop.f32.mrf.mxu0
        %v2704 = vadd.f32 0.0, %v2703
        %v2705 = vpop.f32.mrf.mxu0
        %v2706 = vpop.f32.mrf.mxu0
        %v2707 = vadd.f32 0.0, %v2706
        %v2708 = vpop.f32.mrf.mxu0
        %2709 = vmatprep.mubr.bf16.mxu0 0
        %2710 = vmatmul.mubr.bf16.gmra.mxu0 %v2609
        %v2711 = vpop.f32.mrf.mxu0
        %v2712 = vadd.f32 0.0, %v2711
        %v2713 = vpop.f32.mrf.mxu0
        %v2714 = vpop.f32.mrf.mxu0
        %v2715 = vadd.f32 0.0, %v2714
        %v2716 = vpop.f32.mrf.mxu0
        %2717 = vmatprep.mubr.bf16.mxu0 0
        %2718 = vmatmul.mubr.bf16.gmra.mxu0 %v2612
        %v2719 = vpop.f32.mrf.mxu0
        %v2720 = vadd.f32 0.0, %v2719
        %v2721 = vpop.f32.mrf.mxu0
        %v2722 = vpop.f32.mrf.mxu0
        %v2723 = vadd.f32 0.0, %v2722
        %v2724 = vpop.f32.mrf.mxu0
        %2725 = vmatprep.mubr.bf16.mxu0 0
        %2726 = vmatmul.mubr.bf16.gmra.mxu0 %v2615
        %v2727 = vpop.f32.mrf.mxu0
        %v2728 = vadd.f32 0.0, %v2727
        %v2729 = vpop.f32.mrf.mxu0
        %v2730 = vpop.f32.mrf.mxu0
        %v2731 = vadd.f32 0.0, %v2730
        %v2732 = vpop.f32.mrf.mxu0
        %2733 = vmatprep.mubr.bf16.mxu0 0
        %2734 = vmatmul.mubr.bf16.gmra.mxu0 %v2618
        %v2735 = vpop.f32.mrf.mxu0
        %v2736 = vadd.f32 0.0, %v2735
        %v2737 = vpop.f32.mrf.mxu0
        %v2738 = vpop.f32.mrf.mxu0
        %v2739 = vadd.f32 0.0, %v2738
        %v2740 = vpop.f32.mrf.mxu0
        %2741 = vmatprep.mubr.bf16.mxu0 0
        %2742 = vmatmul.mubr.bf16.gmra.mxu0 %v2621
        %v2743 = vpop.f32.mrf.mxu0
        %v2744 = vadd.f32 0.0, %v2743
        %v2745 = vpop.f32.mrf.mxu0
        %v2746 = vpop.f32.mrf.mxu0
        %v2747 = vadd.f32 0.0, %v2746
        %v2748 = vpop.f32.mrf.mxu0
        %2749 = vmatprep.mubr.bf16.mxu0 0
        %2750 = vmatmul.mubr.bf16.gmra.mxu0 %v2624
        %v2751 = vpop.f32.mrf.mxu0
        %v2752 = vadd.f32 0.0, %v2751
        %v2753 = vpop.f32.mrf.mxu0
        %v2754 = vpop.f32.mrf.mxu0
        %v2755 = vadd.f32 0.0, %v2754
        %v2756 = vpop.f32.mrf.mxu0
        %2757 = vmatprep.mubr.bf16.mxu0 0
        %2758 = vmatmul.mubr.bf16.gmra.mxu0 %v2627
        %v2759 = vpop.f32.mrf.mxu0
        %v2760 = vadd.f32 0.0, %v2759
        %v2761 = vpop.f32.mrf.mxu0
        %v2762 = vpop.f32.mrf.mxu0
        %v2763 = vadd.f32 0.0, %v2762
        %v2764 = vpop.f32.mrf.mxu0
        %2765 = vmatprep.mubr.bf16.mxu0 0
        %2766 = vmatmul.mubr.bf16.gmra.mxu0 %v2630
        %v2767 = vpop.f32.mrf.mxu0
        %v2768 = vadd.f32 0.0, %v2767
        %v2769 = vpop.f32.mrf.mxu0
        %v2770 = vpop.f32.mrf.mxu0
        %v2771 = vadd.f32 0.0, %v2770
        %v2772 = vpop.f32.mrf.mxu0
        %2773 = vmatprep.mubr.bf16.mxu0 0
        %2774 = vmatmul.mubr.bf16.gmra.mxu0 %v2633
        %v2775 = vpop.f32.mrf.mxu0
        %v2776 = vadd.f32 0.0, %v2775
        %v2777 = vpop.f32.mrf.mxu0
        %v2778 = vpop.f32.mrf.mxu0
        %v2779 = vadd.f32 0.0, %v2778
        %v2780 = vpop.f32.mrf.mxu0
        %2781 = vmatprep.mubr.bf16.mxu0 0
        %2782 = vmatmul.mubr.bf16.gmra.mxu0 %v2636
        %v2783 = vpop.f32.mrf.mxu0
        %v2784 = vadd.f32 0.0, %v2783
        %v2785 = vpop.f32.mrf.mxu0
        %v2786 = vpop.f32.mrf.mxu0
        %v2787 = vadd.f32 0.0, %v2786
        %v2788 = vpop.f32.mrf.mxu0
        %2789 = vmatprep.mubr.bf16.mxu0 0
        %2790 = vmatmul.mubr.bf16.gmra.mxu0 %v2639
        %v2791 = vpop.f32.mrf.mxu0
        %v2792 = vadd.f32 0.0, %v2791
        %v2793 = vpop.f32.mrf.mxu0
        %v2794 = vpop.f32.mrf.mxu0
        %v2795 = vadd.f32 0.0, %v2794
        %v2796 = vpop.f32.mrf.mxu0
        %2797 = vmatprep.mubr.bf16.mxu0 0
        %2798 = vmatmul.mubr.bf16.gmra.mxu0 %v2642
        %v2799 = vpop.f32.mrf.mxu0
        %v2800 = vadd.f32 0.0, %v2799
        %v2801 = vpop.f32.mrf.mxu0
        %v2802 = vpop.f32.mrf.mxu0
        %v2803 = vadd.f32 0.0, %v2802
        %v2804 = vpop.f32.mrf.mxu0
        %2805 = vmatprep.mubr.bf16.mxu0 0
        %2806 = vmatmul.mubr.bf16.gmra.mxu0 %v2645
        %v2807 = vpop.f32.mrf.mxu0
        %v2808 = vadd.f32 0.0, %v2807
        %v2809 = vpop.f32.mrf.mxu0
        %v2810 = vpop.f32.mrf.mxu0
        %v2811 = vadd.f32 0.0, %v2810
        %v2812 = vpop.f32.mrf.mxu0
        %2813 = vmatprep.mubr.bf16.mxu0 0
        %2814 = vmatmul.mubr.bf16.gmra.mxu0 %v2648
        %v2815 = vpop.f32.mrf.mxu0
        %v2816 = vadd.f32 0.0, %v2815
        %v2817 = vpop.f32.mrf.mxu0
        %v2818 = vpop.f32.mrf.mxu0
        %v2819 = vadd.f32 0.0, %v2818
        %v2820 = vpop.f32.mrf.mxu0
        %2821 = vmatprep.mubr.bf16.mxu0 0
        %2822 = vmatmul.mubr.bf16.gmra.mxu0 %v2651
        %v2823 = vpop.f32.mrf.mxu0
        %v2824 = vadd.f32 0.0, %v2823
        %v2825 = vpop.f32.mrf.mxu0
        %v2826 = vpop.f32.mrf.mxu0
        %v2827 = vadd.f32 0.0, %v2826
        %v2828 = vpop.f32.mrf.mxu0
        %2829 = vdwg.mxu0
        %v2830 = vadd.f32 %v2468, %v2688
        %v2831 = vadd.f32 %v2469, %v2691
        %v2832 = vadd.f32 %v2470, %v2696
        %v2833 = vadd.f32 %v2471, %v2699
        %v2834 = vadd.f32 %v2472, %v2704
        %v2835 = vadd.f32 %v2473, %v2707
        %v2836 = vadd.f32 %v2474, %v2712
        %v2837 = vadd.f32 %v2475, %v2715
        %v2838 = vadd.f32 %v2476, %v2720
        %v2839 = vadd.f32 %v2477, %v2723
        %v2840 = vadd.f32 %v2478, %v2728
        %v2841 = vadd.f32 %v2479, %v2731
        %v2842 = vadd.f32 %v2480, %v2736
        %v2843 = vadd.f32 %v2481, %v2739
        %v2844 = vadd.f32 %v2482, %v2744
        %v2845 = vadd.f32 %v2483, %v2747
        %v2846 = vadd.f32 %v2484, %v2752
        %v2847 = vadd.f32 %v2485, %v2755
        %v2848 = vadd.f32 %v2486, %v2760
        %v2849 = vadd.f32 %v2487, %v2763
        %v2850 = vadd.f32 %v2488, %v2768
        %v2851 = vadd.f32 %v2489, %v2771
        %v2852 = vadd.f32 %v2490, %v2776
        %v2853 = vadd.f32 %v2491, %v2779
        %v2854 = vadd.f32 %v2492, %v2784
        %v2855 = vadd.f32 %v2493, %v2787
        %v2856 = vadd.f32 %v2494, %v2792
        %v2857 = vadd.f32 %v2495, %v2795
        %v2858 = vadd.f32 %v2496, %v2800
        %v2859 = vadd.f32 %v2497, %v2803
        %v2860 = vadd.f32 %v2498, %v2808
        %v2861 = vadd.f32 %v2499, %v2811
        %v2862 = vadd.f32 %v2500, %v2816
        %v2863 = vadd.f32 %v2501, %v2819
        %v2864 = vadd.f32 %v2502, %v2824
        %v2865 = vadd.f32 %v2503, %v2827
        %s2866 = scalar_lea.vmem %s1, 64
        %v2867 = vld [vmem:[%s2866] sm:$0xf]
        %v2868 = vld [vmem:[%s2866 + $0x4] sm:$0xf]
        %vm2869 = vcmask 1044480
        %v2870 = vrot.slane %v415, 3
        %v2871 = vrot.slane %v416, 3
        %v2872 = vsel %vm2869, %v2870, %v2871
        %v2873 = vrot.slane %v417, 3
        %v2874 = vsel %vm2869, %v2871, %v2873
        %v2875 = vrot.slane %v418, 3
        %v2876 = vsel %vm2869, %v2873, %v2875
        %v2877 = vrot.slane %v419, 3
        %v2878 = vsel %vm2869, %v2875, %v2877
        %v2879 = vrot.slane %v420, 3
        %v2880 = vsel %vm2869, %v2877, %v2879
        %v2881 = vrot.slane %v421, 3
        %v2882 = vsel %vm2869, %v2879, %v2881
        %v2883 = vrot.slane %v422, 3
        %v2884 = vsel %vm2869, %v2881, %v2883
        %v2885 = vrot.slane %v423, 3
        %v2886 = vsel %vm2869, %v2883, %v2885
        %v2887 = vrot.slane %v424, 3
        %v2888 = vsel %vm2869, %v2885, %v2887
        %v2889 = vrot.slane %v425, 3
        %v2890 = vsel %vm2869, %v2887, %v2889
        %v2891 = vrot.slane %v426, 3
        %v2892 = vsel %vm2869, %v2889, %v2891
        %v2893 = vrot.slane %v427, 3
        %v2894 = vsel %vm2869, %v2891, %v2893
        %v2895 = vrot.slane %v428, 3
        %v2896 = vsel %vm2869, %v2893, %v2895
        %v2897 = vrot.slane %v429, 3
        %v2898 = vsel %vm2869, %v2895, %v2897
        %v2899 = vrot.slane %v430, 3
        %v2900 = vsel %vm2869, %v2897, %v2899
        %v2901 = vrot.slane %v1359, 3
        %v2902 = vsel %vm2869, %v2899, %v2901
        %v2903 = vrot.slane %v2273, 3
        %v2904 = vsel %vm2869, %v2901, %v2903
        %v2905 = vrot.slane %v2274, 3
        %v2906 = vsel %vm2869, %v2903, %v2905
        %v2909 = vunpack.c.l.b16 %v2867
        %v2910 = vunpack.c.l.b16 %v2868
        %v2911 = vpack.c.b16 %v2910, %v2909
        %v2914 = vsel %vm587, %v2872, 0
        %v2917 = vsel %vm587, %v2874, 0
        %v2920 = vsel %vm587, %v2876, 0
        %v2923 = vsel %vm587, %v2878, 0
        %v2926 = vsel %vm587, %v2880, 0
        %v2929 = vsel %vm587, %v2882, 0
        %v2932 = vsel %vm587, %v2884, 0
        %v2935 = vsel %vm587, %v2886, 0
        %v2938 = vsel %vm587, %v2888, 0
        %v2941 = vsel %vm587, %v2890, 0
        %v2944 = vsel %vm587, %v2892, 0
        %v2947 = vsel %vm587, %v2894, 0
        %v2950 = vsel %vm587, %v2896, 0
        %v2953 = vsel %vm587, %v2898, 0
        %v2956 = vsel %vm587, %v2900, 0
        %v2959 = vsel %vm587, %v2902, 0
        %v2962 = vsel %vm587, %v2904, 0
        %v2965 = vsel %vm587, %v2906, 0
        %2967 = vmatprep.subr.bf16.mxu0 0
        %2968 = vmatpush1.bf16.msra.mxu0 0
        %2969 = vmatprep.subr.bf16.mxu0 0
        %2970 = vmatpush1.bf16.msra.mxu0 0
        %2971 = vmatprep.subr.bf16.mxu0 0
        %2972 = vmatpush1.bf16.msra.mxu0 0
        %2973 = vmatprep.subr.bf16.mxu0 0
        %2974 = vmatpush1.bf16.msra.mxu0 0
        %2975 = vmatprep.subr.bf16.mxu0 0
        %2976 = vmatpush1.bf16.msra.mxu0 0
        %2977 = vmatprep.subr.bf16.mxu0 0
        %2978 = vmatpush1.bf16.msra.mxu0 0
        %2979 = vmatprep.subr.bf16.mxu0 0
        %2980 = vmatpush1.bf16.msra.mxu0 0
        %2981 = vmatprep.subr.bf16.mxu0 0
        %2982 = vmatpush1.bf16.msra.mxu0 %v2911
        %2983 = vmatprep.subr.bf16.mxu0 0
        %2984 = vmatpush2.bf16.msra.mxu0 0
        %2985 = vmatprep.subr.bf16.mxu0 0
        %2986 = vmatpush2.bf16.msra.mxu0 0
        %2987 = vmatprep.subr.bf16.mxu0 0
        %2988 = vmatpush2.bf16.msra.mxu0 0
        %2989 = vmatprep.subr.bf16.mxu0 0
        %2990 = vmatpush2.bf16.msra.mxu0 0
        %2991 = vmatprep.subr.bf16.mxu0 0
        %2992 = vmatpush2.bf16.msra.mxu0 0
        %2993 = vmatprep.subr.bf16.mxu0 0
        %2994 = vmatpush2.bf16.msra.mxu0 0
        %2995 = vmatprep.subr.bf16.mxu0 0
        %2996 = vmatpush2.bf16.msra.mxu0 0
        %2997 = vmatprep.subr.bf16.mxu0 0
        %2998 = vmatpush2.bf16.msra.mxu0 0
        %2999 = vmatprep.mubr.bf16.mxu0 0
        %3000 = vmatmul.mubr.bf16.gmra.mxu0 %v2914
        %v3001 = vpop.f32.mrf.mxu0
        %v3002 = vadd.f32 0.0, %v3001
        %v3003 = vpop.f32.mrf.mxu0
        %v3004 = vpop.f32.mrf.mxu0
        %v3005 = vadd.f32 0.0, %v3004
        %v3006 = vpop.f32.mrf.mxu0
        %3007 = vmatprep.mubr.bf16.mxu0 0
        %3008 = vmatmul.mubr.bf16.gmra.mxu0 %v2917
        %v3009 = vpop.f32.mrf.mxu0
        %v3010 = vadd.f32 0.0, %v3009
        %v3011 = vpop.f32.mrf.mxu0
        %v3012 = vpop.f32.mrf.mxu0
        %v3013 = vadd.f32 0.0, %v3012
        %v3014 = vpop.f32.mrf.mxu0
        %3015 = vmatprep.mubr.bf16.mxu0 0
        %3016 = vmatmul.mubr.bf16.gmra.mxu0 %v2920
        %v3017 = vpop.f32.mrf.mxu0
        %v3018 = vadd.f32 0.0, %v3017
        %v3019 = vpop.f32.mrf.mxu0
        %v3020 = vpop.f32.mrf.mxu0
        %v3021 = vadd.f32 0.0, %v3020
        %v3022 = vpop.f32.mrf.mxu0
        %3023 = vmatprep.mubr.bf16.mxu0 0
        %3024 = vmatmul.mubr.bf16.gmra.mxu0 %v2923
        %v3025 = vpop.f32.mrf.mxu0
        %v3026 = vadd.f32 0.0, %v3025
        %v3027 = vpop.f32.mrf.mxu0
        %v3028 = vpop.f32.mrf.mxu0
        %v3029 = vadd.f32 0.0, %v3028
        %v3030 = vpop.f32.mrf.mxu0
        %3031 = vmatprep.mubr.bf16.mxu0 0
        %3032 = vmatmul.mubr.bf16.gmra.mxu0 %v2926
        %v3033 = vpop.f32.mrf.mxu0
        %v3034 = vadd.f32 0.0, %v3033
        %v3035 = vpop.f32.mrf.mxu0
        %v3036 = vpop.f32.mrf.mxu0
        %v3037 = vadd.f32 0.0, %v3036
        %v3038 = vpop.f32.mrf.mxu0
        %3039 = vmatprep.mubr.bf16.mxu0 0
        %3040 = vmatmul.mubr.bf16.gmra.mxu0 %v2929
        %v3041 = vpop.f32.mrf.mxu0
        %v3042 = vadd.f32 0.0, %v3041
        %v3043 = vpop.f32.mrf.mxu0
        %v3044 = vpop.f32.mrf.mxu0
        %v3045 = vadd.f32 0.0, %v3044
        %v3046 = vpop.f32.mrf.mxu0
        %3047 = vmatprep.mubr.bf16.mxu0 0
        %3048 = vmatmul.mubr.bf16.gmra.mxu0 %v2932
        %v3049 = vpop.f32.mrf.mxu0
        %v3050 = vadd.f32 0.0, %v3049
        %v3051 = vpop.f32.mrf.mxu0
        %v3052 = vpop.f32.mrf.mxu0
        %v3053 = vadd.f32 0.0, %v3052
        %v3054 = vpop.f32.mrf.mxu0
        %3055 = vmatprep.mubr.bf16.mxu0 0
        %3056 = vmatmul.mubr.bf16.gmra.mxu0 %v2935
        %v3057 = vpop.f32.mrf.mxu0
        %v3058 = vadd.f32 0.0, %v3057
        %v3059 = vpop.f32.mrf.mxu0
        %v3060 = vpop.f32.mrf.mxu0
        %v3061 = vadd.f32 0.0, %v3060
        %v3062 = vpop.f32.mrf.mxu0
        %3063 = vmatprep.mubr.bf16.mxu0 0
        %3064 = vmatmul.mubr.bf16.gmra.mxu0 %v2938
        %v3065 = vpop.f32.mrf.mxu0
        %v3066 = vadd.f32 0.0, %v3065
        %v3067 = vpop.f32.mrf.mxu0
        %v3068 = vpop.f32.mrf.mxu0
        %v3069 = vadd.f32 0.0, %v3068
        %v3070 = vpop.f32.mrf.mxu0
        %3071 = vmatprep.mubr.bf16.mxu0 0
        %3072 = vmatmul.mubr.bf16.gmra.mxu0 %v2941
        %v3073 = vpop.f32.mrf.mxu0
        %v3074 = vadd.f32 0.0, %v3073
        %v3075 = vpop.f32.mrf.mxu0
        %v3076 = vpop.f32.mrf.mxu0
        %v3077 = vadd.f32 0.0, %v3076
        %v3078 = vpop.f32.mrf.mxu0
        %3079 = vmatprep.mubr.bf16.mxu0 0
        %3080 = vmatmul.mubr.bf16.gmra.mxu0 %v2944
        %v3081 = vpop.f32.mrf.mxu0
        %v3082 = vadd.f32 0.0, %v3081
        %v3083 = vpop.f32.mrf.mxu0
        %v3084 = vpop.f32.mrf.mxu0
        %v3085 = vadd.f32 0.0, %v3084
        %v3086 = vpop.f32.mrf.mxu0
        %3087 = vmatprep.mubr.bf16.mxu0 0
        %3088 = vmatmul.mubr.bf16.gmra.mxu0 %v2947
        %v3089 = vpop.f32.mrf.mxu0
        %v3090 = vadd.f32 0.0, %v3089
        %v3091 = vpop.f32.mrf.mxu0
        %v3092 = vpop.f32.mrf.mxu0
        %v3093 = vadd.f32 0.0, %v3092
        %v3094 = vpop.f32.mrf.mxu0
        %3095 = vmatprep.mubr.bf16.mxu0 0
        %3096 = vmatmul.mubr.bf16.gmra.mxu0 %v2950
        %v3097 = vpop.f32.mrf.mxu0
        %v3098 = vadd.f32 0.0, %v3097
        %v3099 = vpop.f32.mrf.mxu0
        %v3100 = vpop.f32.mrf.mxu0
        %v3101 = vadd.f32 0.0, %v3100
        %v3102 = vpop.f32.mrf.mxu0
        %3103 = vmatprep.mubr.bf16.mxu0 0
        %3104 = vmatmul.mubr.bf16.gmra.mxu0 %v2953
        %v3105 = vpop.f32.mrf.mxu0
        %v3106 = vadd.f32 0.0, %v3105
        %v3107 = vpop.f32.mrf.mxu0
        %v3108 = vpop.f32.mrf.mxu0
        %v3109 = vadd.f32 0.0, %v3108
        %v3110 = vpop.f32.mrf.mxu0
        %3111 = vmatprep.mubr.bf16.mxu0 0
        %3112 = vmatmul.mubr.bf16.gmra.mxu0 %v2956
        %v3113 = vpop.f32.mrf.mxu0
        %v3114 = vadd.f32 0.0, %v3113
        %v3115 = vpop.f32.mrf.mxu0
        %v3116 = vpop.f32.mrf.mxu0
        %v3117 = vadd.f32 0.0, %v3116
        %v3118 = vpop.f32.mrf.mxu0
        %3119 = vmatprep.mubr.bf16.mxu0 0
        %3120 = vmatmul.mubr.bf16.gmra.mxu0 %v2959
        %v3121 = vpop.f32.mrf.mxu0
        %v3122 = vadd.f32 0.0, %v3121
        %v3123 = vpop.f32.mrf.mxu0
        %v3124 = vpop.f32.mrf.mxu0
        %v3125 = vadd.f32 0.0, %v3124
        %v3126 = vpop.f32.mrf.mxu0
        %3127 = vmatprep.mubr.bf16.mxu0 0
        %3128 = vmatmul.mubr.bf16.gmra.mxu0 %v2962
        %v3129 = vpop.f32.mrf.mxu0
        %v3130 = vadd.f32 0.0, %v3129
        %v3131 = vpop.f32.mrf.mxu0
        %v3132 = vpop.f32.mrf.mxu0
        %v3133 = vadd.f32 0.0, %v3132
        %v3134 = vpop.f32.mrf.mxu0
        %3135 = vmatprep.mubr.bf16.mxu0 0
        %3136 = vmatmul.mubr.bf16.gmra.mxu0 %v2965
        %v3137 = vpop.f32.mrf.mxu0
        %v3138 = vadd.f32 0.0, %v3137
        %v3139 = vpop.f32.mrf.mxu0
        %v3140 = vpop.f32.mrf.mxu0
        %v3141 = vadd.f32 0.0, %v3140
        %v3142 = vpop.f32.mrf.mxu0
        %3143 = vdwg.mxu0
        %v3144 = vadd.f32 %v2830, %v3002
        %v3145 = vadd.f32 %v2831, %v3005
        %v3146 = vadd.f32 %v2832, %v3010
        %v3147 = vadd.f32 %v2833, %v3013
        %v3148 = vadd.f32 %v2834, %v3018
        %v3149 = vadd.f32 %v2835, %v3021
        %v3150 = vadd.f32 %v2836, %v3026
        %v3151 = vadd.f32 %v2837, %v3029
        %v3152 = vadd.f32 %v2838, %v3034
        %v3153 = vadd.f32 %v2839, %v3037
        %v3154 = vadd.f32 %v2840, %v3042
        %v3155 = vadd.f32 %v2841, %v3045
        %v3156 = vadd.f32 %v2842, %v3050
        %v3157 = vadd.f32 %v2843, %v3053
        %v3158 = vadd.f32 %v2844, %v3058
        %v3159 = vadd.f32 %v2845, %v3061
        %v3160 = vadd.f32 %v2846, %v3066
        %v3161 = vadd.f32 %v2847, %v3069
        %v3162 = vadd.f32 %v2848, %v3074
        %v3163 = vadd.f32 %v2849, %v3077
        %v3164 = vadd.f32 %v2850, %v3082
        %v3165 = vadd.f32 %v2851, %v3085
        %v3166 = vadd.f32 %v2852, %v3090
        %v3167 = vadd.f32 %v2853, %v3093
        %v3168 = vadd.f32 %v2854, %v3098
        %v3169 = vadd.f32 %v2855, %v3101
        %v3170 = vadd.f32 %v2856, %v3106
        %v3171 = vadd.f32 %v2857, %v3109
        %v3172 = vadd.f32 %v2858, %v3114
        %v3173 = vadd.f32 %v2859, %v3117
        %v3174 = vadd.f32 %v2860, %v3122
        %v3175 = vadd.f32 %v2861, %v3125
        %v3176 = vadd.f32 %v2862, %v3130
        %v3177 = vadd.f32 %v2863, %v3133
        %v3178 = vadd.f32 %v2864, %v3138
        %v3179 = vadd.f32 %v2865, %v3141
        %v3180 = vld [vmem:[%s2] sm:$0x1]
        %v3182 = vlaneseq
        %v3183 = vshrl.u32 %v3182, 7
        %v3184 = vsub.s32 0, %v3183
        %v3185 = vrot.slane %v3180, %v3184
        %v3187 = vadd.f32 %v3144, %v3185
        %v3188 = vadd.f32 %v3145, %v3185
        %v3189 = vadd.f32 %v3146, %v3185
        %v3190 = vadd.f32 %v3147, %v3185
        %v3191 = vadd.f32 %v3148, %v3185
        %v3192 = vadd.f32 %v3149, %v3185
        %v3193 = vadd.f32 %v3150, %v3185
        %v3194 = vadd.f32 %v3151, %v3185
        %v3195 = vadd.f32 %v3152, %v3185
        %v3196 = vadd.f32 %v3153, %v3185
        %v3197 = vadd.f32 %v3154, %v3185
        %v3198 = vadd.f32 %v3155, %v3185
        %v3199 = vadd.f32 %v3156, %v3185
        %v3200 = vadd.f32 %v3157, %v3185
        %v3201 = vadd.f32 %v3158, %v3185
        %v3202 = vadd.f32 %v3159, %v3185
        %v3203 = vadd.f32 %v3160, %v3185
        %v3204 = vadd.f32 %v3161, %v3185
        %v3205 = vadd.f32 %v3162, %v3185
        %v3206 = vadd.f32 %v3163, %v3185
        %v3207 = vadd.f32 %v3164, %v3185
        %v3208 = vadd.f32 %v3165, %v3185
        %v3209 = vadd.f32 %v3166, %v3185
        %v3210 = vadd.f32 %v3167, %v3185
        %v3211 = vadd.f32 %v3168, %v3185
        %v3212 = vadd.f32 %v3169, %v3185
        %v3213 = vadd.f32 %v3170, %v3185
        %v3214 = vadd.f32 %v3171, %v3185
        %v3215 = vadd.f32 %v3172, %v3185
        %v3216 = vadd.f32 %v3173, %v3185
        %v3217 = vadd.f32 %v3174, %v3185
        %v3218 = vadd.f32 %v3175, %v3185
        %v3219 = vadd.f32 %v3176, %v3185
        %v3220 = vadd.f32 %v3177, %v3185
        %v3221 = vadd.f32 %v3178, %v3185
        %v3222 = vadd.f32 %v3179, %v3185
        %v3223 = vmax.f32 %v3187, 0.0
        %v3224 = vmax.f32 %v3188, 0.0
        %v3225 = vmax.f32 %v3189, 0.0
        %v3226 = vmax.f32 %v3190, 0.0
        %v3227 = vmax.f32 %v3191, 0.0
        %v3228 = vmax.f32 %v3192, 0.0
        %v3229 = vmax.f32 %v3193, 0.0
        %v3230 = vmax.f32 %v3194, 0.0
        %v3231 = vmax.f32 %v3195, 0.0
        %v3232 = vmax.f32 %v3196, 0.0
        %v3233 = vmax.f32 %v3197, 0.0
        %v3234 = vmax.f32 %v3198, 0.0
        %v3235 = vmax.f32 %v3199, 0.0
        %v3236 = vmax.f32 %v3200, 0.0
        %v3237 = vmax.f32 %v3201, 0.0
        %v3238 = vmax.f32 %v3202, 0.0
        %v3239 = vmax.f32 %v3203, 0.0
        %v3240 = vmax.f32 %v3204, 0.0
        %v3241 = vmax.f32 %v3205, 0.0
        %v3242 = vmax.f32 %v3206, 0.0
        %v3243 = vmax.f32 %v3207, 0.0
        %v3244 = vmax.f32 %v3208, 0.0
        %v3245 = vmax.f32 %v3209, 0.0
        %v3246 = vmax.f32 %v3210, 0.0
        %v3247 = vmax.f32 %v3211, 0.0
        %v3248 = vmax.f32 %v3212, 0.0
        %v3249 = vmax.f32 %v3213, 0.0
        %v3250 = vmax.f32 %v3214, 0.0
        %v3251 = vmax.f32 %v3215, 0.0
        %v3252 = vmax.f32 %v3216, 0.0
        %v3253 = vmax.f32 %v3217, 0.0
        %v3254 = vmax.f32 %v3218, 0.0
        %v3255 = vmax.f32 %v3219, 0.0
        %v3256 = vmax.f32 %v3220, 0.0
        %v3257 = vmax.f32 %v3221, 0.0
        %v3258 = vmax.f32 %v3222, 0.0
        %v3259 = vpack.c.bf16 %v3224, %v3223
        %v3260 = vpack.c.bf16 %v3226, %v3225
        %v3261 = vpack.c.bf16 %v3228, %v3227
        %v3262 = vpack.c.bf16 %v3230, %v3229
        %v3263 = vpack.c.bf16 %v3232, %v3231
        %v3264 = vpack.c.bf16 %v3234, %v3233
        %v3265 = vpack.c.bf16 %v3236, %v3235
        %v3266 = vpack.c.bf16 %v3238, %v3237
        %v3267 = vpack.c.bf16 %v3240, %v3239
        %v3268 = vpack.c.bf16 %v3242, %v3241
        %v3269 = vpack.c.bf16 %v3244, %v3243
        %v3270 = vpack.c.bf16 %v3246, %v3245
        %v3271 = vpack.c.bf16 %v3248, %v3247
        %v3272 = vpack.c.bf16 %v3250, %v3249
        %v3273 = vpack.c.bf16 %v3252, %v3251
        %v3274 = vpack.c.bf16 %v3254, %v3253
        %v3275 = vpack.c.bf16 %v3256, %v3255
        %v3276 = vpack.c.bf16 %v3258, %v3257
        %v3277 = vld [vmem:[%s3] sm:$0xf]
        %v3278 = vld [vmem:[%s3 + $0x4] sm:$0xf]
        %v3279 = vld [vmem:[%s4] sm:$0x1]
        %v3281 = vlaneseq
        %v3282 = vshrl.u32 %v3281, 7
        %v3283 = vsub.s32 0, %v3282
        %v3284 = vrot.slane %v3279, %v3283
        %v3288 = vunpack.c.l.b16 %v3277
        %v3289 = vunpack.c.l.b16 %v3278
        %v3290 = vpack.c.b16 %v3289, %v3288
        %v3293 = vsel %vm587, %v3259, 0
        %v3296 = vsel %vm587, %v3260, 0
        %v3299 = vsel %vm587, %v3261, 0
        %v3302 = vsel %vm587, %v3262, 0
        %v3305 = vsel %vm587, %v3263, 0
        %v3308 = vsel %vm587, %v3264, 0
        %v3311 = vsel %vm587, %v3265, 0
        %v3314 = vsel %vm587, %v3266, 0
        %v3317 = vsel %vm587, %v3267, 0
        %v3320 = vsel %vm587, %v3268, 0
        %v3323 = vsel %vm587, %v3269, 0
        %v3326 = vsel %vm587, %v3270, 0
        %v3329 = vsel %vm587, %v3271, 0
        %v3332 = vsel %vm587, %v3272, 0
        %v3335 = vsel %vm587, %v3273, 0
        %v3338 = vsel %vm587, %v3274, 0
        %v3341 = vsel %vm587, %v3275, 0
        %v3344 = vsel %vm587, %v3276, 0
        %3346 = vmatprep.subr.bf16.mxu0 0
        %3347 = vmatpush1.bf16.msra.mxu0 0
        %3348 = vmatprep.subr.bf16.mxu0 0
        %3349 = vmatpush1.bf16.msra.mxu0 0
        %3350 = vmatprep.subr.bf16.mxu0 0
        %3351 = vmatpush1.bf16.msra.mxu0 0
        %3352 = vmatprep.subr.bf16.mxu0 0
        %3353 = vmatpush1.bf16.msra.mxu0 0
        %3354 = vmatprep.subr.bf16.mxu0 0
        %3355 = vmatpush1.bf16.msra.mxu0 0
        %3356 = vmatprep.subr.bf16.mxu0 0
        %3357 = vmatpush1.bf16.msra.mxu0 0
        %3358 = vmatprep.subr.bf16.mxu0 0
        %3359 = vmatpush1.bf16.msra.mxu0 0
        %3360 = vmatprep.subr.bf16.mxu0 0
        %3361 = vmatpush1.bf16.msra.mxu0 %v3290
        %3362 = vmatprep.subr.bf16.mxu0 0
        %3363 = vmatpush2.bf16.msra.mxu0 0
        %3364 = vmatprep.subr.bf16.mxu0 0
        %3365 = vmatpush2.bf16.msra.mxu0 0
        %3366 = vmatprep.subr.bf16.mxu0 0
        %3367 = vmatpush2.bf16.msra.mxu0 0
        %3368 = vmatprep.subr.bf16.mxu0 0
        %3369 = vmatpush2.bf16.msra.mxu0 0
        %3370 = vmatprep.subr.bf16.mxu0 0
        %3371 = vmatpush2.bf16.msra.mxu0 0
        %3372 = vmatprep.subr.bf16.mxu0 0
        %3373 = vmatpush2.bf16.msra.mxu0 0
        %3374 = vmatprep.subr.bf16.mxu0 0
        %3375 = vmatpush2.bf16.msra.mxu0 0
        %3376 = vmatprep.subr.bf16.mxu0 0
        %3377 = vmatpush2.bf16.msra.mxu0 0
        %3378 = vmatprep.mubr.bf16.mxu0 0
        %3379 = vmatmul.mubr.bf16.gmra.mxu0 %v3293
        %v3380 = vpop.f32.mrf.mxu0
        %v3381 = vadd.f32 %v3284, %v3380
        %v3382 = vpop.f32.mrf.mxu0
        %v3383 = vpop.f32.mrf.mxu0
        %v3384 = vadd.f32 %v3284, %v3383
        %v3385 = vpop.f32.mrf.mxu0
        %3386 = vmatprep.mubr.bf16.mxu0 0
        %3387 = vmatmul.mubr.bf16.gmra.mxu0 %v3296
        %v3388 = vpop.f32.mrf.mxu0
        %v3389 = vadd.f32 %v3284, %v3388
        %v3390 = vpop.f32.mrf.mxu0
        %v3391 = vpop.f32.mrf.mxu0
        %v3392 = vadd.f32 %v3284, %v3391
        %v3393 = vpop.f32.mrf.mxu0
        %3394 = vmatprep.mubr.bf16.mxu0 0
        %3395 = vmatmul.mubr.bf16.gmra.mxu0 %v3299
        %v3396 = vpop.f32.mrf.mxu0
        %v3397 = vadd.f32 %v3284, %v3396
        %v3398 = vpop.f32.mrf.mxu0
        %v3399 = vpop.f32.mrf.mxu0
        %v3400 = vadd.f32 %v3284, %v3399
        %v3401 = vpop.f32.mrf.mxu0
        %3402 = vmatprep.mubr.bf16.mxu0 0
        %3403 = vmatmul.mubr.bf16.gmra.mxu0 %v3302
        %v3404 = vpop.f32.mrf.mxu0
        %v3405 = vadd.f32 %v3284, %v3404
        %v3406 = vpop.f32.mrf.mxu0
        %v3407 = vpop.f32.mrf.mxu0
        %v3408 = vadd.f32 %v3284, %v3407
        %v3409 = vpop.f32.mrf.mxu0
        %3410 = vmatprep.mubr.bf16.mxu0 0
        %3411 = vmatmul.mubr.bf16.gmra.mxu0 %v3305
        %v3412 = vpop.f32.mrf.mxu0
        %v3413 = vadd.f32 %v3284, %v3412
        %v3414 = vpop.f32.mrf.mxu0
        %v3415 = vpop.f32.mrf.mxu0
        %v3416 = vadd.f32 %v3284, %v3415
        %v3417 = vpop.f32.mrf.mxu0
        %3418 = vmatprep.mubr.bf16.mxu0 0
        %3419 = vmatmul.mubr.bf16.gmra.mxu0 %v3308
        %v3420 = vpop.f32.mrf.mxu0
        %v3421 = vadd.f32 %v3284, %v3420
        %v3422 = vpop.f32.mrf.mxu0
        %v3423 = vpop.f32.mrf.mxu0
        %v3424 = vadd.f32 %v3284, %v3423
        %v3425 = vpop.f32.mrf.mxu0
        %3426 = vmatprep.mubr.bf16.mxu0 0
        %3427 = vmatmul.mubr.bf16.gmra.mxu0 %v3311
        %v3428 = vpop.f32.mrf.mxu0
        %v3429 = vadd.f32 %v3284, %v3428
        %v3430 = vpop.f32.mrf.mxu0
        %v3431 = vpop.f32.mrf.mxu0
        %v3432 = vadd.f32 %v3284, %v3431
        %v3433 = vpop.f32.mrf.mxu0
        %3434 = vmatprep.mubr.bf16.mxu0 0
        %3435 = vmatmul.mubr.bf16.gmra.mxu0 %v3314
        %v3436 = vpop.f32.mrf.mxu0
        %v3437 = vadd.f32 %v3284, %v3436
        %v3438 = vpop.f32.mrf.mxu0
        %v3439 = vpop.f32.mrf.mxu0
        %v3440 = vadd.f32 %v3284, %v3439
        %v3441 = vpop.f32.mrf.mxu0
        %3442 = vmatprep.mubr.bf16.mxu0 0
        %3443 = vmatmul.mubr.bf16.gmra.mxu0 %v3317
        %v3444 = vpop.f32.mrf.mxu0
        %v3445 = vadd.f32 %v3284, %v3444
        %v3446 = vpop.f32.mrf.mxu0
        %v3447 = vpop.f32.mrf.mxu0
        %v3448 = vadd.f32 %v3284, %v3447
        %v3449 = vpop.f32.mrf.mxu0
        %3450 = vmatprep.mubr.bf16.mxu0 0
        %3451 = vmatmul.mubr.bf16.gmra.mxu0 %v3320
        %v3452 = vpop.f32.mrf.mxu0
        %v3453 = vadd.f32 %v3284, %v3452
        %v3454 = vpop.f32.mrf.mxu0
        %v3455 = vpop.f32.mrf.mxu0
        %v3456 = vadd.f32 %v3284, %v3455
        %v3457 = vpop.f32.mrf.mxu0
        %3458 = vmatprep.mubr.bf16.mxu0 0
        %3459 = vmatmul.mubr.bf16.gmra.mxu0 %v3323
        %v3460 = vpop.f32.mrf.mxu0
        %v3461 = vadd.f32 %v3284, %v3460
        %v3462 = vpop.f32.mrf.mxu0
        %v3463 = vpop.f32.mrf.mxu0
        %v3464 = vadd.f32 %v3284, %v3463
        %v3465 = vpop.f32.mrf.mxu0
        %3466 = vmatprep.mubr.bf16.mxu0 0
        %3467 = vmatmul.mubr.bf16.gmra.mxu0 %v3326
        %v3468 = vpop.f32.mrf.mxu0
        %v3469 = vadd.f32 %v3284, %v3468
        %v3470 = vpop.f32.mrf.mxu0
        %v3471 = vpop.f32.mrf.mxu0
        %v3472 = vadd.f32 %v3284, %v3471
        %v3473 = vpop.f32.mrf.mxu0
        %3474 = vmatprep.mubr.bf16.mxu0 0
        %3475 = vmatmul.mubr.bf16.gmra.mxu0 %v3329
        %v3476 = vpop.f32.mrf.mxu0
        %v3477 = vadd.f32 %v3284, %v3476
        %v3478 = vpop.f32.mrf.mxu0
        %v3479 = vpop.f32.mrf.mxu0
        %v3480 = vadd.f32 %v3284, %v3479
        %v3481 = vpop.f32.mrf.mxu0
        %3482 = vmatprep.mubr.bf16.mxu0 0
        %3483 = vmatmul.mubr.bf16.gmra.mxu0 %v3332
        %v3484 = vpop.f32.mrf.mxu0
        %v3485 = vadd.f32 %v3284, %v3484
        %v3486 = vpop.f32.mrf.mxu0
        %v3487 = vpop.f32.mrf.mxu0
        %v3488 = vadd.f32 %v3284, %v3487
        %v3489 = vpop.f32.mrf.mxu0
        %3490 = vmatprep.mubr.bf16.mxu0 0
        %3491 = vmatmul.mubr.bf16.gmra.mxu0 %v3335
        %v3492 = vpop.f32.mrf.mxu0
        %v3493 = vadd.f32 %v3284, %v3492
        %v3494 = vpop.f32.mrf.mxu0
        %v3495 = vpop.f32.mrf.mxu0
        %v3496 = vadd.f32 %v3284, %v3495
        %v3497 = vpop.f32.mrf.mxu0
        %3498 = vmatprep.mubr.bf16.mxu0 0
        %3499 = vmatmul.mubr.bf16.gmra.mxu0 %v3338
        %v3500 = vpop.f32.mrf.mxu0
        %v3501 = vadd.f32 %v3284, %v3500
        %v3502 = vpop.f32.mrf.mxu0
        %v3503 = vpop.f32.mrf.mxu0
        %v3504 = vadd.f32 %v3284, %v3503
        %v3505 = vpop.f32.mrf.mxu0
        %3506 = vmatprep.mubr.bf16.mxu0 0
        %3507 = vmatmul.mubr.bf16.gmra.mxu0 %v3341
        %v3508 = vpop.f32.mrf.mxu0
        %v3509 = vadd.f32 %v3284, %v3508
        %v3510 = vpop.f32.mrf.mxu0
        %v3511 = vpop.f32.mrf.mxu0
        %v3512 = vadd.f32 %v3284, %v3511
        %v3513 = vpop.f32.mrf.mxu0
        %3514 = vmatprep.mubr.bf16.mxu0 0
        %3515 = vmatmul.mubr.bf16.gmra.mxu0 %v3344
        %v3516 = vpop.f32.mrf.mxu0
        %v3517 = vadd.f32 %v3284, %v3516
        %v3518 = vpop.f32.mrf.mxu0
        %v3519 = vpop.f32.mrf.mxu0
        %v3520 = vadd.f32 %v3284, %v3519
        %v3521 = vpop.f32.mrf.mxu0
        %3522 = vdwg.mxu0
        %v3523 = vlaneseq
        %v3524 = vand.u32 %v3523, 127
        %vm3525 = vcmp.lt.s32.totalorder %v3524, 9
        %3526 = vrot.lane.b32.xlu0 %v3381, 6
        %v3527 = vpop.permute.xlu0 %3526
        %3528 = vrot.lane.b32.xlu0 %v3384, 6
        %v3529 = vpop.permute.xlu0 %3528
        %3530 = vrot.lane.b32.xlu0 %v3389, 6
        %v3531 = vpop.permute.xlu0 %3530
        %3532 = vrot.lane.b32.xlu0 %v3392, 6
        %v3533 = vpop.permute.xlu0 %3532
        %3534 = vrot.lane.b32.xlu0 %v3397, 6
        %v3535 = vpop.permute.xlu0 %3534
        %3536 = vrot.lane.b32.xlu0 %v3400, 6
        %v3537 = vpop.permute.xlu0 %3536
        %3538 = vrot.lane.b32.xlu0 %v3405, 6
        %v3539 = vpop.permute.xlu0 %3538
        %3540 = vrot.lane.b32.xlu0 %v3408, 6
        %v3541 = vpop.permute.xlu0 %3540
        %3542 = vrot.lane.b32.xlu0 %v3413, 6
        %v3543 = vpop.permute.xlu0 %3542
        %3544 = vrot.lane.b32.xlu0 %v3416, 6
        %v3545 = vpop.permute.xlu0 %3544
        %3546 = vrot.lane.b32.xlu0 %v3421, 6
        %v3547 = vpop.permute.xlu0 %3546
        %3548 = vrot.lane.b32.xlu0 %v3424, 6
        %v3549 = vpop.permute.xlu0 %3548
        %3550 = vrot.lane.b32.xlu0 %v3429, 6
        %v3551 = vpop.permute.xlu0 %3550
        %3552 = vrot.lane.b32.xlu0 %v3432, 6
        %v3553 = vpop.permute.xlu0 %3552
        %3554 = vrot.lane.b32.xlu0 %v3437, 6
        %v3555 = vpop.permute.xlu0 %3554
        %3556 = vrot.lane.b32.xlu0 %v3440, 6
        %v3557 = vpop.permute.xlu0 %3556
        %3558 = vrot.lane.b32.xlu0 %v3445, 6
        %v3559 = vpop.permute.xlu0 %3558
        %3560 = vrot.lane.b32.xlu0 %v3448, 6
        %v3561 = vpop.permute.xlu0 %3560
        %3562 = vrot.lane.b32.xlu0 %v3453, 6
        %v3563 = vpop.permute.xlu0 %3562
        %3564 = vrot.lane.b32.xlu0 %v3456, 6
        %v3565 = vpop.permute.xlu0 %3564
        %3566 = vrot.lane.b32.xlu0 %v3461, 6
        %v3567 = vpop.permute.xlu0 %3566
        %3568 = vrot.lane.b32.xlu0 %v3464, 6
        %v3569 = vpop.permute.xlu0 %3568
        %3570 = vrot.lane.b32.xlu0 %v3469, 6
        %v3571 = vpop.permute.xlu0 %3570
        %3572 = vrot.lane.b32.xlu0 %v3472, 6
        %v3573 = vpop.permute.xlu0 %3572
        %3574 = vrot.lane.b32.xlu0 %v3477, 6
        %v3575 = vpop.permute.xlu0 %3574
        %3576 = vrot.lane.b32.xlu0 %v3480, 6
        %v3577 = vpop.permute.xlu0 %3576
        %3578 = vrot.lane.b32.xlu0 %v3485, 6
        %v3579 = vpop.permute.xlu0 %3578
        %3580 = vrot.lane.b32.xlu0 %v3488, 6
        %v3581 = vpop.permute.xlu0 %3580
        %3582 = vrot.lane.b32.xlu0 %v3493, 6
        %v3583 = vpop.permute.xlu0 %3582
        %3584 = vrot.lane.b32.xlu0 %v3496, 6
        %v3585 = vpop.permute.xlu0 %3584
        %3586 = vrot.lane.b32.xlu0 %v3501, 6
        %v3587 = vpop.permute.xlu0 %3586
        %3588 = vrot.lane.b32.xlu0 %v3504, 6
        %v3589 = vpop.permute.xlu0 %3588
        %3590 = vrot.lane.b32.xlu0 %v3509, 6
        %v3591 = vpop.permute.xlu0 %3590
        %3592 = vrot.lane.b32.xlu0 %v3512, 6
        %v3593 = vpop.permute.xlu0 %3592
        %3594 = vrot.lane.b32.xlu0 %v3517, 6
        %v3595 = vpop.permute.xlu0 %3594
        %3596 = vrot.lane.b32.xlu0 %v3520, 6
        %v3597 = vpop.permute.xlu0 %3596
        %3598 = vrot.lane.b32.xlu0 %v3381, 122
        %v3599 = vpop.permute.xlu0 %3598
        %3600 = vrot.lane.b32.xlu0 %v3384, 122
        %v3601 = vpop.permute.xlu0 %3600
        %3602 = vrot.lane.b32.xlu0 %v3389, 122
        %v3603 = vpop.permute.xlu0 %3602
        %3604 = vrot.lane.b32.xlu0 %v3392, 122
        %v3605 = vpop.permute.xlu0 %3604
        %3606 = vrot.lane.b32.xlu0 %v3397, 122
        %v3607 = vpop.permute.xlu0 %3606
        %3608 = vrot.lane.b32.xlu0 %v3400, 122
        %v3609 = vpop.permute.xlu0 %3608
        %3610 = vrot.lane.b32.xlu0 %v3405, 122
        %v3611 = vpop.permute.xlu0 %3610
        %3612 = vrot.lane.b32.xlu0 %v3408, 122
        %v3613 = vpop.permute.xlu0 %3612
        %3614 = vrot.lane.b32.xlu0 %v3413, 122
        %v3615 = vpop.permute.xlu0 %3614
        %3616 = vrot.lane.b32.xlu0 %v3416, 122
        %v3617 = vpop.permute.xlu0 %3616
        %3618 = vrot.lane.b32.xlu0 %v3421, 122
        %v3619 = vpop.permute.xlu0 %3618
        %3620 = vrot.lane.b32.xlu0 %v3424, 122
        %v3621 = vpop.permute.xlu0 %3620
        %3622 = vrot.lane.b32.xlu0 %v3429, 122
        %v3623 = vpop.permute.xlu0 %3622
        %3624 = vrot.lane.b32.xlu0 %v3432, 122
        %v3625 = vpop.permute.xlu0 %3624
        %3626 = vrot.lane.b32.xlu0 %v3437, 122
        %v3627 = vpop.permute.xlu0 %3626
        %3628 = vrot.lane.b32.xlu0 %v3440, 122
        %v3629 = vpop.permute.xlu0 %3628
        %3630 = vrot.lane.b32.xlu0 %v3445, 122
        %v3631 = vpop.permute.xlu0 %3630
        %3632 = vrot.lane.b32.xlu0 %v3448, 122
        %v3633 = vpop.permute.xlu0 %3632
        %3634 = vrot.lane.b32.xlu0 %v3453, 122
        %v3635 = vpop.permute.xlu0 %3634
        %3636 = vrot.lane.b32.xlu0 %v3456, 122
        %v3637 = vpop.permute.xlu0 %3636
        %3638 = vrot.lane.b32.xlu0 %v3461, 122
        %v3639 = vpop.permute.xlu0 %3638
        %3640 = vrot.lane.b32.xlu0 %v3464, 122
        %v3641 = vpop.permute.xlu0 %3640
        %3642 = vrot.lane.b32.xlu0 %v3469, 122
        %v3643 = vpop.permute.xlu0 %3642
        %3644 = vrot.lane.b32.xlu0 %v3472, 122
        %v3645 = vpop.permute.xlu0 %3644
        %3646 = vrot.lane.b32.xlu0 %v3477, 122
        %v3647 = vpop.permute.xlu0 %3646
        %3648 = vrot.lane.b32.xlu0 %v3480, 122
        %v3649 = vpop.permute.xlu0 %3648
        %3650 = vrot.lane.b32.xlu0 %v3485, 122
        %v3651 = vpop.permute.xlu0 %3650
        %3652 = vrot.lane.b32.xlu0 %v3488, 122
        %v3653 = vpop.permute.xlu0 %3652
        %3654 = vrot.lane.b32.xlu0 %v3493, 122
        %v3655 = vpop.permute.xlu0 %3654
        %3656 = vrot.lane.b32.xlu0 %v3496, 122
        %v3657 = vpop.permute.xlu0 %3656
        %3658 = vrot.lane.b32.xlu0 %v3501, 122
        %v3659 = vpop.permute.xlu0 %3658
        %3660 = vrot.lane.b32.xlu0 %v3504, 122
        %v3661 = vpop.permute.xlu0 %3660
        %3662 = vrot.lane.b32.xlu0 %v3509, 122
        %v3663 = vpop.permute.xlu0 %3662
        %3664 = vrot.lane.b32.xlu0 %v3512, 122
        %v3665 = vpop.permute.xlu0 %3664
        %3666 = vrot.lane.b32.xlu0 %v3517, 122
        %v3667 = vpop.permute.xlu0 %3666
        %3668 = vrot.lane.b32.xlu0 %v3520, 122
        %v3669 = vpop.permute.xlu0 %3668
        %v3670 = vsel %vm3525, 1, 0
        %vm3671 = vcmp.eq.s32.totalorder %v3670, 1
        %v3672 = vsel %vm3671, %v3381, %v3527
        %v3673 = vsel %vm3671, %v3384, %v3529
        %v3674 = vsel %vm3671, %v3389, %v3531
        %v3675 = vsel %vm3671, %v3392, %v3533
        %v3676 = vsel %vm3671, %v3397, %v3535
        %v3677 = vsel %vm3671, %v3400, %v3537
        %v3678 = vsel %vm3671, %v3405, %v3539
        %v3679 = vsel %vm3671, %v3408, %v3541
        %v3680 = vsel %vm3671, %v3413, %v3543
        %v3681 = vsel %vm3671, %v3416, %v3545
        %v3682 = vsel %vm3671, %v3421, %v3547
        %v3683 = vsel %vm3671, %v3424, %v3549
        %v3684 = vsel %vm3671, %v3429, %v3551
        %v3685 = vsel %vm3671, %v3432, %v3553
        %v3686 = vsel %vm3671, %v3437, %v3555
        %v3687 = vsel %vm3671, %v3440, %v3557
        %v3688 = vsel %vm3671, %v3445, %v3559
        %v3689 = vsel %vm3671, %v3448, %v3561
        %v3690 = vsel %vm3671, %v3453, %v3563
        %v3691 = vsel %vm3671, %v3456, %v3565
        %v3692 = vsel %vm3671, %v3461, %v3567
        %v3693 = vsel %vm3671, %v3464, %v3569
        %v3694 = vsel %vm3671, %v3469, %v3571
        %v3695 = vsel %vm3671, %v3472, %v3573
        %v3696 = vsel %vm3671, %v3477, %v3575
        %v3697 = vsel %vm3671, %v3480, %v3577
        %v3698 = vsel %vm3671, %v3485, %v3579
        %v3699 = vsel %vm3671, %v3488, %v3581
        %v3700 = vsel %vm3671, %v3493, %v3583
        %v3701 = vsel %vm3671, %v3496, %v3585
        %v3702 = vsel %vm3671, %v3501, %v3587
        %v3703 = vsel %vm3671, %v3504, %v3589
        %v3704 = vsel %vm3671, %v3509, %v3591
        %v3705 = vsel %vm3671, %v3512, %v3593
        %v3706 = vsel %vm3671, %v3517, %v3595
        %v3707 = vsel %vm3671, %v3520, %v3597
        %v3708 = vsel %vm3671, %v3599, %v3381
        %v3709 = vsel %vm3671, %v3601, %v3384
        %v3710 = vsel %vm3671, %v3603, %v3389
        %v3711 = vsel %vm3671, %v3605, %v3392
        %v3712 = vsel %vm3671, %v3607, %v3397
        %v3713 = vsel %vm3671, %v3609, %v3400
        %v3714 = vsel %vm3671, %v3611, %v3405
        %v3715 = vsel %vm3671, %v3613, %v3408
        %v3716 = vsel %vm3671, %v3615, %v3413
        %v3717 = vsel %vm3671, %v3617, %v3416
        %v3718 = vsel %vm3671, %v3619, %v3421
        %v3719 = vsel %vm3671, %v3621, %v3424
        %v3720 = vsel %vm3671, %v3623, %v3429
        %v3721 = vsel %vm3671, %v3625, %v3432
        %v3722 = vsel %vm3671, %v3627, %v3437
        %v3723 = vsel %vm3671, %v3629, %v3440
        %v3724 = vsel %vm3671, %v3631, %v3445
        %v3725 = vsel %vm3671, %v3633, %v3448
        %v3726 = vsel %vm3671, %v3635, %v3453
        %v3727 = vsel %vm3671, %v3637, %v3456
        %v3728 = vsel %vm3671, %v3639, %v3461
        %v3729 = vsel %vm3671, %v3641, %v3464
        %v3730 = vsel %vm3671, %v3643, %v3469
        %v3731 = vsel %vm3671, %v3645, %v3472
        %v3732 = vsel %vm3671, %v3647, %v3477
        %v3733 = vsel %vm3671, %v3649, %v3480
        %v3734 = vsel %vm3671, %v3651, %v3485
        %v3735 = vsel %vm3671, %v3653, %v3488
        %v3736 = vsel %vm3671, %v3655, %v3493
        %v3737 = vsel %vm3671, %v3657, %v3496
        %v3738 = vsel %vm3671, %v3659, %v3501
        %v3739 = vsel %vm3671, %v3661, %v3504
        %v3740 = vsel %vm3671, %v3663, %v3509
        %v3741 = vsel %vm3671, %v3665, %v3512
        %v3742 = vsel %vm3671, %v3667, %v3517
        %v3743 = vsel %vm3671, %v3669, %v3520
        %v3744 = vld [vmem:[%s5] sm:$0xff]
        %v3745 = vld [vmem:[%s5 + $0x8] sm:$0xff]
        %v3746 = vld [vmem:[%s5 + $0x10] sm:$0xff]
        %v3747 = vld [vmem:[%s5 + $0x18] sm:$0xff]
        %v3748 = vld [vmem:[%s5 + $0x20] sm:$0xff]
        %v3749 = vld [vmem:[%s5 + $0x28] sm:$0xff]
        %v3750 = vld [vmem:[%s5 + $0x30] sm:$0xff]
        %v3751 = vld [vmem:[%s5 + $0x38] sm:$0xff]
        %v3752 = vld [vmem:[%s5 + $0x40] sm:$0xff]
        %v3753 = vld [vmem:[%s5 + $0x48] sm:$0xff]
        %v3754 = vld [vmem:[%s5 + $0x50] sm:$0xff]
        %v3755 = vld [vmem:[%s5 + $0x58] sm:$0xff]
        %v3756 = vld [vmem:[%s5 + $0x60] sm:$0xff]
        %v3757 = vld [vmem:[%s5 + $0x68] sm:$0xff]
        %v3758 = vld [vmem:[%s5 + $0x70] sm:$0xff]
        %v3759 = vld [vmem:[%s5 + $0x78] sm:$0xff]
        %v3760 = vld [vmem:[%s5 + $0x80] sm:$0xff]
        %v3761 = vld [vmem:[%s5 + $0x88] sm:$0xff]
        %v3762 = vld [vmem:[%s5 + $0x90] sm:$0xff]
        %v3763 = vld [vmem:[%s5 + $0x98] sm:$0xff]
        %v3764 = vld [vmem:[%s5 + $0xa0] sm:$0xff]
        %v3765 = vld [vmem:[%s5 + $0xa8] sm:$0xff]
        %v3766 = vld [vmem:[%s5 + $0xb0] sm:$0xff]
        %v3767 = vld [vmem:[%s5 + $0xb8] sm:$0xff]
        %v3768 = vld [vmem:[%s5 + $0xc0] sm:$0xff]
        %v3769 = vld [vmem:[%s5 + $0xc8] sm:$0xff]
        %v3770 = vld [vmem:[%s5 + $0xd0] sm:$0xff]
        %v3771 = vld [vmem:[%s5 + $0xd8] sm:$0xff]
        %v3772 = vld [vmem:[%s5 + $0xe0] sm:$0xff]
        %v3773 = vld [vmem:[%s5 + $0xe8] sm:$0xff]
        %v3774 = vld [vmem:[%s5 + $0xf0] sm:$0xff]
        %v3775 = vld [vmem:[%s5 + $0xf8] sm:$0xff]
        %v3776 = vld [vmem:[%s5 + $0x100] sm:$0xff]
        %v3777 = vld [vmem:[%s5 + $0x108] sm:$0xff]
        %v3778 = vld [vmem:[%s5 + $0x110] sm:$0xff]
        %v3779 = vld [vmem:[%s5 + $0x118] sm:$0xff]
        %v3780 = vld [vmem:[#allocation2] sm:$0xff]
        %v3781 = vld [vmem:[#allocation2 + $0x8] sm:$0xff]
        %v3782 = vld [vmem:[#allocation2 + $0x10] sm:$0xff]
        %v3783 = vld [vmem:[#allocation2 + $0x18] sm:$0xff]
        %v3784 = vld [vmem:[#allocation2 + $0x20] sm:$0xff]
        %v3785 = vld [vmem:[#allocation2 + $0x28] sm:$0xff]
        %v3786 = vld [vmem:[#allocation2 + $0x30] sm:$0xff]
        %v3787 = vld [vmem:[#allocation2 + $0x38] sm:$0xff]
        %v3788 = vld [vmem:[#allocation2 + $0x40] sm:$0xff]
        %v3789 = vld [vmem:[#allocation2 + $0x48] sm:$0xff]
        %v3790 = vld [vmem:[#allocation2 + $0x50] sm:$0xff]
        %v3791 = vld [vmem:[#allocation2 + $0x58] sm:$0xff]
        %v3792 = vld [vmem:[#allocation2 + $0x60] sm:$0xff]
        %v3793 = vld [vmem:[#allocation2 + $0x68] sm:$0xff]
        %v3794 = vld [vmem:[#allocation2 + $0x70] sm:$0xff]
        %v3795 = vld [vmem:[#allocation2 + $0x78] sm:$0xff]
        %v3796 = vld [vmem:[#allocation2 + $0x80] sm:$0xff]
        %v3797 = vld [vmem:[#allocation2 + $0x88] sm:$0xff]
        %v3798 = vld [vmem:[#allocation2 + $0x90] sm:$0xff]
        %v3799 = vld [vmem:[#allocation2 + $0x98] sm:$0xff]
        %v3800 = vld [vmem:[#allocation2 + $0xa0] sm:$0xff]
        %v3801 = vld [vmem:[#allocation2 + $0xa8] sm:$0xff]
        %v3802 = vld [vmem:[#allocation2 + $0xb0] sm:$0xff]
        %v3803 = vld [vmem:[#allocation2 + $0xb8] sm:$0xff]
        %v3804 = vld [vmem:[#allocation2 + $0xc0] sm:$0xff]
        %v3805 = vld [vmem:[#allocation2 + $0xc8] sm:$0xff]
        %v3806 = vld [vmem:[#allocation2 + $0xd0] sm:$0xff]
        %v3807 = vld [vmem:[#allocation2 + $0xd8] sm:$0xff]
        %v3808 = vld [vmem:[#allocation2 + $0xe0] sm:$0xff]
        %v3809 = vld [vmem:[#allocation2 + $0xe8] sm:$0xff]
        %v3810 = vld [vmem:[#allocation2 + $0xf0] sm:$0xff]
        %v3811 = vld [vmem:[#allocation2 + $0xf8] sm:$0xff]
        %v3812 = vld [vmem:[#allocation2 + $0x100] sm:$0xff]
        %v3813 = vld [vmem:[#allocation2 + $0x108] sm:$0xff]
        %v3814 = vld [vmem:[#allocation2 + $0x110] sm:$0xff]
        %v3815 = vld [vmem:[#allocation2 + $0x118] sm:$0xff]
        %v3816 = vmul.f32 %v3672, %v3744
        %v3817 = vmul.f32 %v3673, %v3745
        %v3818 = vmul.f32 %v3674, %v3746
        %v3819 = vmul.f32 %v3675, %v3747
        %v3820 = vmul.f32 %v3676, %v3748
        %v3821 = vmul.f32 %v3677, %v3749
        %v3822 = vmul.f32 %v3678, %v3750
        %v3823 = vmul.f32 %v3679, %v3751
        %v3824 = vmul.f32 %v3680, %v3752
        %v3825 = vmul.f32 %v3681, %v3753
        %v3826 = vmul.f32 %v3682, %v3754
        %v3827 = vmul.f32 %v3683, %v3755
        %v3828 = vmul.f32 %v3684, %v3756
        %v3829 = vmul.f32 %v3685, %v3757
        %v3830 = vmul.f32 %v3686, %v3758
        %v3831 = vmul.f32 %v3687, %v3759
        %v3832 = vmul.f32 %v3688, %v3760
        %v3833 = vmul.f32 %v3689, %v3761
        %v3834 = vmul.f32 %v3690, %v3762
        %v3835 = vmul.f32 %v3691, %v3763
        %v3836 = vmul.f32 %v3692, %v3764
        %v3837 = vmul.f32 %v3693, %v3765
        %v3838 = vmul.f32 %v3694, %v3766
        %v3839 = vmul.f32 %v3695, %v3767
        %v3840 = vmul.f32 %v3696, %v3768
        %v3841 = vmul.f32 %v3697, %v3769
        %v3842 = vmul.f32 %v3698, %v3770
        %v3843 = vmul.f32 %v3699, %v3771
        %v3844 = vmul.f32 %v3700, %v3772
        %v3845 = vmul.f32 %v3701, %v3773
        %v3846 = vmul.f32 %v3702, %v3774
        %v3847 = vmul.f32 %v3703, %v3775
        %v3848 = vmul.f32 %v3704, %v3776
        %v3849 = vmul.f32 %v3705, %v3777
        %v3850 = vmul.f32 %v3706, %v3778
        %v3851 = vmul.f32 %v3707, %v3779
        %v3852 = vadd.f32 %v3816, %v3780
        %v3853 = vadd.f32 %v3817, %v3781
        %v3854 = vadd.f32 %v3818, %v3782
        %v3855 = vadd.f32 %v3819, %v3783
        %v3856 = vadd.f32 %v3820, %v3784
        %v3857 = vadd.f32 %v3821, %v3785
        %v3858 = vadd.f32 %v3822, %v3786
        %v3859 = vadd.f32 %v3823, %v3787
        %v3860 = vadd.f32 %v3824, %v3788
        %v3861 = vadd.f32 %v3825, %v3789
        %v3862 = vadd.f32 %v3826, %v3790
        %v3863 = vadd.f32 %v3827, %v3791
        %v3864 = vadd.f32 %v3828, %v3792
        %v3865 = vadd.f32 %v3829, %v3793
        %v3866 = vadd.f32 %v3830, %v3794
        %v3867 = vadd.f32 %v3831, %v3795
        %v3868 = vadd.f32 %v3832, %v3796
        %v3869 = vadd.f32 %v3833, %v3797
        %v3870 = vadd.f32 %v3834, %v3798
        %v3871 = vadd.f32 %v3835, %v3799
        %v3872 = vadd.f32 %v3836, %v3800
        %v3873 = vadd.f32 %v3837, %v3801
        %v3874 = vadd.f32 %v3838, %v3802
        %v3875 = vadd.f32 %v3839, %v3803
        %v3876 = vadd.f32 %v3840, %v3804
        %v3877 = vadd.f32 %v3841, %v3805
        %v3878 = vadd.f32 %v3842, %v3806
        %v3879 = vadd.f32 %v3843, %v3807
        %v3880 = vadd.f32 %v3844, %v3808
        %v3881 = vadd.f32 %v3845, %v3809
        %v3882 = vadd.f32 %v3846, %v3810
        %v3883 = vadd.f32 %v3847, %v3811
        %v3884 = vadd.f32 %v3848, %v3812
        %v3885 = vadd.f32 %v3849, %v3813
        %v3886 = vadd.f32 %v3850, %v3814
        %v3887 = vadd.f32 %v3851, %v3815
        %v3888 = vmin.f32 %v3708, 4.1351666
        %v3889 = vmin.f32 %v3709, 4.1351666
        %v3890 = vmin.f32 %v3710, 4.1351666
        %v3891 = vmin.f32 %v3711, 4.1351666
        %v3892 = vmin.f32 %v3712, 4.1351666
        %v3893 = vmin.f32 %v3713, 4.1351666
        %v3894 = vmin.f32 %v3714, 4.1351666
        %v3895 = vmin.f32 %v3715, 4.1351666
        %v3896 = vmin.f32 %v3716, 4.1351666
        %v3897 = vmin.f32 %v3717, 4.1351666
        %v3898 = vmin.f32 %v3718, 4.1351666
        %v3899 = vmin.f32 %v3719, 4.1351666
        %v3900 = vmin.f32 %v3720, 4.1351666
        %v3901 = vmin.f32 %v3721, 4.1351666
        %v3902 = vmin.f32 %v3722, 4.1351666
        %v3903 = vmin.f32 %v3723, 4.1351666
        %v3904 = vmin.f32 %v3724, 4.1351666
        %v3905 = vmin.f32 %v3725, 4.1351666
        %v3906 = vmin.f32 %v3726, 4.1351666
        %v3907 = vmin.f32 %v3727, 4.1351666
        %v3908 = vmin.f32 %v3728, 4.1351666
        %v3909 = vmin.f32 %v3729, 4.1351666
        %v3910 = vmin.f32 %v3730, 4.1351666
        %v3911 = vmin.f32 %v3731, 4.1351666
        %v3912 = vmin.f32 %v3732, 4.1351666
        %v3913 = vmin.f32 %v3733, 4.1351666
        %v3914 = vmin.f32 %v3734, 4.1351666
        %v3915 = vmin.f32 %v3735, 4.1351666
        %v3916 = vmin.f32 %v3736, 4.1351666
        %v3917 = vmin.f32 %v3737, 4.1351666
        %v3918 = vmin.f32 %v3738, 4.1351666
        %v3919 = vmin.f32 %v3739, 4.1351666
        %v3920 = vmin.f32 %v3740, 4.1351666
        %v3921 = vmin.f32 %v3741, 4.1351666
        %v3922 = vmin.f32 %v3742, 4.1351666
        %v3923 = vmin.f32 %v3743, 4.1351666
        %v3924 = vmul.f32 %v3888, 1.442695
        %v3925 = vpow.pop %v3924
        %v3926 = vmul.f32 %v3889, 1.442695
        %v3927 = vpow.pop %v3926
        %v3928 = vmul.f32 %v3890, 1.442695
        %v3929 = vpow.pop %v3928
        %v3930 = vmul.f32 %v3891, 1.442695
        %v3931 = vpow.pop %v3930
        %v3932 = vmul.f32 %v3892, 1.442695
        %v3933 = vpow.pop %v3932
        %v3934 = vmul.f32 %v3893, 1.442695
        %v3935 = vpow.pop %v3934
        %v3936 = vmul.f32 %v3894, 1.442695
        %v3937 = vpow.pop %v3936
        %v3938 = vmul.f32 %v3895, 1.442695
        %v3939 = vpow.pop %v3938
        %v3940 = vmul.f32 %v3896, 1.442695
        %v3941 = vpow.pop %v3940
        %v3942 = vmul.f32 %v3897, 1.442695
        %v3943 = vpow.pop %v3942
        %v3944 = vmul.f32 %v3898, 1.442695
        %v3945 = vpow.pop %v3944
        %v3946 = vmul.f32 %v3899, 1.442695
        %v3947 = vpow.pop %v3946
        %v3948 = vmul.f32 %v3900, 1.442695
        %v3949 = vpow.pop %v3948
        %v3950 = vmul.f32 %v3901, 1.442695
        %v3951 = vpow.pop %v3950
        %v3952 = vmul.f32 %v3902, 1.442695
        %v3953 = vpow.pop %v3952
        %v3954 = vmul.f32 %v3903, 1.442695
        %v3955 = vpow.pop %v3954
        %v3956 = vmul.f32 %v3904, 1.442695
        %v3957 = vpow.pop %v3956
        %v3958 = vmul.f32 %v3905, 1.442695
        %v3959 = vpow.pop %v3958
        %v3960 = vmul.f32 %v3906, 1.442695
        %v3961 = vpow.pop %v3960
        %v3962 = vmul.f32 %v3907, 1.442695
        %v3963 = vpow.pop %v3962
        %v3964 = vmul.f32 %v3908, 1.442695
        %v3965 = vpow.pop %v3964
        %v3966 = vmul.f32 %v3909, 1.442695
        %v3967 = vpow.pop %v3966
        %v3968 = vmul.f32 %v3910, 1.442695
        %v3969 = vpow.pop %v3968
        %v3970 = vmul.f32 %v3911, 1.442695
        %v3971 = vpow.pop %v3970
        %v3972 = vmul.f32 %v3912, 1.442695
        %v3973 = vpow.pop %v3972
        %v3974 = vmul.f32 %v3913, 1.442695
        %v3975 = vpow.pop %v3974
        %v3976 = vmul.f32 %v3914, 1.442695
        %v3977 = vpow.pop %v3976
        %v3978 = vmul.f32 %v3915, 1.442695
        %v3979 = vpow.pop %v3978
        %v3980 = vmul.f32 %v3916, 1.442695
        %v3981 = vpow.pop %v3980
        %v3982 = vmul.f32 %v3917, 1.442695
        %v3983 = vpow.pop %v3982
        %v3984 = vmul.f32 %v3918, 1.442695
        %v3985 = vpow.pop %v3984
        %v3986 = vmul.f32 %v3919, 1.442695
        %v3987 = vpow.pop %v3986
        %v3988 = vmul.f32 %v3920, 1.442695
        %v3989 = vpow.pop %v3988
        %v3990 = vmul.f32 %v3921, 1.442695
        %v3991 = vpow.pop %v3990
        %v3992 = vmul.f32 %v3922, 1.442695
        %v3993 = vpow.pop %v3992
        %v3994 = vmul.f32 %v3923, 1.442695
        %v3995 = vpow.pop %v3994
        %v3996 = vmul.f32 %v3925, %v3744
        %v3997 = vmul.f32 %v3927, %v3745
        %v3998 = vmul.f32 %v3929, %v3746
        %v3999 = vmul.f32 %v3931, %v3747
        %v4000 = vmul.f32 %v3933, %v3748
        %v4001 = vmul.f32 %v3935, %v3749
        %v4002 = vmul.f32 %v3937, %v3750
        %v4003 = vmul.f32 %v3939, %v3751
        %v4004 = vmul.f32 %v3941, %v3752
        %v4005 = vmul.f32 %v3943, %v3753
        %v4006 = vmul.f32 %v3945, %v3754
        %v4007 = vmul.f32 %v3947, %v3755
        %v4008 = vmul.f32 %v3949, %v3756
        %v4009 = vmul.f32 %v3951, %v3757
        %v4010 = vmul.f32 %v3953, %v3758
        %v4011 = vmul.f32 %v3955, %v3759
        %v4012 = vmul.f32 %v3957, %v3760
        %v4013 = vmul.f32 %v3959, %v3761
        %v4014 = vmul.f32 %v3961, %v3762
        %v4015 = vmul.f32 %v3963, %v3763
        %v4016 = vmul.f32 %v3965, %v3764
        %v4017 = vmul.f32 %v3967, %v3765
        %v4018 = vmul.f32 %v3969, %v3766
        %v4019 = vmul.f32 %v3971, %v3767
        %v4020 = vmul.f32 %v3973, %v3768
        %v4021 = vmul.f32 %v3975, %v3769
        %v4022 = vmul.f32 %v3977, %v3770
        %v4023 = vmul.f32 %v3979, %v3771
        %v4024 = vmul.f32 %v3981, %v3772
        %v4025 = vmul.f32 %v3983, %v3773
        %v4026 = vmul.f32 %v3985, %v3774
        %v4027 = vmul.f32 %v3987, %v3775
        %v4028 = vmul.f32 %v3989, %v3776
        %v4029 = vmul.f32 %v3991, %v3777
        %v4030 = vmul.f32 %v3993, %v3778
        %v4031 = vmul.f32 %v3995, %v3779
        %v4032 = vsel %vm3525, -0.5, 0.5
        %v4033 = vmul.f32 %v4032, %v3996
        %v4034 = vmul.f32 %v4032, %v3997
        %v4035 = vmul.f32 %v4032, %v3998
        %v4036 = vmul.f32 %v4032, %v3999
        %v4037 = vmul.f32 %v4032, %v4000
        %v4038 = vmul.f32 %v4032, %v4001
        %v4039 = vmul.f32 %v4032, %v4002
        %v4040 = vmul.f32 %v4032, %v4003
        %v4041 = vmul.f32 %v4032, %v4004
        %v4042 = vmul.f32 %v4032, %v4005
        %v4043 = vmul.f32 %v4032, %v4006
        %v4044 = vmul.f32 %v4032, %v4007
        %v4045 = vmul.f32 %v4032, %v4008
        %v4046 = vmul.f32 %v4032, %v4009
        %v4047 = vmul.f32 %v4032, %v4010
        %v4048 = vmul.f32 %v4032, %v4011
        %v4049 = vmul.f32 %v4032, %v4012
        %v4050 = vmul.f32 %v4032, %v4013
        %v4051 = vmul.f32 %v4032, %v4014
        %v4052 = vmul.f32 %v4032, %v4015
        %v4053 = vmul.f32 %v4032, %v4016
        %v4054 = vmul.f32 %v4032, %v4017
        %v4055 = vmul.f32 %v4032, %v4018
        %v4056 = vmul.f32 %v4032, %v4019
        %v4057 = vmul.f32 %v4032, %v4020
        %v4058 = vmul.f32 %v4032, %v4021
        %v4059 = vmul.f32 %v4032, %v4022
        %v4060 = vmul.f32 %v4032, %v4023
        %v4061 = vmul.f32 %v4032, %v4024
        %v4062 = vmul.f32 %v4032, %v4025
        %v4063 = vmul.f32 %v4032, %v4026
        %v4064 = vmul.f32 %v4032, %v4027
        %v4065 = vmul.f32 %v4032, %v4028
        %v4066 = vmul.f32 %v4032, %v4029
        %v4067 = vmul.f32 %v4032, %v4030
        %v4068 = vmul.f32 %v4032, %v4031
        %v4069 = vadd.f32 %v3852, %v4033
        %v4070 = vadd.f32 %v3853, %v4034
        %v4071 = vadd.f32 %v3854, %v4035
        %v4072 = vadd.f32 %v3855, %v4036
        %v4073 = vadd.f32 %v3856, %v4037
        %v4074 = vadd.f32 %v3857, %v4038
        %v4075 = vadd.f32 %v3858, %v4039
        %v4076 = vadd.f32 %v3859, %v4040
        %v4077 = vadd.f32 %v3860, %v4041
        %v4078 = vadd.f32 %v3861, %v4042
        %v4079 = vadd.f32 %v3862, %v4043
        %v4080 = vadd.f32 %v3863, %v4044
        %v4081 = vadd.f32 %v3864, %v4045
        %v4082 = vadd.f32 %v3865, %v4046
        %v4083 = vadd.f32 %v3866, %v4047
        %v4084 = vadd.f32 %v3867, %v4048
        %v4085 = vadd.f32 %v3868, %v4049
        %v4086 = vadd.f32 %v3869, %v4050
        %v4087 = vadd.f32 %v3870, %v4051
        %v4088 = vadd.f32 %v3871, %v4052
        %v4089 = vadd.f32 %v3872, %v4053
        %v4090 = vadd.f32 %v3873, %v4054
        %v4091 = vadd.f32 %v3874, %v4055
        %v4092 = vadd.f32 %v3875, %v4056
        %v4093 = vadd.f32 %v3876, %v4057
        %v4094 = vadd.f32 %v3877, %v4058
        %v4095 = vadd.f32 %v3878, %v4059
        %v4096 = vadd.f32 %v3879, %v4060
        %v4097 = vadd.f32 %v3880, %v4061
        %v4098 = vadd.f32 %v3881, %v4062
        %v4099 = vadd.f32 %v3882, %v4063
        %v4100 = vadd.f32 %v3883, %v4064
        %v4101 = vadd.f32 %v3884, %v4065
        %v4102 = vadd.f32 %v3885, %v4066
        %v4103 = vadd.f32 %v3886, %v4067
        %v4104 = vadd.f32 %v3887, %v4068
        %vm4105 = vcmp.lt.s32.totalorder %v3524, 3
        %vm4106 = vcmp.lt.s32.totalorder %v3524, 15
        %v4107 = vsel %vm4106, 1, 0
        %vm4108 = vcmp.eq.s32.totalorder %v4107, 1
        %v4109 = vsel %vm4108, %v4069, 0.0
        %v4110 = vsel %vm4108, %v4070, 0.0
        %v4111 = vsel %vm4108, %v4071, 0.0
        %v4112 = vsel %vm4108, %v4072, 0.0
        %v4113 = vsel %vm4108, %v4073, 0.0
        %v4114 = vsel %vm4108, %v4074, 0.0
        %v4115 = vsel %vm4108, %v4075, 0.0
        %v4116 = vsel %vm4108, %v4076, 0.0
        %v4117 = vsel %vm4108, %v4077, 0.0
        %v4118 = vsel %vm4108, %v4078, 0.0
        %v4119 = vsel %vm4108, %v4079, 0.0
        %v4120 = vsel %vm4108, %v4080, 0.0
        %v4121 = vsel %vm4108, %v4081, 0.0
        %v4122 = vsel %vm4108, %v4082, 0.0
        %v4123 = vsel %vm4108, %v4083, 0.0
        %v4124 = vsel %vm4108, %v4084, 0.0
        %v4125 = vsel %vm4108, %v4085, 0.0
        %v4126 = vsel %vm4108, %v4086, 0.0
        %v4127 = vsel %vm4108, %v4087, 0.0
        %v4128 = vsel %vm4108, %v4088, 0.0
        %v4129 = vsel %vm4108, %v4089, 0.0
        %v4130 = vsel %vm4108, %v4090, 0.0
        %v4131 = vsel %vm4108, %v4091, 0.0
        %v4132 = vsel %vm4108, %v4092, 0.0
        %v4133 = vsel %vm4108, %v4093, 0.0
        %v4134 = vsel %vm4108, %v4094, 0.0
        %v4135 = vsel %vm4108, %v4095, 0.0
        %v4136 = vsel %vm4108, %v4096, 0.0
        %v4137 = vsel %vm4108, %v4097, 0.0
        %v4138 = vsel %vm4108, %v4098, 0.0
        %v4139 = vsel %vm4108, %v4099, 0.0
        %v4140 = vsel %vm4108, %v4100, 0.0
        %v4141 = vsel %vm4108, %v4101, 0.0
        %v4142 = vsel %vm4108, %v4102, 0.0
        %v4143 = vsel %vm4108, %v4103, 0.0
        %v4144 = vsel %vm4108, %v4104, 0.0
        %v4145 = vsel %vm4105, 1, 0
        %vm4146 = vcmp.eq.s32.totalorder %v4145, 1
        %v4147 = vsel %vm4146, %v3381, %v4109
        %v4148 = vsel %vm4146, %v3384, %v4110
        %v4149 = vsel %vm4146, %v3389, %v4111
        %v4150 = vsel %vm4146, %v3392, %v4112
        %v4151 = vsel %vm4146, %v3397, %v4113
        %v4152 = vsel %vm4146, %v3400, %v4114
        %v4153 = vsel %vm4146, %v3405, %v4115
        %v4154 = vsel %vm4146, %v3408, %v4116
        %v4155 = vsel %vm4146, %v3413, %v4117
        %v4156 = vsel %vm4146, %v3416, %v4118
        %v4157 = vsel %vm4146, %v3421, %v4119
        %v4158 = vsel %vm4146, %v3424, %v4120
        %v4159 = vsel %vm4146, %v3429, %v4121
        %v4160 = vsel %vm4146, %v3432, %v4122
        %v4161 = vsel %vm4146, %v3437, %v4123
        %v4162 = vsel %vm4146, %v3440, %v4124
        %v4163 = vsel %vm4146, %v3445, %v4125
        %v4164 = vsel %vm4146, %v3448, %v4126
        %v4165 = vsel %vm4146, %v3453, %v4127
        %v4166 = vsel %vm4146, %v3456, %v4128
        %v4167 = vsel %vm4146, %v3461, %v4129
        %v4168 = vsel %vm4146, %v3464, %v4130
        %v4169 = vsel %vm4146, %v3469, %v4131
        %v4170 = vsel %vm4146, %v3472, %v4132
        %v4171 = vsel %vm4146, %v3477, %v4133
        %v4172 = vsel %vm4146, %v3480, %v4134
        %v4173 = vsel %vm4146, %v3485, %v4135
        %v4174 = vsel %vm4146, %v3488, %v4136
        %v4175 = vsel %vm4146, %v3493, %v4137
        %v4176 = vsel %vm4146, %v3496, %v4138
        %v4177 = vsel %vm4146, %v3501, %v4139
        %v4178 = vsel %vm4146, %v3504, %v4140
        %v4179 = vsel %vm4146, %v3509, %v4141
        %v4180 = vsel %vm4146, %v3512, %v4142
        %v4181 = vsel %vm4146, %v3517, %v4143
        %v4182 = vsel %vm4146, %v3520, %v4144
        %4183 = vst [vmem:[%s286] sm:$0xff] %v4147
        %4184 = vst [vmem:[%s286 + $0x8] sm:$0xff] %v4148
        %4185 = vst [vmem:[%s286 + $0x10] sm:$0xff] %v4149
        %4186 = vst [vmem:[%s286 + $0x18] sm:$0xff] %v4150
        %4187 = vst [vmem:[%s286 + $0x20] sm:$0xff] %v4151
        %4188 = vst [vmem:[%s286 + $0x28] sm:$0xff] %v4152
        %4189 = vst [vmem:[%s286 + $0x30] sm:$0xff] %v4153
        %4190 = vst [vmem:[%s286 + $0x38] sm:$0xff] %v4154
        %4191 = vst [vmem:[%s286 + $0x40] sm:$0xff] %v4155
        %4192 = vst [vmem:[%s286 + $0x48] sm:$0xff] %v4156
        %4193 = vst [vmem:[%s286 + $0x50] sm:$0xff] %v4157
        %4194 = vst [vmem:[%s286 + $0x58] sm:$0xff] %v4158
        %4195 = vst [vmem:[%s286 + $0x60] sm:$0xff] %v4159
        %4196 = vst [vmem:[%s286 + $0x68] sm:$0xff] %v4160
        %4197 = vst [vmem:[%s286 + $0x70] sm:$0xff] %v4161
        %4198 = vst [vmem:[%s286 + $0x78] sm:$0xff] %v4162
        %4199 = vst [vmem:[%s286 + $0x80] sm:$0xff] %v4163
        %4200 = vst [vmem:[%s286 + $0x88] sm:$0xff] %v4164
        %4201 = vst [vmem:[%s286 + $0x90] sm:$0xff] %v4165
        %4202 = vst [vmem:[%s286 + $0x98] sm:$0xff] %v4166
        %4203 = vst [vmem:[%s286 + $0xa0] sm:$0xff] %v4167
        %4204 = vst [vmem:[%s286 + $0xa8] sm:$0xff] %v4168
        %4205 = vst [vmem:[%s286 + $0xb0] sm:$0xff] %v4169
        %4206 = vst [vmem:[%s286 + $0xb8] sm:$0xff] %v4170
        %4207 = vst [vmem:[%s286 + $0xc0] sm:$0xff] %v4171
        %4208 = vst [vmem:[%s286 + $0xc8] sm:$0xff] %v4172
        %4209 = vst [vmem:[%s286 + $0xd0] sm:$0xff] %v4173
        %4210 = vst [vmem:[%s286 + $0xd8] sm:$0xff] %v4174
        %4211 = vst [vmem:[%s286 + $0xe0] sm:$0xff] %v4175
        %4212 = vst [vmem:[%s286 + $0xe8] sm:$0xff] %v4176
        %4213 = vst [vmem:[%s286 + $0xf0] sm:$0xff] %v4177
        %4214 = vst [vmem:[%s286 + $0xf8] sm:$0xff] %v4178
        %4215 = vst [vmem:[%s286 + $0x100] sm:$0xff] %v4179
        %4216 = vst [vmem:[%s286 + $0x108] sm:$0xff] %v4180
        %4217 = vst [vmem:[%s286 + $0x110] sm:$0xff] %v4181
        %4218 = vst [vmem:[%s286 + $0x118] sm:$0xff] %v4182
        %s4219 = sand.u32 %s182, 1
        %s4220 = scalar_lea.sflag [#allocation4], %s4219
        %s4221 = sand.u32 %s182, 1
        %s4222 = smul.addr %s4221, 288
        %s4223 = scalar_lea.vmem [#allocation5], %s4222
        // Predicated region
        $region53: #{tpu_custom_call.1} parent=47 // pred_check
          %p4224 = pneg %p192
        $region54: #{tpu_custom_call.1} parent=47 // pred_check_branch
          %4226 = sbr.rel (%p4224) target = $region56
        $region55: #{tpu_custom_call.1} parent=47 // pred_region
          %s4228 = ssub.s32 4608, 4608
          %4229 = vsyncadd %s4220, %s4228
          %s4230 = smul.addr %s22, 36
          %s4231 = smul.addr %s4230, 128
          %s4232 = scalar_lea.hbm %s7, %s4231
          %s4233 = sshll.u32 %s4223, 4
          %s4234 = int_to_ptr.vmem [resolvable:$true] %s4233
          %4239 = dma.vmem_to_hbm [thread:$0]  %s4234, 4608, %s4232, %s4220, 128, 128, 8
        $region56: #{tpu_custom_call.1} parent=47 // pred_fallthru
          _
      $region48: #{tpu_custom_call.1} parent=5 // pred_fallthru
        _
      %p4240 = scmp.le.s32.totalorder 2, %s17
      // Predicated region
      $region57: #{tpu_custom_call.1} parent=5 // pred_check
        %p4241 = pneg %p4240
      $region58: #{tpu_custom_call.1} parent=5 // pred_check_branch
        %4243 = sbr.rel (%p4241) target = $region60
      $region59: #{tpu_custom_call.1} parent=5 // pred_region
        %s4244 = ssub.s32 %s17, 2
        // Predicated region
        $region61: #{tpu_custom_call.1} parent=59 // pred_check
          %p4245 = pneg %p198
        $region62: #{tpu_custom_call.1} parent=59 // pred_check_branch
          %4247 = sbr.rel (%p4245) target = $region64
        $region63: #{tpu_custom_call.1} parent=59 // pred_region
          %s4248 = sand.u32 %s183, 1
          %s4249 = scalar_lea.sflag [#allocation4], %s4248
          %s4250 = sand.u32 %s183, 1
          %s4251 = smul.addr %s4250, 288
          %s4252 = scalar_lea.vmem [#allocation5], %s4251
          %4253 = dma.done %s4249, 4608
        $region64: #{tpu_custom_call.1} parent=59 // pred_fallthru
          _
      $region60: #{tpu_custom_call.1} parent=5 // pred_fallthru
        _
    $region6: #{tpu_custom_call.1} parent=1 // loop_footer
      %s21 = sadd.s32 1, %s17
    $region7: #{tpu_custom_call.1} parent=1 // loop_footer_branch
      %16 = sbr.rel target = $region3
    $region8: #{tpu_custom_call.1} parent=1 // loop_exit
      _
    %4254 = vsyncpa [#allocation3], 1
    %s4255 = scalar_lea.sflag [#allocation3], 1
    %4256 = vsyncpa %s4255, 1
    %4257 = vsyncpa [#allocation4], 1
    %s4258 = scalar_lea.sflag [#allocation4], 1
    %4259 = vsyncpa %s4258, 1

</llo_original>
